<compile_context>
chip_gen: v7x
topology: tpu7x:2x2x1
jax: 0.10.0
libtpu: 0.0.40
codegen_flags: <defaults>
</compile_context>

<pallas_src>
import jax
import jax.numpy as jnp
from jax import lax
from jax.experimental import pallas as pl
from jax.experimental.pallas import tpu as pltpu


# ----------------------------------------------------------------------------
# Fused encoder kernel (all layers, both directions, + linear head).
# PyTorch GRU gate order is (r, z, n).  Hidden state layout inside the kernel:
#   h = [h_fwd | h_bwd] on the lane axis, shape (B, 2H).
# Gate layout on the lane axis: [r_f z_f n_f | r_b z_b n_b], width 6H.
# ----------------------------------------------------------------------------
def _make_encoder_kernel(n_layer, S, B, H):

    def _gru_cell(gi, gh, h_prev):
        r = jax.nn.sigmoid(gi[:, 0 * H:1 * H] + gh[:, 0 * H:1 * H])
        z = jax.nn.sigmoid(gi[:, 1 * H:2 * H] + gh[:, 1 * H:2 * H])
        n = jnp.tanh(gi[:, 2 * H:3 * H] + r * gh[:, 2 * H:3 * H])
        return (1.0 - z) * n + z * h_prev

    def kernel(*refs):
        x_ref = refs[0]                                 # (S*B, E)  flattened time-major
        layer_refs = refs[1:1 + 4 * n_layer]            # per layer: wih, whh_blk, bih, bhh
        linw_ref = refs[1 + 4 * n_layer]                # (2H, H)
        linb_ref = refs[2 + 4 * n_layer]                # (1, H)
        y_ref = refs[3 + 4 * n_layer]                   # (S*B, 2H) output
        hid_ref = refs[4 + 4 * n_layer]                 # (B, H)    output
        xbuf = refs[5 + 4 * n_layer]                    # (S*B, 2H) VMEM scratch (inter-layer acts)

        h_last = None

        for l in range(n_layer):
            wih = layer_refs[4 * l + 0][...]            # (in_sz, 6H)
            whh = layer_refs[4 * l + 1][...]            # (2H, 6H) block-diagonal
            bih = layer_refs[4 * l + 2][...]            # (1, 6H)
            bhh = layer_refs[4 * l + 3][...]            # (1, 6H)

            # Layer input: embeddings for layer 0, previous-layer activations otherwise.
            x = x_ref[...] if l == 0 else xbuf[...]
            # Last layer writes straight into the output ref (no extra copy).
            out_buf = y_ref if l == n_layer - 1 else xbuf

            # --- hoisted input-side matmul: all timesteps, both directions ---
            gi_all = jnp.dot(x, wih, preferred_element_type=jnp.float32) + bih   # (S*B, 6H)

            # --- serial recurrence, fully unrolled over S (static, small) ---
            h = jnp.zeros((B, 2 * H), jnp.float32)      # [h_fwd | h_bwd]
            for t in range(S):
                gh = jnp.dot(h, whh, preferred_element_type=jnp.float32) + bhh   # (B, 6H)
                tb = S - 1 - t                          # backward direction's timestep
                gi_f = gi_all[t * B:(t + 1) * B, 0:3 * H]
                gi_b = gi_all[tb * B:(tb + 1) * B, 3 * H:6 * H]
                hf = _gru_cell(gi_f, gh[:, 0:3 * H], h[:, 0:H])
                hb = _gru_cell(gi_b, gh[:, 3 * H:6 * H], h[:, H:2 * H])
                out_buf[t * B:(t + 1) * B, 0:H] = hf.astype(out_buf.dtype)
                out_buf[tb * B:(tb + 1) * B, H:2 * H] = hb.astype(out_buf.dtype)
                h = jnp.concatenate([hf, hb], axis=-1)  # stays in vregs (no VMEM roundtrip)

            h_last = h                                  # [h_f_final | h_b_final]

        # Fused linear head on the final hidden state (already resident in vregs).
        hid = jnp.tanh(
            jnp.dot(h_last, linw_ref[...], preferred_element_type=jnp.float32)
            + linb_ref[...])
        hid_ref[...] = hid.astype(hid_ref.dtype)

    return kernel


# ----------------------------------------------------------------------------
# One-time parameter packing (done at load time, not per forward call):
#   w_ih of both directions concatenated on the output axis  -> (in_sz, 6H)
#   w_hh of both directions packed block-diagonally          -> (2H, 6H)
#   biases concatenated                                       -> (1, 6H)
# ----------------------------------------------------------------------------
def pack_encoder_params(params, hid_dim, n_layer):
    H = hid_dim
    layers = []
    for l in range(n_layer):
        pf = params["gru"][l]["fwd"]
        pb = params["gru"][l]["bwd"]
        wih = jnp.concatenate([pf["w_ih"], pb["w_ih"]], axis=1)        # (in_sz, 6H)
        whh = jnp.zeros((2 * H, 6 * H), jnp.float32)
        whh = whh.at[:H, :3 * H].set(pf["w_hh"])
        whh = whh.at[H:, 3 * H:].set(pb["w_hh"])                       # block-diag (2H, 6H)
        bih = jnp.concatenate([pf["b_ih"], pb["b_ih"]], axis=1)        # (1, 6H)
        bhh = jnp.concatenate([pf["b_hh"], pb["b_hh"]], axis=1)        # (1, 6H)
        layers.append({"w_ih": wih, "w_hh_blk": whh, "b_ih": bih, "b_hh": bhh})
    return {
        "embedding": params["embedding"],
        "layers": layers,
        "linear_w": params["linear_w"],
        "linear_b": params["linear_b"],
        "hid_dim": H,
        "n_layer": n_layer,
    }


# ----------------------------------------------------------------------------
# Encoder forward: embedding gather (XLA glue) + one fused Pallas kernel.
# ----------------------------------------------------------------------------
def encoder_forward(packed, input_ids):
    S, B = input_ids.shape
    H = packed["hid_dim"]
    n_layer = packed["n_layer"]
    E = packed["embedding"].shape[1]

    # Embedding lookup (gather) — glue.  Dropout == identity (eval mode).
    emb_flat = jnp.take(packed["embedding"], input_ids.reshape(-1), axis=0)  # (S*B, E)

    inputs = [emb_flat]
    in_specs = [pl.BlockSpec((S * B, E), lambda i: (0, 0))]
    for l in range(n_layer):
        lp = packed["layers"][l]
        in_sz = E if l == 0 else 2 * H
        inputs += [lp["w_ih"], lp["w_hh_blk"], lp["b_ih"], lp["b_hh"]]
        in_specs += [
            pl.BlockSpec((in_sz, 6 * H), lambda i: (0, 0)),
            pl.BlockSpec((2 * H, 6 * H), lambda i: (0, 0)),
            pl.BlockSpec((1, 6 * H), lambda i: (0, 0)),
            pl.BlockSpec((1, 6 * H), lambda i: (0, 0)),
        ]
    inputs += [packed["linear_w"], packed["linear_b"]]
    in_specs += [pl.BlockSpec((2 * H, H), lambda i: (0, 0)),
                 pl.BlockSpec((1, H), lambda i: (0, 0))]

    kernel = _make_encoder_kernel(n_layer, S, B, H)

    y_flat, hidden = pl.pallas_call(
        kernel,
        out_shape=(jax.ShapeDtypeStruct((S * B, 2 * H), jnp.float32),
                   jax.ShapeDtypeStruct((B, H), jnp.float32)),
        grid_spec=pltpu.PrefetchScalarGridSpec(
            num_scalar_prefetch=0,
            grid=(1,),
            in_specs=in_specs,
            out_specs=[pl.BlockSpec((S * B, 2 * H), lambda i: (0, 0)),
                       pl.BlockSpec((B, H), lambda i: (0, 0))],
            scratch_shapes=[pltpu.VMEM((S * B, 2 * H), jnp.float32)],
        ),
        compiler_params=pltpu.CompilerParams(
            dimension_semantics=("arbitrary",)),
    )(*inputs)

    rnn_output = y_flat.reshape(S, B, 2 * H)
    return rnn_output, hidden


# ----------------------------------------------------------------------------
# Pure-JAX reference (for correctness check only) — uses the UNPACKED params.
# ----------------------------------------------------------------------------
def _gru_direction_ref(x, w_ih, w_hh, b_ih, b_hh, hid_dim):
    H = hid_dim

    def step(h, x_t):
        gi = x_t @ w_ih + b_ih
        gh = h @ w_hh + b_hh
        r = jax.nn.sigmoid(gi[:, :H] + gh[:, :H])
        z = jax.nn.sigmoid(gi[:, H:2 * H] + gh[:, H:2 * H])
        n = jnp.tanh(gi[:, 2 * H:] + r * gh[:, 2 * H:])
        h_new = (1.0 - z) * n + z * h
        return h_new, h_new

    h0 = jnp.zeros((x.shape[1], H), jnp.float32)
    h_fin, ys = lax.scan(step, h0, x)
    return ys, h_fin


def _encoder_forward_ref(params, input_ids, hid_dim, n_layer):
    x = jnp.take(params["embedding"], input_ids, axis=0)
    h_last = None
    for l in range(n_layer):
        pf = params["gru"][l]["fwd"]
        pb = params["gru"][l]["bwd"]
        y_f, h_f = _gru_direction_ref(x, pf["w_ih"], pf["w_hh"],
                                      pf["b_ih"][0], pf["b_hh"][0], hid_dim)
        y_b_rev, h_b = _gru_direction_ref(x[::-1], pb["w_ih"], pb["w_hh"],
                                          pb["b_ih"][0], pb["b_hh"][0], hid_dim)
        x = jnp.concatenate([y_f, y_b_rev[::-1]], axis=-1)
        h_last = (h_f, h_b)
    hidden_cat = jnp.concatenate([h_last[0], h_last[1]], axis=1)
    hidden = jnp.tanh(hidden_cat @ params["linear_w"] + params["linear_b"][0])
    return x, hidden


# ----------------------------------------------------------------------------
# Deterministic parameter construction (shapes per nn.Embedding/nn.GRU/nn.Linear)
# ----------------------------------------------------------------------------
def init_params(key, input_dim, emb_dim, hid_dim, n_layer):
    keys = iter(jax.random.split(key, 64))
    scale = 1.0 / jnp.sqrt(hid_dim)

    def uni(shape):
        return jax.random.uniform(next(keys), shape, jnp.float32, -scale, scale)

    params = {
        "embedding": jax.random.normal(next(keys), (input_dim, emb_dim), jnp.float32),
        "gru": [],
        "linear_w": uni((2 * hid_dim, hid_dim)),
        "linear_b": uni((1, hid_dim)),
    }
    for l in range(n_layer):
        in_sz = emb_dim if l == 0 else 2 * hid_dim
        layer = {}
        for d in ("fwd", "bwd"):
            layer[d] = {
                "w_ih": uni((in_sz, 3 * hid_dim)),     # transposed weight_ih_l{l}
                "w_hh": uni((hid_dim, 3 * hid_dim)),   # transposed weight_hh_l{l}
                "b_ih": uni((1, 3 * hid_dim)),
                "b_hh": uni((1, 3 * hid_dim)),
            }
        params["gru"].append(layer)
    return params


if __name__ == "__main__":
    INPUT_DIM = 16   # vocab size
    EMB_DIM = 32
    HID_DIM = 32
    N_LAYER = 2
    SEQ = 8
    BATCH = 2

    key = jax.random.PRNGKey(0)
    k_param, k_ids = jax.random.split(key)
    params = init_params(k_param, INPUT_DIM, EMB_DIM, HID_DIM, N_LAYER)
    input_ids = jax.random.randint(k_ids, (SEQ, BATCH), 0, INPUT_DIM)  # (seq, batch)

    # One-time weight packing (concat directions + block-diagonal W_hh).
    packed = pack_encoder_params(params, HID_DIM, N_LAYER)

    rnn_output, hidden = encoder_forward(packed, input_ids)
    jax.block_until_ready((rnn_output, hidden))

    assert rnn_output.shape == (SEQ, BATCH, 2 * HID_DIM)
    assert hidden.shape == (BATCH, HID_DIM)

    ref_out, ref_hidden = _encoder_forward_ref(params, input_ids, HID_DIM, N_LAYER)
    assert jnp.allclose(rnn_output, ref_out, atol=2e-5, rtol=2e-5)
    assert jnp.allclose(hidden, ref_hidden, atol=2e-5, rtol=2e-5)

    print("KERNEL_OK")
</pallas_src>

<mosaic_0001>
module attributes {stable_mosaic.version = 11 : i64} {
  func.func @kernel(%arg0: i32, %arg1: memref<16x32xf32, #tpu.memory_space<vmem>>, %arg2: memref<32x192xf32, #tpu.memory_space<vmem>>, %arg3: memref<64x192xf32, #tpu.memory_space<vmem>>, %arg4: memref<1x192xf32, #tpu.memory_space<vmem>>, %arg5: memref<1x192xf32, #tpu.memory_space<vmem>>, %arg6: memref<64x192xf32, #tpu.memory_space<vmem>>, %arg7: memref<64x192xf32, #tpu.memory_space<vmem>>, %arg8: memref<1x192xf32, #tpu.memory_space<vmem>>, %arg9: memref<1x192xf32, #tpu.memory_space<vmem>>, %arg10: memref<64x32xf32, #tpu.memory_space<vmem>>, %arg11: memref<1x32xf32, #tpu.memory_space<vmem>>, %arg12: memref<16x64xf32, #tpu.memory_space<vmem>>, %arg13: memref<2x32xf32, #tpu.memory_space<vmem>>, %arg14: memref<16x64xf32, #tpu.memory_space<vmem>>) attributes {dimension_semantics = [#tpu.dimension_semantics<arbitrary>], iteration_bounds = array<i64: 1>, scalar_prefetch = 0 : i64, scratch_operands = 1 : i64, tpu.core_type = #tpu.core_type<tc>, window_params = [{pipeline_mode = #tpu.pipeline_mode<synchronous>, transform_indices = @transform_0, window_bounds = array<i64: 16, 32>}, {pipeline_mode = #tpu.pipeline_mode<synchronous>, transform_indices = @transform_1, window_bounds = array<i64: 32, 192>}, {pipeline_mode = #tpu.pipeline_mode<synchronous>, transform_indices = @transform_2, window_bounds = array<i64: 64, 192>}, {pipeline_mode = #tpu.pipeline_mode<synchronous>, transform_indices = @transform_3, window_bounds = array<i64: 1, 192>}, {pipeline_mode = #tpu.pipeline_mode<synchronous>, transform_indices = @transform_4, window_bounds = array<i64: 1, 192>}, {pipeline_mode = #tpu.pipeline_mode<synchronous>, transform_indices = @transform_5, window_bounds = array<i64: 64, 192>}, {pipeline_mode = #tpu.pipeline_mode<synchronous>, transform_indices = @transform_6, window_bounds = array<i64: 64, 192>}, {pipeline_mode = #tpu.pipeline_mode<synchronous>, transform_indices = @transform_7, window_bounds = array<i64: 1, 192>}, {pipeline_mode = #tpu.pipeline_mode<synchronous>, transform_indices = @transform_8, window_bounds = array<i64: 1, 192>}, {pipeline_mode = #tpu.pipeline_mode<synchronous>, transform_indices = @transform_9, window_bounds = array<i64: 64, 32>}, {pipeline_mode = #tpu.pipeline_mode<synchronous>, transform_indices = @transform_10, window_bounds = array<i64: 1, 32>}, {pipeline_mode = #tpu.pipeline_mode<synchronous>, transform_indices = @transform_11, window_bounds = array<i64: 16, 64>}, {pipeline_mode = #tpu.pipeline_mode<synchronous>, transform_indices = @transform_12, window_bounds = array<i64: 2, 32>}]} {
    %c0 = arith.constant 0 : index
    %c0_0 = arith.constant 0 : index
    %0 = vector.load %arg2[%c0, %c0_0] : memref<32x192xf32, #tpu.memory_space<vmem>>, vector<32x192xf32>
    %c0_1 = arith.constant 0 : index
    %c0_2 = arith.constant 0 : index
    %1 = vector.load %arg3[%c0_1, %c0_2] : memref<64x192xf32, #tpu.memory_space<vmem>>, vector<64x192xf32>
    %c0_3 = arith.constant 0 : index
    %c0_4 = arith.constant 0 : index
    %2 = vector.load %arg4[%c0_3, %c0_4] : memref<1x192xf32, #tpu.memory_space<vmem>>, vector<1x192xf32>
    %c0_5 = arith.constant 0 : index
    %c0_6 = arith.constant 0 : index
    %3 = vector.load %arg5[%c0_5, %c0_6] : memref<1x192xf32, #tpu.memory_space<vmem>>, vector<1x192xf32>
    %c0_7 = arith.constant 0 : index
    %c0_8 = arith.constant 0 : index
    %4 = vector.load %arg1[%c0_7, %c0_8] : memref<16x32xf32, #tpu.memory_space<vmem>>, vector<16x32xf32>
    %cst = arith.constant dense<0.000000e+00> : vector<16x192xf32>
    %5 = tpu.matmul %4, %0, %cst {dimension_numbers = #tpu.dot_dimension_numbers<[1], [0], [0], [1], [0, 0, 1, 1], [], []>} : vector<16x32xf32>, vector<32x192xf32>, vector<16x192xf32> -> vector<16x192xf32>
    %6 = vector.broadcast %2 : vector<1x192xf32> to vector<16x192xf32>
    %7 = arith.addf %5, %6 : vector<16x192xf32>
    %cst_9 = arith.constant 0.000000e+00 : f32
    %8 = vector.broadcast %cst_9 : f32 to vector<2x64xf32>
    %cst_10 = arith.constant dense<0.000000e+00> : vector<2x192xf32>
    %9 = tpu.matmul %8, %1, %cst_10 {dimension_numbers = #tpu.dot_dimension_numbers<[1], [0], [0], [1], [0, 0, 1, 1], [], []>} : vector<2x64xf32>, vector<64x192xf32>, vector<2x192xf32> -> vector<2x192xf32>
    %10 = vector.broadcast %3 : vector<1x192xf32> to vector<2x192xf32>
    %11 = arith.addf %9, %10 : vector<2x192xf32>
    %12 = vector.extract_strided_slice %7 {offsets = [0, 0], sizes = [2, 96], strides = [1, 1]} : vector<16x192xf32> to vector<2x96xf32>
    %13 = vector.extract_strided_slice %7 {offsets = [14, 96], sizes = [2, 96], strides = [1, 1]} : vector<16x192xf32> to vector<2x96xf32>
    %14 = vector.extract_strided_slice %11 {offsets = [0, 0], sizes = [2, 96], strides = [1, 1]} : vector<2x192xf32> to vector<2x96xf32>
    %15 = vector.extract_strided_slice %8 {offsets = [0, 0], sizes = [2, 32], strides = [1, 1]} : vector<2x64xf32> to vector<2x32xf32>
    %16 = vector.extract_strided_slice %12 {offsets = [0, 0], sizes = [2, 32], strides = [1, 1]} : vector<2x96xf32> to vector<2x32xf32>
    %17 = vector.extract_strided_slice %14 {offsets = [0, 0], sizes = [2, 32], strides = [1, 1]} : vector<2x96xf32> to vector<2x32xf32>
    %18 = arith.addf %16, %17 : vector<2x32xf32>
    %19 = arith.negf %18 : vector<2x32xf32>
    %20 = math.exp %19 : vector<2x32xf32>
    %cst_11 = arith.constant 1.000000e+00 : f32
    %21 = vector.broadcast %cst_11 : f32 to vector<2x32xf32>
    %22 = arith.addf %21, %20 : vector<2x32xf32>
    %23 = arith.divf %21, %22 : vector<2x32xf32>
    %24 = vector.extract_strided_slice %12 {offsets = [0, 32], sizes = [2, 32], strides = [1, 1]} : vector<2x96xf32> to vector<2x32xf32>
    %25 = vector.extract_strided_slice %14 {offsets = [0, 32], sizes = [2, 32], strides = [1, 1]} : vector<2x96xf32> to vector<2x32xf32>
    %26 = arith.addf %24, %25 : vector<2x32xf32>
    %27 = arith.negf %26 : vector<2x32xf32>
    %28 = math.exp %27 : vector<2x32xf32>
    %cst_12 = arith.constant 1.000000e+00 : f32
    %29 = vector.broadcast %cst_12 : f32 to vector<2x32xf32>
    %30 = arith.addf %29, %28 : vector<2x32xf32>
    %31 = arith.divf %29, %30 : vector<2x32xf32>
    %32 = vector.extract_strided_slice %12 {offsets = [0, 64], sizes = [2, 32], strides = [1, 1]} : vector<2x96xf32> to vector<2x32xf32>
    %33 = vector.extract_strided_slice %14 {offsets = [0, 64], sizes = [2, 32], strides = [1, 1]} : vector<2x96xf32> to vector<2x32xf32>
    %34 = arith.mulf %23, %33 : vector<2x32xf32>
    %35 = arith.addf %32, %34 : vector<2x32xf32>
    %36 = math.tanh %35 : vector<2x32xf32>
    %cst_13 = arith.constant 1.000000e+00 : f32
    %37 = vector.broadcast %cst_13 : f32 to vector<2x32xf32>
    %38 = arith.subf %37, %31 : vector<2x32xf32>
    %39 = arith.mulf %38, %36 : vector<2x32xf32>
    %40 = arith.mulf %31, %15 : vector<2x32xf32>
    %41 = arith.addf %39, %40 : vector<2x32xf32>
    %42 = vector.extract_strided_slice %11 {offsets = [0, 96], sizes = [2, 96], strides = [1, 1]} : vector<2x192xf32> to vector<2x96xf32>
    %43 = vector.extract_strided_slice %8 {offsets = [0, 32], sizes = [2, 32], strides = [1, 1]} : vector<2x64xf32> to vector<2x32xf32>
    %44 = vector.extract_strided_slice %13 {offsets = [0, 0], sizes = [2, 32], strides = [1, 1]} : vector<2x96xf32> to vector<2x32xf32>
    %45 = vector.extract_strided_slice %42 {offsets = [0, 0], sizes = [2, 32], strides = [1, 1]} : vector<2x96xf32> to vector<2x32xf32>
    %46 = arith.addf %44, %45 : vector<2x32xf32>
    %47 = arith.negf %46 : vector<2x32xf32>
    %48 = math.exp %47 : vector<2x32xf32>
    %cst_14 = arith.constant 1.000000e+00 : f32
    %49 = vector.broadcast %cst_14 : f32 to vector<2x32xf32>
    %50 = arith.addf %49, %48 : vector<2x32xf32>
    %51 = arith.divf %49, %50 : vector<2x32xf32>
    %52 = vector.extract_strided_slice %13 {offsets = [0, 32], sizes = [2, 32], strides = [1, 1]} : vector<2x96xf32> to vector<2x32xf32>
    %53 = vector.extract_strided_slice %42 {offsets = [0, 32], sizes = [2, 32], strides = [1, 1]} : vector<2x96xf32> to vector<2x32xf32>
    %54 = arith.addf %52, %53 : vector<2x32xf32>
    %55 = arith.negf %54 : vector<2x32xf32>
    %56 = math.exp %55 : vector<2x32xf32>
    %cst_15 = arith.constant 1.000000e+00 : f32
    %57 = vector.broadcast %cst_15 : f32 to vector<2x32xf32>
    %58 = arith.addf %57, %56 : vector<2x32xf32>
    %59 = arith.divf %57, %58 : vector<2x32xf32>
    %60 = vector.extract_strided_slice %13 {offsets = [0, 64], sizes = [2, 32], strides = [1, 1]} : vector<2x96xf32> to vector<2x32xf32>
    %61 = vector.extract_strided_slice %42 {offsets = [0, 64], sizes = [2, 32], strides = [1, 1]} : vector<2x96xf32> to vector<2x32xf32>
    %62 = arith.mulf %51, %61 : vector<2x32xf32>
    %63 = arith.addf %60, %62 : vector<2x32xf32>
    %64 = math.tanh %63 : vector<2x32xf32>
    %cst_16 = arith.constant 1.000000e+00 : f32
    %65 = vector.broadcast %cst_16 : f32 to vector<2x32xf32>
    %66 = arith.subf %65, %59 : vector<2x32xf32>
    %67 = arith.mulf %66, %64 : vector<2x32xf32>
    %68 = arith.mulf %59, %43 : vector<2x32xf32>
    %69 = arith.addf %67, %68 : vector<2x32xf32>
    %c0_17 = arith.constant 0 : index
    %c0_18 = arith.constant 0 : index
    %70 = vector.load %arg14[%c0_17, %c0_18] : memref<16x64xf32, #tpu.memory_space<vmem>>, vector<2x32xf32>
    tpu.vector_store %arg14[%c0_17, %c0_18], %41 {strides = array<i32>} : memref<16x64xf32, #tpu.memory_space<vmem>>, vector<2x32xf32>,
    %c14 = arith.constant 14 : index
    %c32 = arith.constant 32 : index
    %71 = vector.load %arg14[%c14, %c32] : memref<16x64xf32, #tpu.memory_space<vmem>>, vector<2x32xf32>
    tpu.vector_store %arg14[%c14, %c32], %69 {strides = array<i32>} : memref<16x64xf32, #tpu.memory_space<vmem>>, vector<2x32xf32>,
    %72 = tpu.concatenate %41, %69 in 1 : vector<2x32xf32>, vector<2x32xf32> -> vector<2x64xf32>
    %cst_19 = arith.constant dense<0.000000e+00> : vector<2x192xf32>
    %73 = tpu.matmul %72, %1, %cst_19 {dimension_numbers = #tpu.dot_dimension_numbers<[1], [0], [0], [1], [0, 0, 1, 1], [], []>} : vector<2x64xf32>, vector<64x192xf32>, vector<2x192xf32> -> vector<2x192xf32>
    %74 = vector.broadcast %3 : vector<1x192xf32> to vector<2x192xf32>
    %75 = arith.addf %73, %74 : vector<2x192xf32>
    %76 = vector.extract_strided_slice %7 {offsets = [2, 0], sizes = [2, 96], strides = [1, 1]} : vector<16x192xf32> to vector<2x96xf32>
    %77 = vector.extract_strided_slice %7 {offsets = [12, 96], sizes = [2, 96], strides = [1, 1]} : vector<16x192xf32> to vector<2x96xf32>
    %78 = vector.extract_strided_slice %75 {offsets = [0, 0], sizes = [2, 96], strides = [1, 1]} : vector<2x192xf32> to vector<2x96xf32>
    %79 = vector.extract_strided_slice %72 {offsets = [0, 0], sizes = [2, 32], strides = [1, 1]} : vector<2x64xf32> to vector<2x32xf32>
    %80 = vector.extract_strided_slice %76 {offsets = [0, 0], sizes = [2, 32], strides = [1, 1]} : vector<2x96xf32> to vector<2x32xf32>
    %81 = vector.extract_strided_slice %78 {offsets = [0, 0], sizes = [2, 32], strides = [1, 1]} : vector<2x96xf32> to vector<2x32xf32>
    %82 = arith.addf %80, %81 : vector<2x32xf32>
    %83 = arith.negf %82 : vector<2x32xf32>
    %84 = math.exp %83 : vector<2x32xf32>
    %cst_20 = arith.constant 1.000000e+00 : f32
    %85 = vector.broadcast %cst_20 : f32 to vector<2x32xf32>
    %86 = arith.addf %85, %84 : vector<2x32xf32>
    %87 = arith.divf %85, %86 : vector<2x32xf32>
    %88 = vector.extract_strided_slice %76 {offsets = [0, 32], sizes = [2, 32], strides = [1, 1]} : vector<2x96xf32> to vector<2x32xf32>
    %89 = vector.extract_strided_slice %78 {offsets = [0, 32], sizes = [2, 32], strides = [1, 1]} : vector<2x96xf32> to vector<2x32xf32>
    %90 = arith.addf %88, %89 : vector<2x32xf32>
    %91 = arith.negf %90 : vector<2x32xf32>
    %92 = math.exp %91 : vector<2x32xf32>
    %cst_21 = arith.constant 1.000000e+00 : f32
    %93 = vector.broadcast %cst_21 : f32 to vector<2x32xf32>
    %94 = arith.addf %93, %92 : vector<2x32xf32>
    %95 = arith.divf %93, %94 : vector<2x32xf32>
    %96 = vector.extract_strided_slice %76 {offsets = [0, 64], sizes = [2, 32], strides = [1, 1]} : vector<2x96xf32> to vector<2x32xf32>
    %97 = vector.extract_strided_slice %78 {offsets = [0, 64], sizes = [2, 32], strides = [1, 1]} : vector<2x96xf32> to vector<2x32xf32>
    %98 = arith.mulf %87, %97 : vector<2x32xf32>
    %99 = arith.addf %96, %98 : vector<2x32xf32>
    %100 = math.tanh %99 : vector<2x32xf32>
    %cst_22 = arith.constant 1.000000e+00 : f32
    %101 = vector.broadcast %cst_22 : f32 to vector<2x32xf32>
    %102 = arith.subf %101, %95 : vector<2x32xf32>
    %103 = arith.mulf %102, %100 : vector<2x32xf32>
    %104 = arith.mulf %95, %79 : vector<2x32xf32>
    %105 = arith.addf %103, %104 : vector<2x32xf32>
    %106 = vector.extract_strided_slice %75 {offsets = [0, 96], sizes = [2, 96], strides = [1, 1]} : vector<2x192xf32> to vector<2x96xf32>
    %107 = vector.extract_strided_slice %72 {offsets = [0, 32], sizes = [2, 32], strides = [1, 1]} : vector<2x64xf32> to vector<2x32xf32>
    %108 = vector.extract_strided_slice %77 {offsets = [0, 0], sizes = [2, 32], strides = [1, 1]} : vector<2x96xf32> to vector<2x32xf32>
    %109 = vector.extract_strided_slice %106 {offsets = [0, 0], sizes = [2, 32], strides = [1, 1]} : vector<2x96xf32> to vector<2x32xf32>
    %110 = arith.addf %108, %109 : vector<2x32xf32>
    %111 = arith.negf %110 : vector<2x32xf32>
    %112 = math.exp %111 : vector<2x32xf32>
    %cst_23 = arith.constant 1.000000e+00 : f32
    %113 = vector.broadcast %cst_23 : f32 to vector<2x32xf32>
    %114 = arith.addf %113, %112 : vector<2x32xf32>
    %115 = arith.divf %113, %114 : vector<2x32xf32>
    %116 = vector.extract_strided_slice %77 {offsets = [0, 32], sizes = [2, 32], strides = [1, 1]} : vector<2x96xf32> to vector<2x32xf32>
    %117 = vector.extract_strided_slice %106 {offsets = [0, 32], sizes = [2, 32], strides = [1, 1]} : vector<2x96xf32> to vector<2x32xf32>
    %118 = arith.addf %116, %117 : vector<2x32xf32>
    %119 = arith.negf %118 : vector<2x32xf32>
    %120 = math.exp %119 : vector<2x32xf32>
    %cst_24 = arith.constant 1.000000e+00 : f32
    %121 = vector.broadcast %cst_24 : f32 to vector<2x32xf32>
    %122 = arith.addf %121, %120 : vector<2x32xf32>
    %123 = arith.divf %121, %122 : vector<2x32xf32>
    %124 = vector.extract_strided_slice %77 {offsets = [0, 64], sizes = [2, 32], strides = [1, 1]} : vector<2x96xf32> to vector<2x32xf32>
    %125 = vector.extract_strided_slice %106 {offsets = [0, 64], sizes = [2, 32], strides = [1, 1]} : vector<2x96xf32> to vector<2x32xf32>
    %126 = arith.mulf %115, %125 : vector<2x32xf32>
    %127 = arith.addf %124, %126 : vector<2x32xf32>
    %128 = math.tanh %127 : vector<2x32xf32>
    %cst_25 = arith.constant 1.000000e+00 : f32
    %129 = vector.broadcast %cst_25 : f32 to vector<2x32xf32>
    %130 = arith.subf %129, %123 : vector<2x32xf32>
    %131 = arith.mulf %130, %128 : vector<2x32xf32>
    %132 = arith.mulf %123, %107 : vector<2x32xf32>
    %133 = arith.addf %131, %132 : vector<2x32xf32>
    %c2 = arith.constant 2 : index
    %c0_26 = arith.constant 0 : index
    %134 = vector.load %arg14[%c2, %c0_26] : memref<16x64xf32, #tpu.memory_space<vmem>>, vector<2x32xf32>
    tpu.vector_store %arg14[%c2, %c0_26], %105 {strides = array<i32>} : memref<16x64xf32, #tpu.memory_space<vmem>>, vector<2x32xf32>,
    %c12 = arith.constant 12 : index
    %c32_27 = arith.constant 32 : index
    %135 = vector.load %arg14[%c12, %c32_27] : memref<16x64xf32, #tpu.memory_space<vmem>>, vector<2x32xf32>
    tpu.vector_store %arg14[%c12, %c32_27], %133 {strides = array<i32>} : memref<16x64xf32, #tpu.memory_space<vmem>>, vector<2x32xf32>,
    %136 = tpu.concatenate %105, %133 in 1 : vector<2x32xf32>, vector<2x32xf32> -> vector<2x64xf32>
    %cst_28 = arith.constant dense<0.000000e+00> : vector<2x192xf32>
    %137 = tpu.matmul %136, %1, %cst_28 {dimension_numbers = #tpu.dot_dimension_numbers<[1], [0], [0], [1], [0, 0, 1, 1], [], []>} : vector<2x64xf32>, vector<64x192xf32>, vector<2x192xf32> -> vector<2x192xf32>
    %138 = vector.broadcast %3 : vector<1x192xf32> to vector<2x192xf32>
    %139 = arith.addf %137, %138 : vector<2x192xf32>
    %140 = vector.extract_strided_slice %7 {offsets = [4, 0], sizes = [2, 96], strides = [1, 1]} : vector<16x192xf32> to vector<2x96xf32>
    %141 = vector.extract_strided_slice %7 {offsets = [10, 96], sizes = [2, 96], strides = [1, 1]} : vector<16x192xf32> to vector<2x96xf32>
    %142 = vector.extract_strided_slice %139 {offsets = [0, 0], sizes = [2, 96], strides = [1, 1]} : vector<2x192xf32> to vector<2x96xf32>
    %143 = vector.extract_strided_slice %136 {offsets = [0, 0], sizes = [2, 32], strides = [1, 1]} : vector<2x64xf32> to vector<2x32xf32>
    %144 = vector.extract_strided_slice %140 {offsets = [0, 0], sizes = [2, 32], strides = [1, 1]} : vector<2x96xf32> to vector<2x32xf32>
    %145 = vector.extract_strided_slice %142 {offsets = [0, 0], sizes = [2, 32], strides = [1, 1]} : vector<2x96xf32> to vector<2x32xf32>
    %146 = arith.addf %144, %145 : vector<2x32xf32>
    %147 = arith.negf %146 : vector<2x32xf32>
    %148 = math.exp %147 : vector<2x32xf32>
    %cst_29 = arith.constant 1.000000e+00 : f32
    %149 = vector.broadcast %cst_29 : f32 to vector<2x32xf32>
    %150 = arith.addf %149, %148 : vector<2x32xf32>
    %151 = arith.divf %149, %150 : vector<2x32xf32>
    %152 = vector.extract_strided_slice %140 {offsets = [0, 32], sizes = [2, 32], strides = [1, 1]} : vector<2x96xf32> to vector<2x32xf32>
    %153 = vector.extract_strided_slice %142 {offsets = [0, 32], sizes = [2, 32], strides = [1, 1]} : vector<2x96xf32> to vector<2x32xf32>
    %154 = arith.addf %152, %153 : vector<2x32xf32>
    %155 = arith.negf %154 : vector<2x32xf32>
    %156 = math.exp %155 : vector<2x32xf32>
    %cst_30 = arith.constant 1.000000e+00 : f32
    %157 = vector.broadcast %cst_30 : f32 to vector<2x32xf32>
    %158 = arith.addf %157, %156 : vector<2x32xf32>
    %159 = arith.divf %157, %158 : vector<2x32xf32>
    %160 = vector.extract_strided_slice %140 {offsets = [0, 64], sizes = [2, 32], strides = [1, 1]} : vector<2x96xf32> to vector<2x32xf32>
    %161 = vector.extract_strided_slice %142 {offsets = [0, 64], sizes = [2, 32], strides = [1, 1]} : vector<2x96xf32> to vector<2x32xf32>
    %162 = arith.mulf %151, %161 : vector<2x32xf32>
    %163 = arith.addf %160, %162 : vector<2x32xf32>
    %164 = math.tanh %163 : vector<2x32xf32>
    %cst_31 = arith.constant 1.000000e+00 : f32
    %165 = vector.broadcast %cst_31 : f32 to vector<2x32xf32>
    %166 = arith.subf %165, %159 : vector<2x32xf32>
    %167 = arith.mulf %166, %164 : vector<2x32xf32>
    %168 = arith.mulf %159, %143 : vector<2x32xf32>
    %169 = arith.addf %167, %168 : vector<2x32xf32>
    %170 = vector.extract_strided_slice %139 {offsets = [0, 96], sizes = [2, 96], strides = [1, 1]} : vector<2x192xf32> to vector<2x96xf32>
    %171 = vector.extract_strided_slice %136 {offsets = [0, 32], sizes = [2, 32], strides = [1, 1]} : vector<2x64xf32> to vector<2x32xf32>
    %172 = vector.extract_strided_slice %141 {offsets = [0, 0], sizes = [2, 32], strides = [1, 1]} : vector<2x96xf32> to vector<2x32xf32>
    %173 = vector.extract_strided_slice %170 {offsets = [0, 0], sizes = [2, 32], strides = [1, 1]} : vector<2x96xf32> to vector<2x32xf32>
    %174 = arith.addf %172, %173 : vector<2x32xf32>
    %175 = arith.negf %174 : vector<2x32xf32>
    %176 = math.exp %175 : vector<2x32xf32>
    %cst_32 = arith.constant 1.000000e+00 : f32
    %177 = vector.broadcast %cst_32 : f32 to vector<2x32xf32>
    %178 = arith.addf %177, %176 : vector<2x32xf32>
    %179 = arith.divf %177, %178 : vector<2x32xf32>
    %180 = vector.extract_strided_slice %141 {offsets = [0, 32], sizes = [2, 32], strides = [1, 1]} : vector<2x96xf32> to vector<2x32xf32>
    %181 = vector.extract_strided_slice %170 {offsets = [0, 32], sizes = [2, 32], strides = [1, 1]} : vector<2x96xf32> to vector<2x32xf32>
    %182 = arith.addf %180, %181 : vector<2x32xf32>
    %183 = arith.negf %182 : vector<2x32xf32>
    %184 = math.exp %183 : vector<2x32xf32>
    %cst_33 = arith.constant 1.000000e+00 : f32
    %185 = vector.broadcast %cst_33 : f32 to vector<2x32xf32>
    %186 = arith.addf %185, %184 : vector<2x32xf32>
    %187 = arith.divf %185, %186 : vector<2x32xf32>
    %188 = vector.extract_strided_slice %141 {offsets = [0, 64], sizes = [2, 32], strides = [1, 1]} : vector<2x96xf32> to vector<2x32xf32>
    %189 = vector.extract_strided_slice %170 {offsets = [0, 64], sizes = [2, 32], strides = [1, 1]} : vector<2x96xf32> to vector<2x32xf32>
    %190 = arith.mulf %179, %189 : vector<2x32xf32>
    %191 = arith.addf %188, %190 : vector<2x32xf32>
    %192 = math.tanh %191 : vector<2x32xf32>
    %cst_34 = arith.constant 1.000000e+00 : f32
    %193 = vector.broadcast %cst_34 : f32 to vector<2x32xf32>
    %194 = arith.subf %193, %187 : vector<2x32xf32>
    %195 = arith.mulf %194, %192 : vector<2x32xf32>
    %196 = arith.mulf %187, %171 : vector<2x32xf32>
    %197 = arith.addf %195, %196 : vector<2x32xf32>
    %c4 = arith.constant 4 : index
    %c0_35 = arith.constant 0 : index
    %198 = vector.load %arg14[%c4, %c0_35] : memref<16x64xf32, #tpu.memory_space<vmem>>, vector<2x32xf32>
    tpu.vector_store %arg14[%c4, %c0_35], %169 {strides = array<i32>} : memref<16x64xf32, #tpu.memory_space<vmem>>, vector<2x32xf32>,
    %c10 = arith.constant 10 : index
    %c32_36 = arith.constant 32 : index
    %199 = vector.load %arg14[%c10, %c32_36] : memref<16x64xf32, #tpu.memory_space<vmem>>, vector<2x32xf32>
    tpu.vector_store %arg14[%c10, %c32_36], %197 {strides = array<i32>} : memref<16x64xf32, #tpu.memory_space<vmem>>, vector<2x32xf32>,
    %200 = tpu.concatenate %169, %197 in 1 : vector<2x32xf32>, vector<2x32xf32> -> vector<2x64xf32>
    %cst_37 = arith.constant dense<0.000000e+00> : vector<2x192xf32>
    %201 = tpu.matmul %200, %1, %cst_37 {dimension_numbers = #tpu.dot_dimension_numbers<[1], [0], [0], [1], [0, 0, 1, 1], [], []>} : vector<2x64xf32>, vector<64x192xf32>, vector<2x192xf32> -> vector<2x192xf32>
    %202 = vector.broadcast %3 : vector<1x192xf32> to vector<2x192xf32>
    %203 = arith.addf %201, %202 : vector<2x192xf32>
    %204 = vector.extract_strided_slice %7 {offsets = [6, 0], sizes = [2, 96], strides = [1, 1]} : vector<16x192xf32> to vector<2x96xf32>
    %205 = vector.extract_strided_slice %7 {offsets = [8, 96], sizes = [2, 96], strides = [1, 1]} : vector<16x192xf32> to vector<2x96xf32>
    %206 = vector.extract_strided_slice %203 {offsets = [0, 0], sizes = [2, 96], strides = [1, 1]} : vector<2x192xf32> to vector<2x96xf32>
    %207 = vector.extract_strided_slice %200 {offsets = [0, 0], sizes = [2, 32], strides = [1, 1]} : vector<2x64xf32> to vector<2x32xf32>
    %208 = vector.extract_strided_slice %204 {offsets = [0, 0], sizes = [2, 32], strides = [1, 1]} : vector<2x96xf32> to vector<2x32xf32>
    %209 = vector.extract_strided_slice %206 {offsets = [0, 0], sizes = [2, 32], strides = [1, 1]} : vector<2x96xf32> to vector<2x32xf32>
    %210 = arith.addf %208, %209 : vector<2x32xf32>
    %211 = arith.negf %210 : vector<2x32xf32>
    %212 = math.exp %211 : vector<2x32xf32>
    %cst_38 = arith.constant 1.000000e+00 : f32
    %213 = vector.broadcast %cst_38 : f32 to vector<2x32xf32>
    %214 = arith.addf %213, %212 : vector<2x32xf32>
    %215 = arith.divf %213, %214 : vector<2x32xf32>
    %216 = vector.extract_strided_slice %204 {offsets = [0, 32], sizes = [2, 32], strides = [1, 1]} : vector<2x96xf32> to vector<2x32xf32>
    %217 = vector.extract_strided_slice %206 {offsets = [0, 32], sizes = [2, 32], strides = [1, 1]} : vector<2x96xf32> to vector<2x32xf32>
    %218 = arith.addf %216, %217 : vector<2x32xf32>
    %219 = arith.negf %218 : vector<2x32xf32>
    %220 = math.exp %219 : vector<2x32xf32>
    %cst_39 = arith.constant 1.000000e+00 : f32
    %221 = vector.broadcast %cst_39 : f32 to vector<2x32xf32>
    %222 = arith.addf %221, %220 : vector<2x32xf32>
    %223 = arith.divf %221, %222 : vector<2x32xf32>
    %224 = vector.extract_strided_slice %204 {offsets = [0, 64], sizes = [2, 32], strides = [1, 1]} : vector<2x96xf32> to vector<2x32xf32>
    %225 = vector.extract_strided_slice %206 {offsets = [0, 64], sizes = [2, 32], strides = [1, 1]} : vector<2x96xf32> to vector<2x32xf32>
    %226 = arith.mulf %215, %225 : vector<2x32xf32>
    %227 = arith.addf %224, %226 : vector<2x32xf32>
    %228 = math.tanh %227 : vector<2x32xf32>
    %cst_40 = arith.constant 1.000000e+00 : f32
    %229 = vector.broadcast %cst_40 : f32 to vector<2x32xf32>
    %230 = arith.subf %229, %223 : vector<2x32xf32>
    %231 = arith.mulf %230, %228 : vector<2x32xf32>
    %232 = arith.mulf %223, %207 : vector<2x32xf32>
    %233 = arith.addf %231, %232 : vector<2x32xf32>
    %234 = vector.extract_strided_slice %203 {offsets = [0, 96], sizes = [2, 96], strides = [1, 1]} : vector<2x192xf32> to vector<2x96xf32>
    %235 = vector.extract_strided_slice %200 {offsets = [0, 32], sizes = [2, 32], strides = [1, 1]} : vector<2x64xf32> to vector<2x32xf32>
    %236 = vector.extract_strided_slice %205 {offsets = [0, 0], sizes = [2, 32], strides = [1, 1]} : vector<2x96xf32> to vector<2x32xf32>
    %237 = vector.extract_strided_slice %234 {offsets = [0, 0], sizes = [2, 32], strides = [1, 1]} : vector<2x96xf32> to vector<2x32xf32>
    %238 = arith.addf %236, %237 : vector<2x32xf32>
    %239 = arith.negf %238 : vector<2x32xf32>
    %240 = math.exp %239 : vector<2x32xf32>
    %cst_41 = arith.constant 1.000000e+00 : f32
    %241 = vector.broadcast %cst_41 : f32 to vector<2x32xf32>
    %242 = arith.addf %241, %240 : vector<2x32xf32>
    %243 = arith.divf %241, %242 : vector<2x32xf32>
    %244 = vector.extract_strided_slice %205 {offsets = [0, 32], sizes = [2, 32], strides = [1, 1]} : vector<2x96xf32> to vector<2x32xf32>
    %245 = vector.extract_strided_slice %234 {offsets = [0, 32], sizes = [2, 32], strides = [1, 1]} : vector<2x96xf32> to vector<2x32xf32>
    %246 = arith.addf %244, %245 : vector<2x32xf32>
    %247 = arith.negf %246 : vector<2x32xf32>
    %248 = math.exp %247 : vector<2x32xf32>
    %cst_42 = arith.constant 1.000000e+00 : f32
    %249 = vector.broadcast %cst_42 : f32 to vector<2x32xf32>
    %250 = arith.addf %249, %248 : vector<2x32xf32>
    %251 = arith.divf %249, %250 : vector<2x32xf32>
    %252 = vector.extract_strided_slice %205 {offsets = [0, 64], sizes = [2, 32], strides = [1, 1]} : vector<2x96xf32> to vector<2x32xf32>
    %253 = vector.extract_strided_slice %234 {offsets = [0, 64], sizes = [2, 32], strides = [1, 1]} : vector<2x96xf32> to vector<2x32xf32>
    %254 = arith.mulf %243, %253 : vector<2x32xf32>
    %255 = arith.addf %252, %254 : vector<2x32xf32>
    %256 = math.tanh %255 : vector<2x32xf32>
    %cst_43 = arith.constant 1.000000e+00 : f32
    %257 = vector.broadcast %cst_43 : f32 to vector<2x32xf32>
    %258 = arith.subf %257, %251 : vector<2x32xf32>
    %259 = arith.mulf %258, %256 : vector<2x32xf32>
    %260 = arith.mulf %251, %235 : vector<2x32xf32>
    %261 = arith.addf %259, %260 : vector<2x32xf32>
    %c6 = arith.constant 6 : index
    %c0_44 = arith.constant 0 : index
    %262 = vector.load %arg14[%c6, %c0_44] : memref<16x64xf32, #tpu.memory_space<vmem>>, vector<2x32xf32>
    tpu.vector_store %arg14[%c6, %c0_44], %233 {strides = array<i32>} : memref<16x64xf32, #tpu.memory_space<vmem>>, vector<2x32xf32>,
    %c8 = arith.constant 8 : index
    %c32_45 = arith.constant 32 : index
    %263 = vector.load %arg14[%c8, %c32_45] : memref<16x64xf32, #tpu.memory_space<vmem>>, vector<2x32xf32>
    tpu.vector_store %arg14[%c8, %c32_45], %261 {strides = array<i32>} : memref<16x64xf32, #tpu.memory_space<vmem>>, vector<2x32xf32>,
    %264 = tpu.concatenate %233, %261 in 1 : vector<2x32xf32>, vector<2x32xf32> -> vector<2x64xf32>
    %cst_46 = arith.constant dense<0.000000e+00> : vector<2x192xf32>
    %265 = tpu.matmul %264, %1, %cst_46 {dimension_numbers = #tpu.dot_dimension_numbers<[1], [0], [0], [1], [0, 0, 1, 1], [], []>} : vector<2x64xf32>, vector<64x192xf32>, vector<2x192xf32> -> vector<2x192xf32>
    %266 = vector.broadcast %3 : vector<1x192xf32> to vector<2x192xf32>
    %267 = arith.addf %265, %266 : vector<2x192xf32>
    %268 = vector.extract_strided_slice %7 {offsets = [8, 0], sizes = [2, 96], strides = [1, 1]} : vector<16x192xf32> to vector<2x96xf32>
    %269 = vector.extract_strided_slice %7 {offsets = [6, 96], sizes = [2, 96], strides = [1, 1]} : vector<16x192xf32> to vector<2x96xf32>
    %270 = vector.extract_strided_slice %267 {offsets = [0, 0], sizes = [2, 96], strides = [1, 1]} : vector<2x192xf32> to vector<2x96xf32>
    %271 = vector.extract_strided_slice %264 {offsets = [0, 0], sizes = [2, 32], strides = [1, 1]} : vector<2x64xf32> to vector<2x32xf32>
    %272 = vector.extract_strided_slice %268 {offsets = [0, 0], sizes = [2, 32], strides = [1, 1]} : vector<2x96xf32> to vector<2x32xf32>
    %273 = vector.extract_strided_slice %270 {offsets = [0, 0], sizes = [2, 32], strides = [1, 1]} : vector<2x96xf32> to vector<2x32xf32>
    %274 = arith.addf %272, %273 : vector<2x32xf32>
    %275 = arith.negf %274 : vector<2x32xf32>
    %276 = math.exp %275 : vector<2x32xf32>
    %cst_47 = arith.constant 1.000000e+00 : f32
    %277 = vector.broadcast %cst_47 : f32 to vector<2x32xf32>
    %278 = arith.addf %277, %276 : vector<2x32xf32>
    %279 = arith.divf %277, %278 : vector<2x32xf32>
    %280 = vector.extract_strided_slice %268 {offsets = [0, 32], sizes = [2, 32], strides = [1, 1]} : vector<2x96xf32> to vector<2x32xf32>
    %281 = vector.extract_strided_slice %270 {offsets = [0, 32], sizes = [2, 32], strides = [1, 1]} : vector<2x96xf32> to vector<2x32xf32>
    %282 = arith.addf %280, %281 : vector<2x32xf32>
    %283 = arith.negf %282 : vector<2x32xf32>
    %284 = math.exp %283 : vector<2x32xf32>
    %cst_48 = arith.constant 1.000000e+00 : f32
    %285 = vector.broadcast %cst_48 : f32 to vector<2x32xf32>
    %286 = arith.addf %285, %284 : vector<2x32xf32>
    %287 = arith.divf %285, %286 : vector<2x32xf32>
    %288 = vector.extract_strided_slice %268 {offsets = [0, 64], sizes = [2, 32], strides = [1, 1]} : vector<2x96xf32> to vector<2x32xf32>
    %289 = vector.extract_strided_slice %270 {offsets = [0, 64], sizes = [2, 32], strides = [1, 1]} : vector<2x96xf32> to vector<2x32xf32>
    %290 = arith.mulf %279, %289 : vector<2x32xf32>
    %291 = arith.addf %288, %290 : vector<2x32xf32>
    %292 = math.tanh %291 : vector<2x32xf32>
    %cst_49 = arith.constant 1.000000e+00 : f32
    %293 = vector.broadcast %cst_49 : f32 to vector<2x32xf32>
    %294 = arith.subf %293, %287 : vector<2x32xf32>
    %295 = arith.mulf %294, %292 : vector<2x32xf32>
    %296 = arith.mulf %287, %271 : vector<2x32xf32>
    %297 = arith.addf %295, %296 : vector<2x32xf32>
    %298 = vector.extract_strided_slice %267 {offsets = [0, 96], sizes = [2, 96], strides = [1, 1]} : vector<2x192xf32> to vector<2x96xf32>
    %299 = vector.extract_strided_slice %264 {offsets = [0, 32], sizes = [2, 32], strides = [1, 1]} : vector<2x64xf32> to vector<2x32xf32>
    %300 = vector.extract_strided_slice %269 {offsets = [0, 0], sizes = [2, 32], strides = [1, 1]} : vector<2x96xf32> to vector<2x32xf32>
    %301 = vector.extract_strided_slice %298 {offsets = [0, 0], sizes = [2, 32], strides = [1, 1]} : vector<2x96xf32> to vector<2x32xf32>
    %302 = arith.addf %300, %301 : vector<2x32xf32>
    %303 = arith.negf %302 : vector<2x32xf32>
    %304 = math.exp %303 : vector<2x32xf32>
    %cst_50 = arith.constant 1.000000e+00 : f32
    %305 = vector.broadcast %cst_50 : f32 to vector<2x32xf32>
    %306 = arith.addf %305, %304 : vector<2x32xf32>
    %307 = arith.divf %305, %306 : vector<2x32xf32>
    %308 = vector.extract_strided_slice %269 {offsets = [0, 32], sizes = [2, 32], strides = [1, 1]} : vector<2x96xf32> to vector<2x32xf32>
    %309 = vector.extract_strided_slice %298 {offsets = [0, 32], sizes = [2, 32], strides = [1, 1]} : vector<2x96xf32> to vector<2x32xf32>
    %310 = arith.addf %308, %309 : vector<2x32xf32>
    %311 = arith.negf %310 : vector<2x32xf32>
    %312 = math.exp %311 : vector<2x32xf32>
    %cst_51 = arith.constant 1.000000e+00 : f32
    %313 = vector.broadcast %cst_51 : f32 to vector<2x32xf32>
    %314 = arith.addf %313, %312 : vector<2x32xf32>
    %315 = arith.divf %313, %314 : vector<2x32xf32>
    %316 = vector.extract_strided_slice %269 {offsets = [0, 64], sizes = [2, 32], strides = [1, 1]} : vector<2x96xf32> to vector<2x32xf32>
    %317 = vector.extract_strided_slice %298 {offsets = [0, 64], sizes = [2, 32], strides = [1, 1]} : vector<2x96xf32> to vector<2x32xf32>
    %318 = arith.mulf %307, %317 : vector<2x32xf32>
    %319 = arith.addf %316, %318 : vector<2x32xf32>
    %320 = math.tanh %319 : vector<2x32xf32>
    %cst_52 = arith.constant 1.000000e+00 : f32
    %321 = vector.broadcast %cst_52 : f32 to vector<2x32xf32>
    %322 = arith.subf %321, %315 : vector<2x32xf32>
    %323 = arith.mulf %322, %320 : vector<2x32xf32>
    %324 = arith.mulf %315, %299 : vector<2x32xf32>
    %325 = arith.addf %323, %324 : vector<2x32xf32>
    %c8_53 = arith.constant 8 : index
    %c0_54 = arith.constant 0 : index
    %326 = vector.load %arg14[%c8_53, %c0_54] : memref<16x64xf32, #tpu.memory_space<vmem>>, vector<2x32xf32>
    tpu.vector_store %arg14[%c8_53, %c0_54], %297 {strides = array<i32>} : memref<16x64xf32, #tpu.memory_space<vmem>>, vector<2x32xf32>,
    %c6_55 = arith.constant 6 : index
    %c32_56 = arith.constant 32 : index
    %327 = vector.load %arg14[%c6_55, %c32_56] : memref<16x64xf32, #tpu.memory_space<vmem>>, vector<2x32xf32>
    tpu.vector_store %arg14[%c6_55, %c32_56], %325 {strides = array<i32>} : memref<16x64xf32, #tpu.memory_space<vmem>>, vector<2x32xf32>,
    %328 = tpu.concatenate %297, %325 in 1 : vector<2x32xf32>, vector<2x32xf32> -> vector<2x64xf32>
    %cst_57 = arith.constant dense<0.000000e+00> : vector<2x192xf32>
    %329 = tpu.matmul %328, %1, %cst_57 {dimension_numbers = #tpu.dot_dimension_numbers<[1], [0], [0], [1], [0, 0, 1, 1], [], []>} : vector<2x64xf32>, vector<64x192xf32>, vector<2x192xf32> -> vector<2x192xf32>
    %330 = vector.broadcast %3 : vector<1x192xf32> to vector<2x192xf32>
    %331 = arith.addf %329, %330 : vector<2x192xf32>
    %332 = vector.extract_strided_slice %7 {offsets = [10, 0], sizes = [2, 96], strides = [1, 1]} : vector<16x192xf32> to vector<2x96xf32>
    %333 = vector.extract_strided_slice %7 {offsets = [4, 96], sizes = [2, 96], strides = [1, 1]} : vector<16x192xf32> to vector<2x96xf32>
    %334 = vector.extract_strided_slice %331 {offsets = [0, 0], sizes = [2, 96], strides = [1, 1]} : vector<2x192xf32> to vector<2x96xf32>
    %335 = vector.extract_strided_slice %328 {offsets = [0, 0], sizes = [2, 32], strides = [1, 1]} : vector<2x64xf32> to vector<2x32xf32>
    %336 = vector.extract_strided_slice %332 {offsets = [0, 0], sizes = [2, 32], strides = [1, 1]} : vector<2x96xf32> to vector<2x32xf32>
    %337 = vector.extract_strided_slice %334 {offsets = [0, 0], sizes = [2, 32], strides = [1, 1]} : vector<2x96xf32> to vector<2x32xf32>
    %338 = arith.addf %336, %337 : vector<2x32xf32>
    %339 = arith.negf %338 : vector<2x32xf32>
    %340 = math.exp %339 : vector<2x32xf32>
    %cst_58 = arith.constant 1.000000e+00 : f32
    %341 = vector.broadcast %cst_58 : f32 to vector<2x32xf32>
    %342 = arith.addf %341, %340 : vector<2x32xf32>
    %343 = arith.divf %341, %342 : vector<2x32xf32>
    %344 = vector.extract_strided_slice %332 {offsets = [0, 32], sizes = [2, 32], strides = [1, 1]} : vector<2x96xf32> to vector<2x32xf32>
    %345 = vector.extract_strided_slice %334 {offsets = [0, 32], sizes = [2, 32], strides = [1, 1]} : vector<2x96xf32> to vector<2x32xf32>
    %346 = arith.addf %344, %345 : vector<2x32xf32>
    %347 = arith.negf %346 : vector<2x32xf32>
    %348 = math.exp %347 : vector<2x32xf32>
    %cst_59 = arith.constant 1.000000e+00 : f32
    %349 = vector.broadcast %cst_59 : f32 to vector<2x32xf32>
    %350 = arith.addf %349, %348 : vector<2x32xf32>
    %351 = arith.divf %349, %350 : vector<2x32xf32>
    %352 = vector.extract_strided_slice %332 {offsets = [0, 64], sizes = [2, 32], strides = [1, 1]} : vector<2x96xf32> to vector<2x32xf32>
    %353 = vector.extract_strided_slice %334 {offsets = [0, 64], sizes = [2, 32], strides = [1, 1]} : vector<2x96xf32> to vector<2x32xf32>
    %354 = arith.mulf %343, %353 : vector<2x32xf32>
    %355 = arith.addf %352, %354 : vector<2x32xf32>
    %356 = math.tanh %355 : vector<2x32xf32>
    %cst_60 = arith.constant 1.000000e+00 : f32
    %357 = vector.broadcast %cst_60 : f32 to vector<2x32xf32>
    %358 = arith.subf %357, %351 : vector<2x32xf32>
    %359 = arith.mulf %358, %356 : vector<2x32xf32>
    %360 = arith.mulf %351, %335 : vector<2x32xf32>
    %361 = arith.addf %359, %360 : vector<2x32xf32>
    %362 = vector.extract_strided_slice %331 {offsets = [0, 96], sizes = [2, 96], strides = [1, 1]} : vector<2x192xf32> to vector<2x96xf32>
    %363 = vector.extract_strided_slice %328 {offsets = [0, 32], sizes = [2, 32], strides = [1, 1]} : vector<2x64xf32> to vector<2x32xf32>
    %364 = vector.extract_strided_slice %333 {offsets = [0, 0], sizes = [2, 32], strides = [1, 1]} : vector<2x96xf32> to vector<2x32xf32>
    %365 = vector.extract_strided_slice %362 {offsets = [0, 0], sizes = [2, 32], strides = [1, 1]} : vector<2x96xf32> to vector<2x32xf32>
    %366 = arith.addf %364, %365 : vector<2x32xf32>
    %367 = arith.negf %366 : vector<2x32xf32>
    %368 = math.exp %367 : vector<2x32xf32>
    %cst_61 = arith.constant 1.000000e+00 : f32
    %369 = vector.broadcast %cst_61 : f32 to vector<2x32xf32>
    %370 = arith.addf %369, %368 : vector<2x32xf32>
    %371 = arith.divf %369, %370 : vector<2x32xf32>
    %372 = vector.extract_strided_slice %333 {offsets = [0, 32], sizes = [2, 32], strides = [1, 1]} : vector<2x96xf32> to vector<2x32xf32>
    %373 = vector.extract_strided_slice %362 {offsets = [0, 32], sizes = [2, 32], strides = [1, 1]} : vector<2x96xf32> to vector<2x32xf32>
    %374 = arith.addf %372, %373 : vector<2x32xf32>
    %375 = arith.negf %374 : vector<2x32xf32>
    %376 = math.exp %375 : vector<2x32xf32>
    %cst_62 = arith.constant 1.000000e+00 : f32
    %377 = vector.broadcast %cst_62 : f32 to vector<2x32xf32>
    %378 = arith.addf %377, %376 : vector<2x32xf32>
    %379 = arith.divf %377, %378 : vector<2x32xf32>
    %380 = vector.extract_strided_slice %333 {offsets = [0, 64], sizes = [2, 32], strides = [1, 1]} : vector<2x96xf32> to vector<2x32xf32>
    %381 = vector.extract_strided_slice %362 {offsets = [0, 64], sizes = [2, 32], strides = [1, 1]} : vector<2x96xf32> to vector<2x32xf32>
    %382 = arith.mulf %371, %381 : vector<2x32xf32>
    %383 = arith.addf %380, %382 : vector<2x32xf32>
    %384 = math.tanh %383 : vector<2x32xf32>
    %cst_63 = arith.constant 1.000000e+00 : f32
    %385 = vector.broadcast %cst_63 : f32 to vector<2x32xf32>
    %386 = arith.subf %385, %379 : vector<2x32xf32>
    %387 = arith.mulf %386, %384 : vector<2x32xf32>
    %388 = arith.mulf %379, %363 : vector<2x32xf32>
    %389 = arith.addf %387, %388 : vector<2x32xf32>
    %c10_64 = arith.constant 10 : index
    %c0_65 = arith.constant 0 : index
    %390 = vector.load %arg14[%c10_64, %c0_65] : memref<16x64xf32, #tpu.memory_space<vmem>>, vector<2x32xf32>
    tpu.vector_store %arg14[%c10_64, %c0_65], %361 {strides = array<i32>} : memref<16x64xf32, #tpu.memory_space<vmem>>, vector<2x32xf32>,
    %c4_66 = arith.constant 4 : index
    %c32_67 = arith.constant 32 : index
    %391 = vector.load %arg14[%c4_66, %c32_67] : memref<16x64xf32, #tpu.memory_space<vmem>>, vector<2x32xf32>
    tpu.vector_store %arg14[%c4_66, %c32_67], %389 {strides = array<i32>} : memref<16x64xf32, #tpu.memory_space<vmem>>, vector<2x32xf32>,
    %392 = tpu.concatenate %361, %389 in 1 : vector<2x32xf32>, vector<2x32xf32> -> vector<2x64xf32>
    %cst_68 = arith.constant dense<0.000000e+00> : vector<2x192xf32>
    %393 = tpu.matmul %392, %1, %cst_68 {dimension_numbers = #tpu.dot_dimension_numbers<[1], [0], [0], [1], [0, 0, 1, 1], [], []>} : vector<2x64xf32>, vector<64x192xf32>, vector<2x192xf32> -> vector<2x192xf32>
    %394 = vector.broadcast %3 : vector<1x192xf32> to vector<2x192xf32>
    %395 = arith.addf %393, %394 : vector<2x192xf32>
    %396 = vector.extract_strided_slice %7 {offsets = [12, 0], sizes = [2, 96], strides = [1, 1]} : vector<16x192xf32> to vector<2x96xf32>
    %397 = vector.extract_strided_slice %7 {offsets = [2, 96], sizes = [2, 96], strides = [1, 1]} : vector<16x192xf32> to vector<2x96xf32>
    %398 = vector.extract_strided_slice %395 {offsets = [0, 0], sizes = [2, 96], strides = [1, 1]} : vector<2x192xf32> to vector<2x96xf32>
    %399 = vector.extract_strided_slice %392 {offsets = [0, 0], sizes = [2, 32], strides = [1, 1]} : vector<2x64xf32> to vector<2x32xf32>
    %400 = vector.extract_strided_slice %396 {offsets = [0, 0], sizes = [2, 32], strides = [1, 1]} : vector<2x96xf32> to vector<2x32xf32>
    %401 = vector.extract_strided_slice %398 {offsets = [0, 0], sizes = [2, 32], strides = [1, 1]} : vector<2x96xf32> to vector<2x32xf32>
    %402 = arith.addf %400, %401 : vector<2x32xf32>
    %403 = arith.negf %402 : vector<2x32xf32>
    %404 = math.exp %403 : vector<2x32xf32>
    %cst_69 = arith.constant 1.000000e+00 : f32
    %405 = vector.broadcast %cst_69 : f32 to vector<2x32xf32>
    %406 = arith.addf %405, %404 : vector<2x32xf32>
    %407 = arith.divf %405, %406 : vector<2x32xf32>
    %408 = vector.extract_strided_slice %396 {offsets = [0, 32], sizes = [2, 32], strides = [1, 1]} : vector<2x96xf32> to vector<2x32xf32>
    %409 = vector.extract_strided_slice %398 {offsets = [0, 32], sizes = [2, 32], strides = [1, 1]} : vector<2x96xf32> to vector<2x32xf32>
    %410 = arith.addf %408, %409 : vector<2x32xf32>
    %411 = arith.negf %410 : vector<2x32xf32>
    %412 = math.exp %411 : vector<2x32xf32>
    %cst_70 = arith.constant 1.000000e+00 : f32
    %413 = vector.broadcast %cst_70 : f32 to vector<2x32xf32>
    %414 = arith.addf %413, %412 : vector<2x32xf32>
    %415 = arith.divf %413, %414 : vector<2x32xf32>
    %416 = vector.extract_strided_slice %396 {offsets = [0, 64], sizes = [2, 32], strides = [1, 1]} : vector<2x96xf32> to vector<2x32xf32>
    %417 = vector.extract_strided_slice %398 {offsets = [0, 64], sizes = [2, 32], strides = [1, 1]} : vector<2x96xf32> to vector<2x32xf32>
    %418 = arith.mulf %407, %417 : vector<2x32xf32>
    %419 = arith.addf %416, %418 : vector<2x32xf32>
    %420 = math.tanh %419 : vector<2x32xf32>
    %cst_71 = arith.constant 1.000000e+00 : f32
    %421 = vector.broadcast %cst_71 : f32 to vector<2x32xf32>
    %422 = arith.subf %421, %415 : vector<2x32xf32>
    %423 = arith.mulf %422, %420 : vector<2x32xf32>
    %424 = arith.mulf %415, %399 : vector<2x32xf32>
    %425 = arith.addf %423, %424 : vector<2x32xf32>
    %426 = vector.extract_strided_slice %395 {offsets = [0, 96], sizes = [2, 96], strides = [1, 1]} : vector<2x192xf32> to vector<2x96xf32>
    %427 = vector.extract_strided_slice %392 {offsets = [0, 32], sizes = [2, 32], strides = [1, 1]} : vector<2x64xf32> to vector<2x32xf32>
    %428 = vector.extract_strided_slice %397 {offsets = [0, 0], sizes = [2, 32], strides = [1, 1]} : vector<2x96xf32> to vector<2x32xf32>
    %429 = vector.extract_strided_slice %426 {offsets = [0, 0], sizes = [2, 32], strides = [1, 1]} : vector<2x96xf32> to vector<2x32xf32>
    %430 = arith.addf %428, %429 : vector<2x32xf32>
    %431 = arith.negf %430 : vector<2x32xf32>
    %432 = math.exp %431 : vector<2x32xf32>
    %cst_72 = arith.constant 1.000000e+00 : f32
    %433 = vector.broadcast %cst_72 : f32 to vector<2x32xf32>
    %434 = arith.addf %433, %432 : vector<2x32xf32>
    %435 = arith.divf %433, %434 : vector<2x32xf32>
    %436 = vector.extract_strided_slice %397 {offsets = [0, 32], sizes = [2, 32], strides = [1, 1]} : vector<2x96xf32> to vector<2x32xf32>
    %437 = vector.extract_strided_slice %426 {offsets = [0, 32], sizes = [2, 32], strides = [1, 1]} : vector<2x96xf32> to vector<2x32xf32>
    %438 = arith.addf %436, %437 : vector<2x32xf32>
    %439 = arith.negf %438 : vector<2x32xf32>
    %440 = math.exp %439 : vector<2x32xf32>
    %cst_73 = arith.constant 1.000000e+00 : f32
    %441 = vector.broadcast %cst_73 : f32 to vector<2x32xf32>
    %442 = arith.addf %441, %440 : vector<2x32xf32>
    %443 = arith.divf %441, %442 : vector<2x32xf32>
    %444 = vector.extract_strided_slice %397 {offsets = [0, 64], sizes = [2, 32], strides = [1, 1]} : vector<2x96xf32> to vector<2x32xf32>
    %445 = vector.extract_strided_slice %426 {offsets = [0, 64], sizes = [2, 32], strides = [1, 1]} : vector<2x96xf32> to vector<2x32xf32>
    %446 = arith.mulf %435, %445 : vector<2x32xf32>
    %447 = arith.addf %444, %446 : vector<2x32xf32>
    %448 = math.tanh %447 : vector<2x32xf32>
    %cst_74 = arith.constant 1.000000e+00 : f32
    %449 = vector.broadcast %cst_74 : f32 to vector<2x32xf32>
    %450 = arith.subf %449, %443 : vector<2x32xf32>
    %451 = arith.mulf %450, %448 : vector<2x32xf32>
    %452 = arith.mulf %443, %427 : vector<2x32xf32>
    %453 = arith.addf %451, %452 : vector<2x32xf32>
    %c12_75 = arith.constant 12 : index
    %c0_76 = arith.constant 0 : index
    %454 = vector.load %arg14[%c12_75, %c0_76] : memref<16x64xf32, #tpu.memory_space<vmem>>, vector<2x32xf32>
    tpu.vector_store %arg14[%c12_75, %c0_76], %425 {strides = array<i32>} : memref<16x64xf32, #tpu.memory_space<vmem>>, vector<2x32xf32>,
    %c2_77 = arith.constant 2 : index
    %c32_78 = arith.constant 32 : index
    %455 = vector.load %arg14[%c2_77, %c32_78] : memref<16x64xf32, #tpu.memory_space<vmem>>, vector<2x32xf32>
    tpu.vector_store %arg14[%c2_77, %c32_78], %453 {strides = array<i32>} : memref<16x64xf32, #tpu.memory_space<vmem>>, vector<2x32xf32>,
    %456 = tpu.concatenate %425, %453 in 1 : vector<2x32xf32>, vector<2x32xf32> -> vector<2x64xf32>
    %cst_79 = arith.constant dense<0.000000e+00> : vector<2x192xf32>
    %457 = tpu.matmul %456, %1, %cst_79 {dimension_numbers = #tpu.dot_dimension_numbers<[1], [0], [0], [1], [0, 0, 1, 1], [], []>} : vector<2x64xf32>, vector<64x192xf32>, vector<2x192xf32> -> vector<2x192xf32>
    %458 = vector.broadcast %3 : vector<1x192xf32> to vector<2x192xf32>
    %459 = arith.addf %457, %458 : vector<2x192xf32>
    %460 = vector.extract_strided_slice %7 {offsets = [14, 0], sizes = [2, 96], strides = [1, 1]} : vector<16x192xf32> to vector<2x96xf32>
    %461 = vector.extract_strided_slice %7 {offsets = [0, 96], sizes = [2, 96], strides = [1, 1]} : vector<16x192xf32> to vector<2x96xf32>
    %462 = vector.extract_strided_slice %459 {offsets = [0, 0], sizes = [2, 96], strides = [1, 1]} : vector<2x192xf32> to vector<2x96xf32>
    %463 = vector.extract_strided_slice %456 {offsets = [0, 0], sizes = [2, 32], strides = [1, 1]} : vector<2x64xf32> to vector<2x32xf32>
    %464 = vector.extract_strided_slice %460 {offsets = [0, 0], sizes = [2, 32], strides = [1, 1]} : vector<2x96xf32> to vector<2x32xf32>
    %465 = vector.extract_strided_slice %462 {offsets = [0, 0], sizes = [2, 32], strides = [1, 1]} : vector<2x96xf32> to vector<2x32xf32>
    %466 = arith.addf %464, %465 : vector<2x32xf32>
    %467 = arith.negf %466 : vector<2x32xf32>
    %468 = math.exp %467 : vector<2x32xf32>
    %cst_80 = arith.constant 1.000000e+00 : f32
    %469 = vector.broadcast %cst_80 : f32 to vector<2x32xf32>
    %470 = arith.addf %469, %468 : vector<2x32xf32>
    %471 = arith.divf %469, %470 : vector<2x32xf32>
    %472 = vector.extract_strided_slice %460 {offsets = [0, 32], sizes = [2, 32], strides = [1, 1]} : vector<2x96xf32> to vector<2x32xf32>
    %473 = vector.extract_strided_slice %462 {offsets = [0, 32], sizes = [2, 32], strides = [1, 1]} : vector<2x96xf32> to vector<2x32xf32>
    %474 = arith.addf %472, %473 : vector<2x32xf32>
    %475 = arith.negf %474 : vector<2x32xf32>
    %476 = math.exp %475 : vector<2x32xf32>
    %cst_81 = arith.constant 1.000000e+00 : f32
    %477 = vector.broadcast %cst_81 : f32 to vector<2x32xf32>
    %478 = arith.addf %477, %476 : vector<2x32xf32>
    %479 = arith.divf %477, %478 : vector<2x32xf32>
    %480 = vector.extract_strided_slice %460 {offsets = [0, 64], sizes = [2, 32], strides = [1, 1]} : vector<2x96xf32> to vector<2x32xf32>
    %481 = vector.extract_strided_slice %462 {offsets = [0, 64], sizes = [2, 32], strides = [1, 1]} : vector<2x96xf32> to vector<2x32xf32>
    %482 = arith.mulf %471, %481 : vector<2x32xf32>
    %483 = arith.addf %480, %482 : vector<2x32xf32>
    %484 = math.tanh %483 : vector<2x32xf32>
    %cst_82 = arith.constant 1.000000e+00 : f32
    %485 = vector.broadcast %cst_82 : f32 to vector<2x32xf32>
    %486 = arith.subf %485, %479 : vector<2x32xf32>
    %487 = arith.mulf %486, %484 : vector<2x32xf32>
    %488 = arith.mulf %479, %463 : vector<2x32xf32>
    %489 = arith.addf %487, %488 : vector<2x32xf32>
    %490 = vector.extract_strided_slice %459 {offsets = [0, 96], sizes = [2, 96], strides = [1, 1]} : vector<2x192xf32> to vector<2x96xf32>
    %491 = vector.extract_strided_slice %456 {offsets = [0, 32], sizes = [2, 32], strides = [1, 1]} : vector<2x64xf32> to vector<2x32xf32>
    %492 = vector.extract_strided_slice %461 {offsets = [0, 0], sizes = [2, 32], strides = [1, 1]} : vector<2x96xf32> to vector<2x32xf32>
    %493 = vector.extract_strided_slice %490 {offsets = [0, 0], sizes = [2, 32], strides = [1, 1]} : vector<2x96xf32> to vector<2x32xf32>
    %494 = arith.addf %492, %493 : vector<2x32xf32>
    %495 = arith.negf %494 : vector<2x32xf32>
    %496 = math.exp %495 : vector<2x32xf32>
    %cst_83 = arith.constant 1.000000e+00 : f32
    %497 = vector.broadcast %cst_83 : f32 to vector<2x32xf32>
    %498 = arith.addf %497, %496 : vector<2x32xf32>
    %499 = arith.divf %497, %498 : vector<2x32xf32>
    %500 = vector.extract_strided_slice %461 {offsets = [0, 32], sizes = [2, 32], strides = [1, 1]} : vector<2x96xf32> to vector<2x32xf32>
    %501 = vector.extract_strided_slice %490 {offsets = [0, 32], sizes = [2, 32], strides = [1, 1]} : vector<2x96xf32> to vector<2x32xf32>
    %502 = arith.addf %500, %501 : vector<2x32xf32>
    %503 = arith.negf %502 : vector<2x32xf32>
    %504 = math.exp %503 : vector<2x32xf32>
    %cst_84 = arith.constant 1.000000e+00 : f32
    %505 = vector.broadcast %cst_84 : f32 to vector<2x32xf32>
    %506 = arith.addf %505, %504 : vector<2x32xf32>
    %507 = arith.divf %505, %506 : vector<2x32xf32>
    %508 = vector.extract_strided_slice %461 {offsets = [0, 64], sizes = [2, 32], strides = [1, 1]} : vector<2x96xf32> to vector<2x32xf32>
    %509 = vector.extract_strided_slice %490 {offsets = [0, 64], sizes = [2, 32], strides = [1, 1]} : vector<2x96xf32> to vector<2x32xf32>
    %510 = arith.mulf %499, %509 : vector<2x32xf32>
    %511 = arith.addf %508, %510 : vector<2x32xf32>
    %512 = math.tanh %511 : vector<2x32xf32>
    %cst_85 = arith.constant 1.000000e+00 : f32
    %513 = vector.broadcast %cst_85 : f32 to vector<2x32xf32>
    %514 = arith.subf %513, %507 : vector<2x32xf32>
    %515 = arith.mulf %514, %512 : vector<2x32xf32>
    %516 = arith.mulf %507, %491 : vector<2x32xf32>
    %517 = arith.addf %515, %516 : vector<2x32xf32>
    %c14_86 = arith.constant 14 : index
    %c0_87 = arith.constant 0 : index
    %518 = vector.load %arg14[%c14_86, %c0_87] : memref<16x64xf32, #tpu.memory_space<vmem>>, vector<2x32xf32>
    tpu.vector_store %arg14[%c14_86, %c0_87], %489 {strides = array<i32>} : memref<16x64xf32, #tpu.memory_space<vmem>>, vector<2x32xf32>,
    %c0_88 = arith.constant 0 : index
    %c32_89 = arith.constant 32 : index
    %519 = vector.load %arg14[%c0_88, %c32_89] : memref<16x64xf32, #tpu.memory_space<vmem>>, vector<2x32xf32>
    tpu.vector_store %arg14[%c0_88, %c32_89], %517 {strides = array<i32>} : memref<16x64xf32, #tpu.memory_space<vmem>>, vector<2x32xf32>,
    %c0_90 = arith.constant 0 : index
    %c0_91 = arith.constant 0 : index
    %520 = vector.load %arg6[%c0_90, %c0_91] : memref<64x192xf32, #tpu.memory_space<vmem>>, vector<64x192xf32>
    %c0_92 = arith.constant 0 : index
    %c0_93 = arith.constant 0 : index
    %521 = vector.load %arg7[%c0_92, %c0_93] : memref<64x192xf32, #tpu.memory_space<vmem>>, vector<64x192xf32>
    %c0_94 = arith.constant 0 : index
    %c0_95 = arith.constant 0 : index
    %522 = vector.load %arg8[%c0_94, %c0_95] : memref<1x192xf32, #tpu.memory_space<vmem>>, vector<1x192xf32>
    %c0_96 = arith.constant 0 : index
    %c0_97 = arith.constant 0 : index
    %523 = vector.load %arg9[%c0_96, %c0_97] : memref<1x192xf32, #tpu.memory_space<vmem>>, vector<1x192xf32>
    %c0_98 = arith.constant 0 : index
    %c0_99 = arith.constant 0 : index
    %524 = vector.load %arg14[%c0_98, %c0_99] : memref<16x64xf32, #tpu.memory_space<vmem>>, vector<16x64xf32>
    %cst_100 = arith.constant dense<0.000000e+00> : vector<16x192xf32>
    %525 = tpu.matmul %524, %520, %cst_100 {dimension_numbers = #tpu.dot_dimension_numbers<[1], [0], [0], [1], [0, 0, 1, 1], [], []>} : vector<16x64xf32>, vector<64x192xf32>, vector<16x192xf32> -> vector<16x192xf32>
    %526 = vector.broadcast %522 : vector<1x192xf32> to vector<16x192xf32>
    %527 = arith.addf %525, %526 : vector<16x192xf32>
    %cst_101 = arith.constant 0.000000e+00 : f32
    %528 = vector.broadcast %cst_101 : f32 to vector<2x64xf32>
    %cst_102 = arith.constant dense<0.000000e+00> : vector<2x192xf32>
    %529 = tpu.matmul %528, %521, %cst_102 {dimension_numbers = #tpu.dot_dimension_numbers<[1], [0], [0], [1], [0, 0, 1, 1], [], []>} : vector<2x64xf32>, vector<64x192xf32>, vector<2x192xf32> -> vector<2x192xf32>
    %530 = vector.broadcast %523 : vector<1x192xf32> to vector<2x192xf32>
    %531 = arith.addf %529, %530 : vector<2x192xf32>
    %532 = vector.extract_strided_slice %527 {offsets = [0, 0], sizes = [2, 96], strides = [1, 1]} : vector<16x192xf32> to vector<2x96xf32>
    %533 = vector.extract_strided_slice %527 {offsets = [14, 96], sizes = [2, 96], strides = [1, 1]} : vector<16x192xf32> to vector<2x96xf32>
    %534 = vector.extract_strided_slice %531 {offsets = [0, 0], sizes = [2, 96], strides = [1, 1]} : vector<2x192xf32> to vector<2x96xf32>
    %535 = vector.extract_strided_slice %528 {offsets = [0, 0], sizes = [2, 32], strides = [1, 1]} : vector<2x64xf32> to vector<2x32xf32>
    %536 = vector.extract_strided_slice %532 {offsets = [0, 0], sizes = [2, 32], strides = [1, 1]} : vector<2x96xf32> to vector<2x32xf32>
    %537 = vector.extract_strided_slice %534 {offsets = [0, 0], sizes = [2, 32], strides = [1, 1]} : vector<2x96xf32> to vector<2x32xf32>
    %538 = arith.addf %536, %537 : vector<2x32xf32>
    %539 = arith.negf %538 : vector<2x32xf32>
    %540 = math.exp %539 : vector<2x32xf32>
    %cst_103 = arith.constant 1.000000e+00 : f32
    %541 = vector.broadcast %cst_103 : f32 to vector<2x32xf32>
    %542 = arith.addf %541, %540 : vector<2x32xf32>
    %543 = arith.divf %541, %542 : vector<2x32xf32>
    %544 = vector.extract_strided_slice %532 {offsets = [0, 32], sizes = [2, 32], strides = [1, 1]} : vector<2x96xf32> to vector<2x32xf32>
    %545 = vector.extract_strided_slice %534 {offsets = [0, 32], sizes = [2, 32], strides = [1, 1]} : vector<2x96xf32> to vector<2x32xf32>
    %546 = arith.addf %544, %545 : vector<2x32xf32>
    %547 = arith.negf %546 : vector<2x32xf32>
    %548 = math.exp %547 : vector<2x32xf32>
    %cst_104 = arith.constant 1.000000e+00 : f32
    %549 = vector.broadcast %cst_104 : f32 to vector<2x32xf32>
    %550 = arith.addf %549, %548 : vector<2x32xf32>
    %551 = arith.divf %549, %550 : vector<2x32xf32>
    %552 = vector.extract_strided_slice %532 {offsets = [0, 64], sizes = [2, 32], strides = [1, 1]} : vector<2x96xf32> to vector<2x32xf32>
    %553 = vector.extract_strided_slice %534 {offsets = [0, 64], sizes = [2, 32], strides = [1, 1]} : vector<2x96xf32> to vector<2x32xf32>
    %554 = arith.mulf %543, %553 : vector<2x32xf32>
    %555 = arith.addf %552, %554 : vector<2x32xf32>
    %556 = math.tanh %555 : vector<2x32xf32>
    %cst_105 = arith.constant 1.000000e+00 : f32
    %557 = vector.broadcast %cst_105 : f32 to vector<2x32xf32>
    %558 = arith.subf %557, %551 : vector<2x32xf32>
    %559 = arith.mulf %558, %556 : vector<2x32xf32>
    %560 = arith.mulf %551, %535 : vector<2x32xf32>
    %561 = arith.addf %559, %560 : vector<2x32xf32>
    %562 = vector.extract_strided_slice %531 {offsets = [0, 96], sizes = [2, 96], strides = [1, 1]} : vector<2x192xf32> to vector<2x96xf32>
    %563 = vector.extract_strided_slice %528 {offsets = [0, 32], sizes = [2, 32], strides = [1, 1]} : vector<2x64xf32> to vector<2x32xf32>
    %564 = vector.extract_strided_slice %533 {offsets = [0, 0], sizes = [2, 32], strides = [1, 1]} : vector<2x96xf32> to vector<2x32xf32>
    %565 = vector.extract_strided_slice %562 {offsets = [0, 0], sizes = [2, 32], strides = [1, 1]} : vector<2x96xf32> to vector<2x32xf32>
    %566 = arith.addf %564, %565 : vector<2x32xf32>
    %567 = arith.negf %566 : vector<2x32xf32>
    %568 = math.exp %567 : vector<2x32xf32>
    %cst_106 = arith.constant 1.000000e+00 : f32
    %569 = vector.broadcast %cst_106 : f32 to vector<2x32xf32>
    %570 = arith.addf %569, %568 : vector<2x32xf32>
    %571 = arith.divf %569, %570 : vector<2x32xf32>
    %572 = vector.extract_strided_slice %533 {offsets = [0, 32], sizes = [2, 32], strides = [1, 1]} : vector<2x96xf32> to vector<2x32xf32>
    %573 = vector.extract_strided_slice %562 {offsets = [0, 32], sizes = [2, 32], strides = [1, 1]} : vector<2x96xf32> to vector<2x32xf32>
    %574 = arith.addf %572, %573 : vector<2x32xf32>
    %575 = arith.negf %574 : vector<2x32xf32>
    %576 = math.exp %575 : vector<2x32xf32>
    %cst_107 = arith.constant 1.000000e+00 : f32
    %577 = vector.broadcast %cst_107 : f32 to vector<2x32xf32>
    %578 = arith.addf %577, %576 : vector<2x32xf32>
    %579 = arith.divf %577, %578 : vector<2x32xf32>
    %580 = vector.extract_strided_slice %533 {offsets = [0, 64], sizes = [2, 32], strides = [1, 1]} : vector<2x96xf32> to vector<2x32xf32>
    %581 = vector.extract_strided_slice %562 {offsets = [0, 64], sizes = [2, 32], strides = [1, 1]} : vector<2x96xf32> to vector<2x32xf32>
    %582 = arith.mulf %571, %581 : vector<2x32xf32>
    %583 = arith.addf %580, %582 : vector<2x32xf32>
    %584 = math.tanh %583 : vector<2x32xf32>
    %cst_108 = arith.constant 1.000000e+00 : f32
    %585 = vector.broadcast %cst_108 : f32 to vector<2x32xf32>
    %586 = arith.subf %585, %579 : vector<2x32xf32>
    %587 = arith.mulf %586, %584 : vector<2x32xf32>
    %588 = arith.mulf %579, %563 : vector<2x32xf32>
    %589 = arith.addf %587, %588 : vector<2x32xf32>
    %c0_109 = arith.constant 0 : index
    %c0_110 = arith.constant 0 : index
    %590 = vector.load %arg12[%c0_109, %c0_110] : memref<16x64xf32, #tpu.memory_space<vmem>>, vector<2x32xf32>
    tpu.vector_store %arg12[%c0_109, %c0_110], %561 {strides = array<i32>} : memref<16x64xf32, #tpu.memory_space<vmem>>, vector<2x32xf32>,
    %c14_111 = arith.constant 14 : index
    %c32_112 = arith.constant 32 : index
    %591 = vector.load %arg12[%c14_111, %c32_112] : memref<16x64xf32, #tpu.memory_space<vmem>>, vector<2x32xf32>
    tpu.vector_store %arg12[%c14_111, %c32_112], %589 {strides = array<i32>} : memref<16x64xf32, #tpu.memory_space<vmem>>, vector<2x32xf32>,
    %592 = tpu.concatenate %561, %589 in 1 : vector<2x32xf32>, vector<2x32xf32> -> vector<2x64xf32>
    %cst_113 = arith.constant dense<0.000000e+00> : vector<2x192xf32>
    %593 = tpu.matmul %592, %521, %cst_113 {dimension_numbers = #tpu.dot_dimension_numbers<[1], [0], [0], [1], [0, 0, 1, 1], [], []>} : vector<2x64xf32>, vector<64x192xf32>, vector<2x192xf32> -> vector<2x192xf32>
    %594 = vector.broadcast %523 : vector<1x192xf32> to vector<2x192xf32>
    %595 = arith.addf %593, %594 : vector<2x192xf32>
    %596 = vector.extract_strided_slice %527 {offsets = [2, 0], sizes = [2, 96], strides = [1, 1]} : vector<16x192xf32> to vector<2x96xf32>
    %597 = vector.extract_strided_slice %527 {offsets = [12, 96], sizes = [2, 96], strides = [1, 1]} : vector<16x192xf32> to vector<2x96xf32>
    %598 = vector.extract_strided_slice %595 {offsets = [0, 0], sizes = [2, 96], strides = [1, 1]} : vector<2x192xf32> to vector<2x96xf32>
    %599 = vector.extract_strided_slice %592 {offsets = [0, 0], sizes = [2, 32], strides = [1, 1]} : vector<2x64xf32> to vector<2x32xf32>
    %600 = vector.extract_strided_slice %596 {offsets = [0, 0], sizes = [2, 32], strides = [1, 1]} : vector<2x96xf32> to vector<2x32xf32>
    %601 = vector.extract_strided_slice %598 {offsets = [0, 0], sizes = [2, 32], strides = [1, 1]} : vector<2x96xf32> to vector<2x32xf32>
    %602 = arith.addf %600, %601 : vector<2x32xf32>
    %603 = arith.negf %602 : vector<2x32xf32>
    %604 = math.exp %603 : vector<2x32xf32>
    %cst_114 = arith.constant 1.000000e+00 : f32
    %605 = vector.broadcast %cst_114 : f32 to vector<2x32xf32>
    %606 = arith.addf %605, %604 : vector<2x32xf32>
    %607 = arith.divf %605, %606 : vector<2x32xf32>
    %608 = vector.extract_strided_slice %596 {offsets = [0, 32], sizes = [2, 32], strides = [1, 1]} : vector<2x96xf32> to vector<2x32xf32>
    %609 = vector.extract_strided_slice %598 {offsets = [0, 32], sizes = [2, 32], strides = [1, 1]} : vector<2x96xf32> to vector<2x32xf32>
    %610 = arith.addf %608, %609 : vector<2x32xf32>
    %611 = arith.negf %610 : vector<2x32xf32>
    %612 = math.exp %611 : vector<2x32xf32>
    %cst_115 = arith.constant 1.000000e+00 : f32
    %613 = vector.broadcast %cst_115 : f32 to vector<2x32xf32>
    %614 = arith.addf %613, %612 : vector<2x32xf32>
    %615 = arith.divf %613, %614 : vector<2x32xf32>
    %616 = vector.extract_strided_slice %596 {offsets = [0, 64], sizes = [2, 32], strides = [1, 1]} : vector<2x96xf32> to vector<2x32xf32>
    %617 = vector.extract_strided_slice %598 {offsets = [0, 64], sizes = [2, 32], strides = [1, 1]} : vector<2x96xf32> to vector<2x32xf32>
    %618 = arith.mulf %607, %617 : vector<2x32xf32>
    %619 = arith.addf %616, %618 : vector<2x32xf32>
    %620 = math.tanh %619 : vector<2x32xf32>
    %cst_116 = arith.constant 1.000000e+00 : f32
    %621 = vector.broadcast %cst_116 : f32 to vector<2x32xf32>
    %622 = arith.subf %621, %615 : vector<2x32xf32>
    %623 = arith.mulf %622, %620 : vector<2x32xf32>
    %624 = arith.mulf %615, %599 : vector<2x32xf32>
    %625 = arith.addf %623, %624 : vector<2x32xf32>
    %626 = vector.extract_strided_slice %595 {offsets = [0, 96], sizes = [2, 96], strides = [1, 1]} : vector<2x192xf32> to vector<2x96xf32>
    %627 = vector.extract_strided_slice %592 {offsets = [0, 32], sizes = [2, 32], strides = [1, 1]} : vector<2x64xf32> to vector<2x32xf32>
    %628 = vector.extract_strided_slice %597 {offsets = [0, 0], sizes = [2, 32], strides = [1, 1]} : vector<2x96xf32> to vector<2x32xf32>
    %629 = vector.extract_strided_slice %626 {offsets = [0, 0], sizes = [2, 32], strides = [1, 1]} : vector<2x96xf32> to vector<2x32xf32>
    %630 = arith.addf %628, %629 : vector<2x32xf32>
    %631 = arith.negf %630 : vector<2x32xf32>
    %632 = math.exp %631 : vector<2x32xf32>
    %cst_117 = arith.constant 1.000000e+00 : f32
    %633 = vector.broadcast %cst_117 : f32 to vector<2x32xf32>
    %634 = arith.addf %633, %632 : vector<2x32xf32>
    %635 = arith.divf %633, %634 : vector<2x32xf32>
    %636 = vector.extract_strided_slice %597 {offsets = [0, 32], sizes = [2, 32], strides = [1, 1]} : vector<2x96xf32> to vector<2x32xf32>
    %637 = vector.extract_strided_slice %626 {offsets = [0, 32], sizes = [2, 32], strides = [1, 1]} : vector<2x96xf32> to vector<2x32xf32>
    %638 = arith.addf %636, %637 : vector<2x32xf32>
    %639 = arith.negf %638 : vector<2x32xf32>
    %640 = math.exp %639 : vector<2x32xf32>
    %cst_118 = arith.constant 1.000000e+00 : f32
    %641 = vector.broadcast %cst_118 : f32 to vector<2x32xf32>
    %642 = arith.addf %641, %640 : vector<2x32xf32>
    %643 = arith.divf %641, %642 : vector<2x32xf32>
    %644 = vector.extract_strided_slice %597 {offsets = [0, 64], sizes = [2, 32], strides = [1, 1]} : vector<2x96xf32> to vector<2x32xf32>
    %645 = vector.extract_strided_slice %626 {offsets = [0, 64], sizes = [2, 32], strides = [1, 1]} : vector<2x96xf32> to vector<2x32xf32>
    %646 = arith.mulf %635, %645 : vector<2x32xf32>
    %647 = arith.addf %644, %646 : vector<2x32xf32>
    %648 = math.tanh %647 : vector<2x32xf32>
    %cst_119 = arith.constant 1.000000e+00 : f32
    %649 = vector.broadcast %cst_119 : f32 to vector<2x32xf32>
    %650 = arith.subf %649, %643 : vector<2x32xf32>
    %651 = arith.mulf %650, %648 : vector<2x32xf32>
    %652 = arith.mulf %643, %627 : vector<2x32xf32>
    %653 = arith.addf %651, %652 : vector<2x32xf32>
    %c2_120 = arith.constant 2 : index
    %c0_121 = arith.constant 0 : index
    %654 = vector.load %arg12[%c2_120, %c0_121] : memref<16x64xf32, #tpu.memory_space<vmem>>, vector<2x32xf32>
    tpu.vector_store %arg12[%c2_120, %c0_121], %625 {strides = array<i32>} : memref<16x64xf32, #tpu.memory_space<vmem>>, vector<2x32xf32>,
    %c12_122 = arith.constant 12 : index
    %c32_123 = arith.constant 32 : index
    %655 = vector.load %arg12[%c12_122, %c32_123] : memref<16x64xf32, #tpu.memory_space<vmem>>, vector<2x32xf32>
    tpu.vector_store %arg12[%c12_122, %c32_123], %653 {strides = array<i32>} : memref<16x64xf32, #tpu.memory_space<vmem>>, vector<2x32xf32>,
    %656 = tpu.concatenate %625, %653 in 1 : vector<2x32xf32>, vector<2x32xf32> -> vector<2x64xf32>
    %cst_124 = arith.constant dense<0.000000e+00> : vector<2x192xf32>
    %657 = tpu.matmul %656, %521, %cst_124 {dimension_numbers = #tpu.dot_dimension_numbers<[1], [0], [0], [1], [0, 0, 1, 1], [], []>} : vector<2x64xf32>, vector<64x192xf32>, vector<2x192xf32> -> vector<2x192xf32>
    %658 = vector.broadcast %523 : vector<1x192xf32> to vector<2x192xf32>
    %659 = arith.addf %657, %658 : vector<2x192xf32>
    %660 = vector.extract_strided_slice %527 {offsets = [4, 0], sizes = [2, 96], strides = [1, 1]} : vector<16x192xf32> to vector<2x96xf32>
    %661 = vector.extract_strided_slice %527 {offsets = [10, 96], sizes = [2, 96], strides = [1, 1]} : vector<16x192xf32> to vector<2x96xf32>
    %662 = vector.extract_strided_slice %659 {offsets = [0, 0], sizes = [2, 96], strides = [1, 1]} : vector<2x192xf32> to vector<2x96xf32>
    %663 = vector.extract_strided_slice %656 {offsets = [0, 0], sizes = [2, 32], strides = [1, 1]} : vector<2x64xf32> to vector<2x32xf32>
    %664 = vector.extract_strided_slice %660 {offsets = [0, 0], sizes = [2, 32], strides = [1, 1]} : vector<2x96xf32> to vector<2x32xf32>
    %665 = vector.extract_strided_slice %662 {offsets = [0, 0], sizes = [2, 32], strides = [1, 1]} : vector<2x96xf32> to vector<2x32xf32>
    %666 = arith.addf %664, %665 : vector<2x32xf32>
    %667 = arith.negf %666 : vector<2x32xf32>
    %668 = math.exp %667 : vector<2x32xf32>
    %cst_125 = arith.constant 1.000000e+00 : f32
    %669 = vector.broadcast %cst_125 : f32 to vector<2x32xf32>
    %670 = arith.addf %669, %668 : vector<2x32xf32>
    %671 = arith.divf %669, %670 : vector<2x32xf32>
    %672 = vector.extract_strided_slice %660 {offsets = [0, 32], sizes = [2, 32], strides = [1, 1]} : vector<2x96xf32> to vector<2x32xf32>
    %673 = vector.extract_strided_slice %662 {offsets = [0, 32], sizes = [2, 32], strides = [1, 1]} : vector<2x96xf32> to vector<2x32xf32>
    %674 = arith.addf %672, %673 : vector<2x32xf32>
    %675 = arith.negf %674 : vector<2x32xf32>
    %676 = math.exp %675 : vector<2x32xf32>
    %cst_126 = arith.constant 1.000000e+00 : f32
    %677 = vector.broadcast %cst_126 : f32 to vector<2x32xf32>
    %678 = arith.addf %677, %676 : vector<2x32xf32>
    %679 = arith.divf %677, %678 : vector<2x32xf32>
    %680 = vector.extract_strided_slice %660 {offsets = [0, 64], sizes = [2, 32], strides = [1, 1]} : vector<2x96xf32> to vector<2x32xf32>
    %681 = vector.extract_strided_slice %662 {offsets = [0, 64], sizes = [2, 32], strides = [1, 1]} : vector<2x96xf32> to vector<2x32xf32>
    %682 = arith.mulf %671, %681 : vector<2x32xf32>
    %683 = arith.addf %680, %682 : vector<2x32xf32>
    %684 = math.tanh %683 : vector<2x32xf32>
    %cst_127 = arith.constant 1.000000e+00 : f32
    %685 = vector.broadcast %cst_127 : f32 to vector<2x32xf32>
    %686 = arith.subf %685, %679 : vector<2x32xf32>
    %687 = arith.mulf %686, %684 : vector<2x32xf32>
    %688 = arith.mulf %679, %663 : vector<2x32xf32>
    %689 = arith.addf %687, %688 : vector<2x32xf32>
    %690 = vector.extract_strided_slice %659 {offsets = [0, 96], sizes = [2, 96], strides = [1, 1]} : vector<2x192xf32> to vector<2x96xf32>
    %691 = vector.extract_strided_slice %656 {offsets = [0, 32], sizes = [2, 32], strides = [1, 1]} : vector<2x64xf32> to vector<2x32xf32>
    %692 = vector.extract_strided_slice %661 {offsets = [0, 0], sizes = [2, 32], strides = [1, 1]} : vector<2x96xf32> to vector<2x32xf32>
    %693 = vector.extract_strided_slice %690 {offsets = [0, 0], sizes = [2, 32], strides = [1, 1]} : vector<2x96xf32> to vector<2x32xf32>
    %694 = arith.addf %692, %693 : vector<2x32xf32>
    %695 = arith.negf %694 : vector<2x32xf32>
    %696 = math.exp %695 : vector<2x32xf32>
    %cst_128 = arith.constant 1.000000e+00 : f32
    %697 = vector.broadcast %cst_128 : f32 to vector<2x32xf32>
    %698 = arith.addf %697, %696 : vector<2x32xf32>
    %699 = arith.divf %697, %698 : vector<2x32xf32>
    %700 = vector.extract_strided_slice %661 {offsets = [0, 32], sizes = [2, 32], strides = [1, 1]} : vector<2x96xf32> to vector<2x32xf32>
    %701 = vector.extract_strided_slice %690 {offsets = [0, 32], sizes = [2, 32], strides = [1, 1]} : vector<2x96xf32> to vector<2x32xf32>
    %702 = arith.addf %700, %701 : vector<2x32xf32>
    %703 = arith.negf %702 : vector<2x32xf32>
    %704 = math.exp %703 : vector<2x32xf32>
    %cst_129 = arith.constant 1.000000e+00 : f32
    %705 = vector.broadcast %cst_129 : f32 to vector<2x32xf32>
    %706 = arith.addf %705, %704 : vector<2x32xf32>
    %707 = arith.divf %705, %706 : vector<2x32xf32>
    %708 = vector.extract_strided_slice %661 {offsets = [0, 64], sizes = [2, 32], strides = [1, 1]} : vector<2x96xf32> to vector<2x32xf32>
    %709 = vector.extract_strided_slice %690 {offsets = [0, 64], sizes = [2, 32], strides = [1, 1]} : vector<2x96xf32> to vector<2x32xf32>
    %710 = arith.mulf %699, %709 : vector<2x32xf32>
    %711 = arith.addf %708, %710 : vector<2x32xf32>
    %712 = math.tanh %711 : vector<2x32xf32>
    %cst_130 = arith.constant 1.000000e+00 : f32
    %713 = vector.broadcast %cst_130 : f32 to vector<2x32xf32>
    %714 = arith.subf %713, %707 : vector<2x32xf32>
    %715 = arith.mulf %714, %712 : vector<2x32xf32>
    %716 = arith.mulf %707, %691 : vector<2x32xf32>
    %717 = arith.addf %715, %716 : vector<2x32xf32>
    %c4_131 = arith.constant 4 : index
    %c0_132 = arith.constant 0 : index
    %718 = vector.load %arg12[%c4_131, %c0_132] : memref<16x64xf32, #tpu.memory_space<vmem>>, vector<2x32xf32>
    tpu.vector_store %arg12[%c4_131, %c0_132], %689 {strides = array<i32>} : memref<16x64xf32, #tpu.memory_space<vmem>>, vector<2x32xf32>,
    %c10_133 = arith.constant 10 : index
    %c32_134 = arith.constant 32 : index
    %719 = vector.load %arg12[%c10_133, %c32_134] : memref<16x64xf32, #tpu.memory_space<vmem>>, vector<2x32xf32>
    tpu.vector_store %arg12[%c10_133, %c32_134], %717 {strides = array<i32>} : memref<16x64xf32, #tpu.memory_space<vmem>>, vector<2x32xf32>,
    %720 = tpu.concatenate %689, %717 in 1 : vector<2x32xf32>, vector<2x32xf32> -> vector<2x64xf32>
    %cst_135 = arith.constant dense<0.000000e+00> : vector<2x192xf32>
    %721 = tpu.matmul %720, %521, %cst_135 {dimension_numbers = #tpu.dot_dimension_numbers<[1], [0], [0], [1], [0, 0, 1, 1], [], []>} : vector<2x64xf32>, vector<64x192xf32>, vector<2x192xf32> -> vector<2x192xf32>
    %722 = vector.broadcast %523 : vector<1x192xf32> to vector<2x192xf32>
    %723 = arith.addf %721, %722 : vector<2x192xf32>
    %724 = vector.extract_strided_slice %527 {offsets = [6, 0], sizes = [2, 96], strides = [1, 1]} : vector<16x192xf32> to vector<2x96xf32>
    %725 = vector.extract_strided_slice %527 {offsets = [8, 96], sizes = [2, 96], strides = [1, 1]} : vector<16x192xf32> to vector<2x96xf32>
    %726 = vector.extract_strided_slice %723 {offsets = [0, 0], sizes = [2, 96], strides = [1, 1]} : vector<2x192xf32> to vector<2x96xf32>
    %727 = vector.extract_strided_slice %720 {offsets = [0, 0], sizes = [2, 32], strides = [1, 1]} : vector<2x64xf32> to vector<2x32xf32>
    %728 = vector.extract_strided_slice %724 {offsets = [0, 0], sizes = [2, 32], strides = [1, 1]} : vector<2x96xf32> to vector<2x32xf32>
    %729 = vector.extract_strided_slice %726 {offsets = [0, 0], sizes = [2, 32], strides = [1, 1]} : vector<2x96xf32> to vector<2x32xf32>
    %730 = arith.addf %728, %729 : vector<2x32xf32>
    %731 = arith.negf %730 : vector<2x32xf32>
    %732 = math.exp %731 : vector<2x32xf32>
    %cst_136 = arith.constant 1.000000e+00 : f32
    %733 = vector.broadcast %cst_136 : f32 to vector<2x32xf32>
    %734 = arith.addf %733, %732 : vector<2x32xf32>
    %735 = arith.divf %733, %734 : vector<2x32xf32>
    %736 = vector.extract_strided_slice %724 {offsets = [0, 32], sizes = [2, 32], strides = [1, 1]} : vector<2x96xf32> to vector<2x32xf32>
    %737 = vector.extract_strided_slice %726 {offsets = [0, 32], sizes = [2, 32], strides = [1, 1]} : vector<2x96xf32> to vector<2x32xf32>
    %738 = arith.addf %736, %737 : vector<2x32xf32>
    %739 = arith.negf %738 : vector<2x32xf32>
    %740 = math.exp %739 : vector<2x32xf32>
    %cst_137 = arith.constant 1.000000e+00 : f32
    %741 = vector.broadcast %cst_137 : f32 to vector<2x32xf32>
    %742 = arith.addf %741, %740 : vector<2x32xf32>
    %743 = arith.divf %741, %742 : vector<2x32xf32>
    %744 = vector.extract_strided_slice %724 {offsets = [0, 64], sizes = [2, 32], strides = [1, 1]} : vector<2x96xf32> to vector<2x32xf32>
    %745 = vector.extract_strided_slice %726 {offsets = [0, 64], sizes = [2, 32], strides = [1, 1]} : vector<2x96xf32> to vector<2x32xf32>
    %746 = arith.mulf %735, %745 : vector<2x32xf32>
    %747 = arith.addf %744, %746 : vector<2x32xf32>
    %748 = math.tanh %747 : vector<2x32xf32>
    %cst_138 = arith.constant 1.000000e+00 : f32
    %749 = vector.broadcast %cst_138 : f32 to vector<2x32xf32>
    %750 = arith.subf %749, %743 : vector<2x32xf32>
    %751 = arith.mulf %750, %748 : vector<2x32xf32>
    %752 = arith.mulf %743, %727 : vector<2x32xf32>
    %753 = arith.addf %751, %752 : vector<2x32xf32>
    %754 = vector.extract_strided_slice %723 {offsets = [0, 96], sizes = [2, 96], strides = [1, 1]} : vector<2x192xf32> to vector<2x96xf32>
    %755 = vector.extract_strided_slice %720 {offsets = [0, 32], sizes = [2, 32], strides = [1, 1]} : vector<2x64xf32> to vector<2x32xf32>
    %756 = vector.extract_strided_slice %725 {offsets = [0, 0], sizes = [2, 32], strides = [1, 1]} : vector<2x96xf32> to vector<2x32xf32>
    %757 = vector.extract_strided_slice %754 {offsets = [0, 0], sizes = [2, 32], strides = [1, 1]} : vector<2x96xf32> to vector<2x32xf32>
    %758 = arith.addf %756, %757 : vector<2x32xf32>
    %759 = arith.negf %758 : vector<2x32xf32>
    %760 = math.exp %759 : vector<2x32xf32>
    %cst_139 = arith.constant 1.000000e+00 : f32
    %761 = vector.broadcast %cst_139 : f32 to vector<2x32xf32>
    %762 = arith.addf %761, %760 : vector<2x32xf32>
    %763 = arith.divf %761, %762 : vector<2x32xf32>
    %764 = vector.extract_strided_slice %725 {offsets = [0, 32], sizes = [2, 32], strides = [1, 1]} : vector<2x96xf32> to vector<2x32xf32>
    %765 = vector.extract_strided_slice %754 {offsets = [0, 32], sizes = [2, 32], strides = [1, 1]} : vector<2x96xf32> to vector<2x32xf32>
    %766 = arith.addf %764, %765 : vector<2x32xf32>
    %767 = arith.negf %766 : vector<2x32xf32>
    %768 = math.exp %767 : vector<2x32xf32>
    %cst_140 = arith.constant 1.000000e+00 : f32
    %769 = vector.broadcast %cst_140 : f32 to vector<2x32xf32>
    %770 = arith.addf %769, %768 : vector<2x32xf32>
    %771 = arith.divf %769, %770 : vector<2x32xf32>
    %772 = vector.extract_strided_slice %725 {offsets = [0, 64], sizes = [2, 32], strides = [1, 1]} : vector<2x96xf32> to vector<2x32xf32>
    %773 = vector.extract_strided_slice %754 {offsets = [0, 64], sizes = [2, 32], strides = [1, 1]} : vector<2x96xf32> to vector<2x32xf32>
    %774 = arith.mulf %763, %773 : vector<2x32xf32>
    %775 = arith.addf %772, %774 : vector<2x32xf32>
    %776 = math.tanh %775 : vector<2x32xf32>
    %cst_141 = arith.constant 1.000000e+00 : f32
    %777 = vector.broadcast %cst_141 : f32 to vector<2x32xf32>
    %778 = arith.subf %777, %771 : vector<2x32xf32>
    %779 = arith.mulf %778, %776 : vector<2x32xf32>
    %780 = arith.mulf %771, %755 : vector<2x32xf32>
    %781 = arith.addf %779, %780 : vector<2x32xf32>
    %c6_142 = arith.constant 6 : index
    %c0_143 = arith.constant 0 : index
    %782 = vector.load %arg12[%c6_142, %c0_143] : memref<16x64xf32, #tpu.memory_space<vmem>>, vector<2x32xf32>
    tpu.vector_store %arg12[%c6_142, %c0_143], %753 {strides = array<i32>} : memref<16x64xf32, #tpu.memory_space<vmem>>, vector<2x32xf32>,
    %c8_144 = arith.constant 8 : index
    %c32_145 = arith.constant 32 : index
    %783 = vector.load %arg12[%c8_144, %c32_145] : memref<16x64xf32, #tpu.memory_space<vmem>>, vector<2x32xf32>
    tpu.vector_store %arg12[%c8_144, %c32_145], %781 {strides = array<i32>} : memref<16x64xf32, #tpu.memory_space<vmem>>, vector<2x32xf32>,
    %784 = tpu.concatenate %753, %781 in 1 : vector<2x32xf32>, vector<2x32xf32> -> vector<2x64xf32>
    %cst_146 = arith.constant dense<0.000000e+00> : vector<2x192xf32>
    %785 = tpu.matmul %784, %521, %cst_146 {dimension_numbers = #tpu.dot_dimension_numbers<[1], [0], [0], [1], [0, 0, 1, 1], [], []>} : vector<2x64xf32>, vector<64x192xf32>, vector<2x192xf32> -> vector<2x192xf32>
    %786 = vector.broadcast %523 : vector<1x192xf32> to vector<2x192xf32>
    %787 = arith.addf %785, %786 : vector<2x192xf32>
    %788 = vector.extract_strided_slice %527 {offsets = [8, 0], sizes = [2, 96], strides = [1, 1]} : vector<16x192xf32> to vector<2x96xf32>
    %789 = vector.extract_strided_slice %527 {offsets = [6, 96], sizes = [2, 96], strides = [1, 1]} : vector<16x192xf32> to vector<2x96xf32>
    %790 = vector.extract_strided_slice %787 {offsets = [0, 0], sizes = [2, 96], strides = [1, 1]} : vector<2x192xf32> to vector<2x96xf32>
    %791 = vector.extract_strided_slice %784 {offsets = [0, 0], sizes = [2, 32], strides = [1, 1]} : vector<2x64xf32> to vector<2x32xf32>
    %792 = vector.extract_strided_slice %788 {offsets = [0, 0], sizes = [2, 32], strides = [1, 1]} : vector<2x96xf32> to vector<2x32xf32>
    %793 = vector.extract_strided_slice %790 {offsets = [0, 0], sizes = [2, 32], strides = [1, 1]} : vector<2x96xf32> to vector<2x32xf32>
    %794 = arith.addf %792, %793 : vector<2x32xf32>
    %795 = arith.negf %794 : vector<2x32xf32>
    %796 = math.exp %795 : vector<2x32xf32>
    %cst_147 = arith.constant 1.000000e+00 : f32
    %797 = vector.broadcast %cst_147 : f32 to vector<2x32xf32>
    %798 = arith.addf %797, %796 : vector<2x32xf32>
    %799 = arith.divf %797, %798 : vector<2x32xf32>
    %800 = vector.extract_strided_slice %788 {offsets = [0, 32], sizes = [2, 32], strides = [1, 1]} : vector<2x96xf32> to vector<2x32xf32>
    %801 = vector.extract_strided_slice %790 {offsets = [0, 32], sizes = [2, 32], strides = [1, 1]} : vector<2x96xf32> to vector<2x32xf32>
    %802 = arith.addf %800, %801 : vector<2x32xf32>
    %803 = arith.negf %802 : vector<2x32xf32>
    %804 = math.exp %803 : vector<2x32xf32>
    %cst_148 = arith.constant 1.000000e+00 : f32
    %805 = vector.broadcast %cst_148 : f32 to vector<2x32xf32>
    %806 = arith.addf %805, %804 : vector<2x32xf32>
    %807 = arith.divf %805, %806 : vector<2x32xf32>
    %808 = vector.extract_strided_slice %788 {offsets = [0, 64], sizes = [2, 32], strides = [1, 1]} : vector<2x96xf32> to vector<2x32xf32>
    %809 = vector.extract_strided_slice %790 {offsets = [0, 64], sizes = [2, 32], strides = [1, 1]} : vector<2x96xf32> to vector<2x32xf32>
    %810 = arith.mulf %799, %809 : vector<2x32xf32>
    %811 = arith.addf %808, %810 : vector<2x32xf32>
    %812 = math.tanh %811 : vector<2x32xf32>
    %cst_149 = arith.constant 1.000000e+00 : f32
    %813 = vector.broadcast %cst_149 : f32 to vector<2x32xf32>
    %814 = arith.subf %813, %807 : vector<2x32xf32>
    %815 = arith.mulf %814, %812 : vector<2x32xf32>
    %816 = arith.mulf %807, %791 : vector<2x32xf32>
    %817 = arith.addf %815, %816 : vector<2x32xf32>
    %818 = vector.extract_strided_slice %787 {offsets = [0, 96], sizes = [2, 96], strides = [1, 1]} : vector<2x192xf32> to vector<2x96xf32>
    %819 = vector.extract_strided_slice %784 {offsets = [0, 32], sizes = [2, 32], strides = [1, 1]} : vector<2x64xf32> to vector<2x32xf32>
    %820 = vector.extract_strided_slice %789 {offsets = [0, 0], sizes = [2, 32], strides = [1, 1]} : vector<2x96xf32> to vector<2x32xf32>
    %821 = vector.extract_strided_slice %818 {offsets = [0, 0], sizes = [2, 32], strides = [1, 1]} : vector<2x96xf32> to vector<2x32xf32>
    %822 = arith.addf %820, %821 : vector<2x32xf32>
    %823 = arith.negf %822 : vector<2x32xf32>
    %824 = math.exp %823 : vector<2x32xf32>
    %cst_150 = arith.constant 1.000000e+00 : f32
    %825 = vector.broadcast %cst_150 : f32 to vector<2x32xf32>
    %826 = arith.addf %825, %824 : vector<2x32xf32>
    %827 = arith.divf %825, %826 : vector<2x32xf32>
    %828 = vector.extract_strided_slice %789 {offsets = [0, 32], sizes = [2, 32], strides = [1, 1]} : vector<2x96xf32> to vector<2x32xf32>
    %829 = vector.extract_strided_slice %818 {offsets = [0, 32], sizes = [2, 32], strides = [1, 1]} : vector<2x96xf32> to vector<2x32xf32>
    %830 = arith.addf %828, %829 : vector<2x32xf32>
    %831 = arith.negf %830 : vector<2x32xf32>
    %832 = math.exp %831 : vector<2x32xf32>
    %cst_151 = arith.constant 1.000000e+00 : f32
    %833 = vector.broadcast %cst_151 : f32 to vector<2x32xf32>
    %834 = arith.addf %833, %832 : vector<2x32xf32>
    %835 = arith.divf %833, %834 : vector<2x32xf32>
    %836 = vector.extract_strided_slice %789 {offsets = [0, 64], sizes = [2, 32], strides = [1, 1]} : vector<2x96xf32> to vector<2x32xf32>
    %837 = vector.extract_strided_slice %818 {offsets = [0, 64], sizes = [2, 32], strides = [1, 1]} : vector<2x96xf32> to vector<2x32xf32>
    %838 = arith.mulf %827, %837 : vector<2x32xf32>
    %839 = arith.addf %836, %838 : vector<2x32xf32>
    %840 = math.tanh %839 : vector<2x32xf32>
    %cst_152 = arith.constant 1.000000e+00 : f32
    %841 = vector.broadcast %cst_152 : f32 to vector<2x32xf32>
    %842 = arith.subf %841, %835 : vector<2x32xf32>
    %843 = arith.mulf %842, %840 : vector<2x32xf32>
    %844 = arith.mulf %835, %819 : vector<2x32xf32>
    %845 = arith.addf %843, %844 : vector<2x32xf32>
    %c8_153 = arith.constant 8 : index
    %c0_154 = arith.constant 0 : index
    %846 = vector.load %arg12[%c8_153, %c0_154] : memref<16x64xf32, #tpu.memory_space<vmem>>, vector<2x32xf32>
    tpu.vector_store %arg12[%c8_153, %c0_154], %817 {strides = array<i32>} : memref<16x64xf32, #tpu.memory_space<vmem>>, vector<2x32xf32>,
    %c6_155 = arith.constant 6 : index
    %c32_156 = arith.constant 32 : index
    %847 = vector.load %arg12[%c6_155, %c32_156] : memref<16x64xf32, #tpu.memory_space<vmem>>, vector<2x32xf32>
    tpu.vector_store %arg12[%c6_155, %c32_156], %845 {strides = array<i32>} : memref<16x64xf32, #tpu.memory_space<vmem>>, vector<2x32xf32>,
    %848 = tpu.concatenate %817, %845 in 1 : vector<2x32xf32>, vector<2x32xf32> -> vector<2x64xf32>
    %cst_157 = arith.constant dense<0.000000e+00> : vector<2x192xf32>
    %849 = tpu.matmul %848, %521, %cst_157 {dimension_numbers = #tpu.dot_dimension_numbers<[1], [0], [0], [1], [0, 0, 1, 1], [], []>} : vector<2x64xf32>, vector<64x192xf32>, vector<2x192xf32> -> vector<2x192xf32>
    %850 = vector.broadcast %523 : vector<1x192xf32> to vector<2x192xf32>
    %851 = arith.addf %849, %850 : vector<2x192xf32>
    %852 = vector.extract_strided_slice %527 {offsets = [10, 0], sizes = [2, 96], strides = [1, 1]} : vector<16x192xf32> to vector<2x96xf32>
    %853 = vector.extract_strided_slice %527 {offsets = [4, 96], sizes = [2, 96], strides = [1, 1]} : vector<16x192xf32> to vector<2x96xf32>
    %854 = vector.extract_strided_slice %851 {offsets = [0, 0], sizes = [2, 96], strides = [1, 1]} : vector<2x192xf32> to vector<2x96xf32>
    %855 = vector.extract_strided_slice %848 {offsets = [0, 0], sizes = [2, 32], strides = [1, 1]} : vector<2x64xf32> to vector<2x32xf32>
    %856 = vector.extract_strided_slice %852 {offsets = [0, 0], sizes = [2, 32], strides = [1, 1]} : vector<2x96xf32> to vector<2x32xf32>
    %857 = vector.extract_strided_slice %854 {offsets = [0, 0], sizes = [2, 32], strides = [1, 1]} : vector<2x96xf32> to vector<2x32xf32>
    %858 = arith.addf %856, %857 : vector<2x32xf32>
    %859 = arith.negf %858 : vector<2x32xf32>
    %860 = math.exp %859 : vector<2x32xf32>
    %cst_158 = arith.constant 1.000000e+00 : f32
    %861 = vector.broadcast %cst_158 : f32 to vector<2x32xf32>
    %862 = arith.addf %861, %860 : vector<2x32xf32>
    %863 = arith.divf %861, %862 : vector<2x32xf32>
    %864 = vector.extract_strided_slice %852 {offsets = [0, 32], sizes = [2, 32], strides = [1, 1]} : vector<2x96xf32> to vector<2x32xf32>
    %865 = vector.extract_strided_slice %854 {offsets = [0, 32], sizes = [2, 32], strides = [1, 1]} : vector<2x96xf32> to vector<2x32xf32>
    %866 = arith.addf %864, %865 : vector<2x32xf32>
    %867 = arith.negf %866 : vector<2x32xf32>
    %868 = math.exp %867 : vector<2x32xf32>
    %cst_159 = arith.constant 1.000000e+00 : f32
    %869 = vector.broadcast %cst_159 : f32 to vector<2x32xf32>
    %870 = arith.addf %869, %868 : vector<2x32xf32>
    %871 = arith.divf %869, %870 : vector<2x32xf32>
    %872 = vector.extract_strided_slice %852 {offsets = [0, 64], sizes = [2, 32], strides = [1, 1]} : vector<2x96xf32> to vector<2x32xf32>
    %873 = vector.extract_strided_slice %854 {offsets = [0, 64], sizes = [2, 32], strides = [1, 1]} : vector<2x96xf32> to vector<2x32xf32>
    %874 = arith.mulf %863, %873 : vector<2x32xf32>
    %875 = arith.addf %872, %874 : vector<2x32xf32>
    %876 = math.tanh %875 : vector<2x32xf32>
    %cst_160 = arith.constant 1.000000e+00 : f32
    %877 = vector.broadcast %cst_160 : f32 to vector<2x32xf32>
    %878 = arith.subf %877, %871 : vector<2x32xf32>
    %879 = arith.mulf %878, %876 : vector<2x32xf32>
    %880 = arith.mulf %871, %855 : vector<2x32xf32>
    %881 = arith.addf %879, %880 : vector<2x32xf32>
    %882 = vector.extract_strided_slice %851 {offsets = [0, 96], sizes = [2, 96], strides = [1, 1]} : vector<2x192xf32> to vector<2x96xf32>
    %883 = vector.extract_strided_slice %848 {offsets = [0, 32], sizes = [2, 32], strides = [1, 1]} : vector<2x64xf32> to vector<2x32xf32>
    %884 = vector.extract_strided_slice %853 {offsets = [0, 0], sizes = [2, 32], strides = [1, 1]} : vector<2x96xf32> to vector<2x32xf32>
    %885 = vector.extract_strided_slice %882 {offsets = [0, 0], sizes = [2, 32], strides = [1, 1]} : vector<2x96xf32> to vector<2x32xf32>
    %886 = arith.addf %884, %885 : vector<2x32xf32>
    %887 = arith.negf %886 : vector<2x32xf32>
    %888 = math.exp %887 : vector<2x32xf32>
    %cst_161 = arith.constant 1.000000e+00 : f32
    %889 = vector.broadcast %cst_161 : f32 to vector<2x32xf32>
    %890 = arith.addf %889, %888 : vector<2x32xf32>
    %891 = arith.divf %889, %890 : vector<2x32xf32>
    %892 = vector.extract_strided_slice %853 {offsets = [0, 32], sizes = [2, 32], strides = [1, 1]} : vector<2x96xf32> to vector<2x32xf32>
    %893 = vector.extract_strided_slice %882 {offsets = [0, 32], sizes = [2, 32], strides = [1, 1]} : vector<2x96xf32> to vector<2x32xf32>
    %894 = arith.addf %892, %893 : vector<2x32xf32>
    %895 = arith.negf %894 : vector<2x32xf32>
    %896 = math.exp %895 : vector<2x32xf32>
    %cst_162 = arith.constant 1.000000e+00 : f32
    %897 = vector.broadcast %cst_162 : f32 to vector<2x32xf32>
    %898 = arith.addf %897, %896 : vector<2x32xf32>
    %899 = arith.divf %897, %898 : vector<2x32xf32>
    %900 = vector.extract_strided_slice %853 {offsets = [0, 64], sizes = [2, 32], strides = [1, 1]} : vector<2x96xf32> to vector<2x32xf32>
    %901 = vector.extract_strided_slice %882 {offsets = [0, 64], sizes = [2, 32], strides = [1, 1]} : vector<2x96xf32> to vector<2x32xf32>
    %902 = arith.mulf %891, %901 : vector<2x32xf32>
    %903 = arith.addf %900, %902 : vector<2x32xf32>
    %904 = math.tanh %903 : vector<2x32xf32>
    %cst_163 = arith.constant 1.000000e+00 : f32
    %905 = vector.broadcast %cst_163 : f32 to vector<2x32xf32>
    %906 = arith.subf %905, %899 : vector<2x32xf32>
    %907 = arith.mulf %906, %904 : vector<2x32xf32>
    %908 = arith.mulf %899, %883 : vector<2x32xf32>
    %909 = arith.addf %907, %908 : vector<2x32xf32>
    %c10_164 = arith.constant 10 : index
    %c0_165 = arith.constant 0 : index
    %910 = vector.load %arg12[%c10_164, %c0_165] : memref<16x64xf32, #tpu.memory_space<vmem>>, vector<2x32xf32>
    tpu.vector_store %arg12[%c10_164, %c0_165], %881 {strides = array<i32>} : memref<16x64xf32, #tpu.memory_space<vmem>>, vector<2x32xf32>,
    %c4_166 = arith.constant 4 : index
    %c32_167 = arith.constant 32 : index
    %911 = vector.load %arg12[%c4_166, %c32_167] : memref<16x64xf32, #tpu.memory_space<vmem>>, vector<2x32xf32>
    tpu.vector_store %arg12[%c4_166, %c32_167], %909 {strides = array<i32>} : memref<16x64xf32, #tpu.memory_space<vmem>>, vector<2x32xf32>,
    %912 = tpu.concatenate %881, %909 in 1 : vector<2x32xf32>, vector<2x32xf32> -> vector<2x64xf32>
    %cst_168 = arith.constant dense<0.000000e+00> : vector<2x192xf32>
    %913 = tpu.matmul %912, %521, %cst_168 {dimension_numbers = #tpu.dot_dimension_numbers<[1], [0], [0], [1], [0, 0, 1, 1], [], []>} : vector<2x64xf32>, vector<64x192xf32>, vector<2x192xf32> -> vector<2x192xf32>
    %914 = vector.broadcast %523 : vector<1x192xf32> to vector<2x192xf32>
    %915 = arith.addf %913, %914 : vector<2x192xf32>
    %916 = vector.extract_strided_slice %527 {offsets = [12, 0], sizes = [2, 96], strides = [1, 1]} : vector<16x192xf32> to vector<2x96xf32>
    %917 = vector.extract_strided_slice %527 {offsets = [2, 96], sizes = [2, 96], strides = [1, 1]} : vector<16x192xf32> to vector<2x96xf32>
    %918 = vector.extract_strided_slice %915 {offsets = [0, 0], sizes = [2, 96], strides = [1, 1]} : vector<2x192xf32> to vector<2x96xf32>
    %919 = vector.extract_strided_slice %912 {offsets = [0, 0], sizes = [2, 32], strides = [1, 1]} : vector<2x64xf32> to vector<2x32xf32>
    %920 = vector.extract_strided_slice %916 {offsets = [0, 0], sizes = [2, 32], strides = [1, 1]} : vector<2x96xf32> to vector<2x32xf32>
    %921 = vector.extract_strided_slice %918 {offsets = [0, 0], sizes = [2, 32], strides = [1, 1]} : vector<2x96xf32> to vector<2x32xf32>
    %922 = arith.addf %920, %921 : vector<2x32xf32>
    %923 = arith.negf %922 : vector<2x32xf32>
    %924 = math.exp %923 : vector<2x32xf32>
    %cst_169 = arith.constant 1.000000e+00 : f32
    %925 = vector.broadcast %cst_169 : f32 to vector<2x32xf32>
    %926 = arith.addf %925, %924 : vector<2x32xf32>
    %927 = arith.divf %925, %926 : vector<2x32xf32>
    %928 = vector.extract_strided_slice %916 {offsets = [0, 32], sizes = [2, 32], strides = [1, 1]} : vector<2x96xf32> to vector<2x32xf32>
    %929 = vector.extract_strided_slice %918 {offsets = [0, 32], sizes = [2, 32], strides = [1, 1]} : vector<2x96xf32> to vector<2x32xf32>
    %930 = arith.addf %928, %929 : vector<2x32xf32>
    %931 = arith.negf %930 : vector<2x32xf32>
    %932 = math.exp %931 : vector<2x32xf32>
    %cst_170 = arith.constant 1.000000e+00 : f32
    %933 = vector.broadcast %cst_170 : f32 to vector<2x32xf32>
    %934 = arith.addf %933, %932 : vector<2x32xf32>
    %935 = arith.divf %933, %934 : vector<2x32xf32>
    %936 = vector.extract_strided_slice %916 {offsets = [0, 64], sizes = [2, 32], strides = [1, 1]} : vector<2x96xf32> to vector<2x32xf32>
    %937 = vector.extract_strided_slice %918 {offsets = [0, 64], sizes = [2, 32], strides = [1, 1]} : vector<2x96xf32> to vector<2x32xf32>
    %938 = arith.mulf %927, %937 : vector<2x32xf32>
    %939 = arith.addf %936, %938 : vector<2x32xf32>
    %940 = math.tanh %939 : vector<2x32xf32>
    %cst_171 = arith.constant 1.000000e+00 : f32
    %941 = vector.broadcast %cst_171 : f32 to vector<2x32xf32>
    %942 = arith.subf %941, %935 : vector<2x32xf32>
    %943 = arith.mulf %942, %940 : vector<2x32xf32>
    %944 = arith.mulf %935, %919 : vector<2x32xf32>
    %945 = arith.addf %943, %944 : vector<2x32xf32>
    %946 = vector.extract_strided_slice %915 {offsets = [0, 96], sizes = [2, 96], strides = [1, 1]} : vector<2x192xf32> to vector<2x96xf32>
    %947 = vector.extract_strided_slice %912 {offsets = [0, 32], sizes = [2, 32], strides = [1, 1]} : vector<2x64xf32> to vector<2x32xf32>
    %948 = vector.extract_strided_slice %917 {offsets = [0, 0], sizes = [2, 32], strides = [1, 1]} : vector<2x96xf32> to vector<2x32xf32>
    %949 = vector.extract_strided_slice %946 {offsets = [0, 0], sizes = [2, 32], strides = [1, 1]} : vector<2x96xf32> to vector<2x32xf32>
    %950 = arith.addf %948, %949 : vector<2x32xf32>
    %951 = arith.negf %950 : vector<2x32xf32>
    %952 = math.exp %951 : vector<2x32xf32>
    %cst_172 = arith.constant 1.000000e+00 : f32
    %953 = vector.broadcast %cst_172 : f32 to vector<2x32xf32>
    %954 = arith.addf %953, %952 : vector<2x32xf32>
    %955 = arith.divf %953, %954 : vector<2x32xf32>
    %956 = vector.extract_strided_slice %917 {offsets = [0, 32], sizes = [2, 32], strides = [1, 1]} : vector<2x96xf32> to vector<2x32xf32>
    %957 = vector.extract_strided_slice %946 {offsets = [0, 32], sizes = [2, 32], strides = [1, 1]} : vector<2x96xf32> to vector<2x32xf32>
    %958 = arith.addf %956, %957 : vector<2x32xf32>
    %959 = arith.negf %958 : vector<2x32xf32>
    %960 = math.exp %959 : vector<2x32xf32>
    %cst_173 = arith.constant 1.000000e+00 : f32
    %961 = vector.broadcast %cst_173 : f32 to vector<2x32xf32>
    %962 = arith.addf %961, %960 : vector<2x32xf32>
    %963 = arith.divf %961, %962 : vector<2x32xf32>
    %964 = vector.extract_strided_slice %917 {offsets = [0, 64], sizes = [2, 32], strides = [1, 1]} : vector<2x96xf32> to vector<2x32xf32>
    %965 = vector.extract_strided_slice %946 {offsets = [0, 64], sizes = [2, 32], strides = [1, 1]} : vector<2x96xf32> to vector<2x32xf32>
    %966 = arith.mulf %955, %965 : vector<2x32xf32>
    %967 = arith.addf %964, %966 : vector<2x32xf32>
    %968 = math.tanh %967 : vector<2x32xf32>
    %cst_174 = arith.constant 1.000000e+00 : f32
    %969 = vector.broadcast %cst_174 : f32 to vector<2x32xf32>
    %970 = arith.subf %969, %963 : vector<2x32xf32>
    %971 = arith.mulf %970, %968 : vector<2x32xf32>
    %972 = arith.mulf %963, %947 : vector<2x32xf32>
    %973 = arith.addf %971, %972 : vector<2x32xf32>
    %c12_175 = arith.constant 12 : index
    %c0_176 = arith.constant 0 : index
    %974 = vector.load %arg12[%c12_175, %c0_176] : memref<16x64xf32, #tpu.memory_space<vmem>>, vector<2x32xf32>
    tpu.vector_store %arg12[%c12_175, %c0_176], %945 {strides = array<i32>} : memref<16x64xf32, #tpu.memory_space<vmem>>, vector<2x32xf32>,
    %c2_177 = arith.constant 2 : index
    %c32_178 = arith.constant 32 : index
    %975 = vector.load %arg12[%c2_177, %c32_178] : memref<16x64xf32, #tpu.memory_space<vmem>>, vector<2x32xf32>
    tpu.vector_store %arg12[%c2_177, %c32_178], %973 {strides = array<i32>} : memref<16x64xf32, #tpu.memory_space<vmem>>, vector<2x32xf32>,
    %976 = tpu.concatenate %945, %973 in 1 : vector<2x32xf32>, vector<2x32xf32> -> vector<2x64xf32>
    %cst_179 = arith.constant dense<0.000000e+00> : vector<2x192xf32>
    %977 = tpu.matmul %976, %521, %cst_179 {dimension_numbers = #tpu.dot_dimension_numbers<[1], [0], [0], [1], [0, 0, 1, 1], [], []>} : vector<2x64xf32>, vector<64x192xf32>, vector<2x192xf32> -> vector<2x192xf32>
    %978 = vector.broadcast %523 : vector<1x192xf32> to vector<2x192xf32>
    %979 = arith.addf %977, %978 : vector<2x192xf32>
    %980 = vector.extract_strided_slice %527 {offsets = [14, 0], sizes = [2, 96], strides = [1, 1]} : vector<16x192xf32> to vector<2x96xf32>
    %981 = vector.extract_strided_slice %527 {offsets = [0, 96], sizes = [2, 96], strides = [1, 1]} : vector<16x192xf32> to vector<2x96xf32>
    %982 = vector.extract_strided_slice %979 {offsets = [0, 0], sizes = [2, 96], strides = [1, 1]} : vector<2x192xf32> to vector<2x96xf32>
    %983 = vector.extract_strided_slice %976 {offsets = [0, 0], sizes = [2, 32], strides = [1, 1]} : vector<2x64xf32> to vector<2x32xf32>
    %984 = vector.extract_strided_slice %980 {offsets = [0, 0], sizes = [2, 32], strides = [1, 1]} : vector<2x96xf32> to vector<2x32xf32>
    %985 = vector.extract_strided_slice %982 {offsets = [0, 0], sizes = [2, 32], strides = [1, 1]} : vector<2x96xf32> to vector<2x32xf32>
    %986 = arith.addf %984, %985 : vector<2x32xf32>
    %987 = arith.negf %986 : vector<2x32xf32>
    %988 = math.exp %987 : vector<2x32xf32>
    %cst_180 = arith.constant 1.000000e+00 : f32
    %989 = vector.broadcast %cst_180 : f32 to vector<2x32xf32>
    %990 = arith.addf %989, %988 : vector<2x32xf32>
    %991 = arith.divf %989, %990 : vector<2x32xf32>
    %992 = vector.extract_strided_slice %980 {offsets = [0, 32], sizes = [2, 32], strides = [1, 1]} : vector<2x96xf32> to vector<2x32xf32>
    %993 = vector.extract_strided_slice %982 {offsets = [0, 32], sizes = [2, 32], strides = [1, 1]} : vector<2x96xf32> to vector<2x32xf32>
    %994 = arith.addf %992, %993 : vector<2x32xf32>
    %995 = arith.negf %994 : vector<2x32xf32>
    %996 = math.exp %995 : vector<2x32xf32>
    %cst_181 = arith.constant 1.000000e+00 : f32
    %997 = vector.broadcast %cst_181 : f32 to vector<2x32xf32>
    %998 = arith.addf %997, %996 : vector<2x32xf32>
    %999 = arith.divf %997, %998 : vector<2x32xf32>
    %1000 = vector.extract_strided_slice %980 {offsets = [0, 64], sizes = [2, 32], strides = [1, 1]} : vector<2x96xf32> to vector<2x32xf32>
    %1001 = vector.extract_strided_slice %982 {offsets = [0, 64], sizes = [2, 32], strides = [1, 1]} : vector<2x96xf32> to vector<2x32xf32>
    %1002 = arith.mulf %991, %1001 : vector<2x32xf32>
    %1003 = arith.addf %1000, %1002 : vector<2x32xf32>
    %1004 = math.tanh %1003 : vector<2x32xf32>
    %cst_182 = arith.constant 1.000000e+00 : f32
    %1005 = vector.broadcast %cst_182 : f32 to vector<2x32xf32>
    %1006 = arith.subf %1005, %999 : vector<2x32xf32>
    %1007 = arith.mulf %1006, %1004 : vector<2x32xf32>
    %1008 = arith.mulf %999, %983 : vector<2x32xf32>
    %1009 = arith.addf %1007, %1008 : vector<2x32xf32>
    %1010 = vector.extract_strided_slice %979 {offsets = [0, 96], sizes = [2, 96], strides = [1, 1]} : vector<2x192xf32> to vector<2x96xf32>
    %1011 = vector.extract_strided_slice %976 {offsets = [0, 32], sizes = [2, 32], strides = [1, 1]} : vector<2x64xf32> to vector<2x32xf32>
    %1012 = vector.extract_strided_slice %981 {offsets = [0, 0], sizes = [2, 32], strides = [1, 1]} : vector<2x96xf32> to vector<2x32xf32>
    %1013 = vector.extract_strided_slice %1010 {offsets = [0, 0], sizes = [2, 32], strides = [1, 1]} : vector<2x96xf32> to vector<2x32xf32>
    %1014 = arith.addf %1012, %1013 : vector<2x32xf32>
    %1015 = arith.negf %1014 : vector<2x32xf32>
    %1016 = math.exp %1015 : vector<2x32xf32>
    %cst_183 = arith.constant 1.000000e+00 : f32
    %1017 = vector.broadcast %cst_183 : f32 to vector<2x32xf32>
    %1018 = arith.addf %1017, %1016 : vector<2x32xf32>
    %1019 = arith.divf %1017, %1018 : vector<2x32xf32>
    %1020 = vector.extract_strided_slice %981 {offsets = [0, 32], sizes = [2, 32], strides = [1, 1]} : vector<2x96xf32> to vector<2x32xf32>
    %1021 = vector.extract_strided_slice %1010 {offsets = [0, 32], sizes = [2, 32], strides = [1, 1]} : vector<2x96xf32> to vector<2x32xf32>
    %1022 = arith.addf %1020, %1021 : vector<2x32xf32>
    %1023 = arith.negf %1022 : vector<2x32xf32>
    %1024 = math.exp %1023 : vector<2x32xf32>
    %cst_184 = arith.constant 1.000000e+00 : f32
    %1025 = vector.broadcast %cst_184 : f32 to vector<2x32xf32>
    %1026 = arith.addf %1025, %1024 : vector<2x32xf32>
    %1027 = arith.divf %1025, %1026 : vector<2x32xf32>
    %1028 = vector.extract_strided_slice %981 {offsets = [0, 64], sizes = [2, 32], strides = [1, 1]} : vector<2x96xf32> to vector<2x32xf32>
    %1029 = vector.extract_strided_slice %1010 {offsets = [0, 64], sizes = [2, 32], strides = [1, 1]} : vector<2x96xf32> to vector<2x32xf32>
    %1030 = arith.mulf %1019, %1029 : vector<2x32xf32>
    %1031 = arith.addf %1028, %1030 : vector<2x32xf32>
    %1032 = math.tanh %1031 : vector<2x32xf32>
    %cst_185 = arith.constant 1.000000e+00 : f32
    %1033 = vector.broadcast %cst_185 : f32 to vector<2x32xf32>
    %1034 = arith.subf %1033, %1027 : vector<2x32xf32>
    %1035 = arith.mulf %1034, %1032 : vector<2x32xf32>
    %1036 = arith.mulf %1027, %1011 : vector<2x32xf32>
    %1037 = arith.addf %1035, %1036 : vector<2x32xf32>
    %c14_186 = arith.constant 14 : index
    %c0_187 = arith.constant 0 : index
    %1038 = vector.load %arg12[%c14_186, %c0_187] : memref<16x64xf32, #tpu.memory_space<vmem>>, vector<2x32xf32>
    tpu.vector_store %arg12[%c14_186, %c0_187], %1009 {strides = array<i32>} : memref<16x64xf32, #tpu.memory_space<vmem>>, vector<2x32xf32>,
    %c0_188 = arith.constant 0 : index
    %c32_189 = arith.constant 32 : index
    %1039 = vector.load %arg12[%c0_188, %c32_189] : memref<16x64xf32, #tpu.memory_space<vmem>>, vector<2x32xf32>
    tpu.vector_store %arg12[%c0_188, %c32_189], %1037 {strides = array<i32>} : memref<16x64xf32, #tpu.memory_space<vmem>>, vector<2x32xf32>,
    %1040 = tpu.concatenate %1009, %1037 in 1 : vector<2x32xf32>, vector<2x32xf32> -> vector<2x64xf32>
    %c0_190 = arith.constant 0 : index
    %c0_191 = arith.constant 0 : index
    %1041 = vector.load %arg10[%c0_190, %c0_191] : memref<64x32xf32, #tpu.memory_space<vmem>>, vector<64x32xf32>
    %cst_192 = arith.constant dense<0.000000e+00> : vector<2x32xf32>
    %1042 = tpu.matmul %1040, %1041, %cst_192 {dimension_numbers = #tpu.dot_dimension_numbers<[1], [0], [0], [1], [0, 0, 1, 1], [], []>} : vector<2x64xf32>, vector<64x32xf32>, vector<2x32xf32> -> vector<2x32xf32>
    %c0_193 = arith.constant 0 : index
    %c0_194 = arith.constant 0 : index
    %1043 = vector.load %arg11[%c0_193, %c0_194] : memref<1x32xf32, #tpu.memory_space<vmem>>, vector<1x32xf32>
    %1044 = vector.broadcast %1043 : vector<1x32xf32> to vector<2x32xf32>
    %1045 = arith.addf %1042, %1044 : vector<2x32xf32>
    %1046 = math.tanh %1045 : vector<2x32xf32>
    %c0_195 = arith.constant 0 : index
    %c0_196 = arith.constant 0 : index
    %1047 = vector.load %arg13[%c0_195, %c0_196] : memref<2x32xf32, #tpu.memory_space<vmem>>, vector<2x32xf32>
    tpu.vector_store %arg13[%c0_195, %c0_196], %1046 {strides = array<i32>} : memref<2x32xf32, #tpu.memory_space<vmem>>, vector<2x32xf32>,
    return
  }
  func.func @transform_0(%arg0: i32) -> (i32, i32) {
    %c0_i32 = arith.constant 0 : i32
    %c0_i32_0 = arith.constant 0 : i32
    %c0_i32_1 = arith.constant 0 : i32
    return %c0_i32, %c0_i32_0 : i32, i32
  }
  func.func @transform_1(%arg0: i32) -> (i32, i32) {
    %c0_i32 = arith.constant 0 : i32
    %c0_i32_0 = arith.constant 0 : i32
    %c0_i32_1 = arith.constant 0 : i32
    return %c0_i32, %c0_i32_0 : i32, i32
  }
  func.func @transform_2(%arg0: i32) -> (i32, i32) {
    %c0_i32 = arith.constant 0 : i32
    %c0_i32_0 = arith.constant 0 : i32
    %c0_i32_1 = arith.constant 0 : i32
    return %c0_i32, %c0_i32_0 : i32, i32
  }
  func.func @transform_3(%arg0: i32) -> (i32, i32) {
    %c0_i32 = arith.constant 0 : i32
    %c0_i32_0 = arith.constant 0 : i32
    %c0_i32_1 = arith.constant 0 : i32
    return %c0_i32, %c0_i32_0 : i32, i32
  }
  func.func @transform_4(%arg0: i32) -> (i32, i32) {
    %c0_i32 = arith.constant 0 : i32
    %c0_i32_0 = arith.constant 0 : i32
    %c0_i32_1 = arith.constant 0 : i32
    return %c0_i32, %c0_i32_0 : i32, i32
  }
  func.func @transform_5(%arg0: i32) -> (i32, i32) {
    %c0_i32 = arith.constant 0 : i32
    %c0_i32_0 = arith.constant 0 : i32
    %c0_i32_1 = arith.constant 0 : i32
    return %c0_i32, %c0_i32_0 : i32, i32
  }
  func.func @transform_6(%arg0: i32) -> (i32, i32) {
    %c0_i32 = arith.constant 0 : i32
    %c0_i32_0 = arith.constant 0 : i32
    %c0_i32_1 = arith.constant 0 : i32
    return %c0_i32, %c0_i32_0 : i32, i32
  }
  func.func @transform_7(%arg0: i32) -> (i32, i32) {
    %c0_i32 = arith.constant 0 : i32
    %c0_i32_0 = arith.constant 0 : i32
    %c0_i32_1 = arith.constant 0 : i32
    return %c0_i32, %c0_i32_0 : i32, i32
  }
  func.func @transform_8(%arg0: i32) -> (i32, i32) {
    %c0_i32 = arith.constant 0 : i32
    %c0_i32_0 = arith.constant 0 : i32
    %c0_i32_1 = arith.constant 0 : i32
    return %c0_i32, %c0_i32_0 : i32, i32
  }
  func.func @transform_9(%arg0: i32) -> (i32, i32) {
    %c0_i32 = arith.constant 0 : i32
    %c0_i32_0 = arith.constant 0 : i32
    %c0_i32_1 = arith.constant 0 : i32
    return %c0_i32, %c0_i32_0 : i32, i32
  }
  func.func @transform_10(%arg0: i32) -> (i32, i32) {
    %c0_i32 = arith.constant 0 : i32
    %c0_i32_0 = arith.constant 0 : i32
    %c0_i32_1 = arith.constant 0 : i32
    return %c0_i32, %c0_i32_0 : i32, i32
  }
  func.func @transform_11(%arg0: i32) -> (i32, i32) {
    %c0_i32 = arith.constant 0 : i32
    %c0_i32_0 = arith.constant 0 : i32
    %c0_i32_1 = arith.constant 0 : i32
    return %c0_i32, %c0_i32_0 : i32, i32
  }
  func.func @transform_12(%arg0: i32) -> (i32, i32) {
    %c0_i32 = arith.constant 0 : i32
    %c0_i32_0 = arith.constant 0 : i32
    %c0_i32_1 = arith.constant 0 : i32
    return %c0_i32, %c0_i32_0 : i32, i32
  }
}

</mosaic_0001>

<llo_original>
// kernel: tpu_custom_call.1
$region0: #{tpu_custom_call.1}
  #allocation0 [shape = 'u32[]', space=smem, size = 0x4, offset = 0x4, fixed_abs, tag = 'smem constant byte address 0x4 - core index']
  #allocation1 [shape = 'u32[144,128]{1,0:T(1,128)}', space=vmem, size = 0x12000, scoped, tag = 'internal scratch']
  #allocation2 [shape = 'f32[16,64]{1,0:T(8,128)}', space=vmem, size = 0x2000, scoped, tag = 'scratch operand']
  %s0 = inlined_call_operand.vmem [shape: f32[16,32], index: 0, kind: input, shape index: {}]
  %s1 = inlined_call_operand.vmem [shape: f32[32,192], index: 1, kind: input, shape index: {}]
  %s2 = inlined_call_operand.hbm [shape: f32[64,192], index: 2, kind: input, shape index: {}]
  %s3 = inlined_call_operand.vmem [shape: f32[1,192], index: 3, kind: input, shape index: {}]
  %s4 = inlined_call_operand.vmem [shape: f32[1,192], index: 4, kind: input, shape index: {}]
  %s5 = inlined_call_operand.hbm [shape: f32[64,192], index: 5, kind: input, shape index: {}]
  %s6 = inlined_call_operand.hbm [shape: f32[64,192], index: 6, kind: input, shape index: {}]
  %s7 = inlined_call_operand.vmem [shape: f32[1,192], index: 7, kind: input, shape index: {}]
  %s8 = inlined_call_operand.vmem [shape: f32[1,192], index: 8, kind: input, shape index: {}]
  %s9 = inlined_call_operand.vmem [shape: f32[64,32], index: 9, kind: input, shape index: {}]
  %s10 = inlined_call_operand.vmem [shape: f32[1,32], index: 10, kind: input, shape index: {}]
  %s11 = inlined_call_operand.hbm [shape: f32[16,64], index: 11, kind: output, shape index: {0}]
  %s12 = inlined_call_operand.hbm [shape: f32[2,32], index: 12, kind: output, shape index: {1}]
  %13 = xla_tuple %s11, %s12
  %s14 = sld [smem:[#allocation0]]
  $region74: #{tpu_custom_call.1} parent=0
    _
  %s16 = ssub.s32 1, %s14
  %s17 = scalar_select 0, %s16, %s14
  $region1: #{tpu_custom_call.1} parent=0
    #allocation3 [shape = 'u8[65536]{0}', space=vmem, size = 0x10000, scoped, tag = 'input window, operand 2, single buffered']
    #allocation4 [shape = 's32[1]{0}', space=sflag, size = 0x4, scoped, tag = 'scoped memory for tpu_custom_call.1']
    #allocation5 [shape = 's32[1]{0}', space=sflag, size = 0x4, scoped, tag = 'scoped memory for tpu_custom_call.1']
    #allocation6 [shape = 'u8[65536]{0}', space=vmem, size = 0x10000, scoped, tag = 'input window, operand 5, single buffered']
    #allocation7 [shape = 's32[1]{0}', space=sflag, size = 0x4, scoped, tag = 'scoped memory for tpu_custom_call.1']
    #allocation8 [shape = 'u8[65536]{0}', space=vmem, size = 0x10000, scoped, tag = 'input window, operand 6, single buffered']
    #allocation9 [shape = 'u8[8192]{0}', space=vmem, size = 0x2000, scoped, tag = 'output window, operand 0, single buffered']
    #allocation10 [shape = 'u8[1024]{0}', space=vmem, size = 0x400, scoped, tag = 'output window, operand 1, single buffered']
    #allocation11 [shape = 's32[1]{0}', space=sflag, size = 0x4, scoped, tag = 'scoped memory for tpu_custom_call.1']
    %18 = vsyncpa [#allocation4], 0
    %19 = vsyncpa [#allocation7], 0
    %20 = vsyncpa [#allocation5], 0
    %21 = vsyncpa [#allocation11], 0
    // Predicated region
    $region2: #{tpu_custom_call.1} parent=1 // pred_check
      _
    $region3: #{tpu_custom_call.1} parent=1 // pred_check_branch
      %23 = sbr.rel (0) target = $region5
    $region4: #{tpu_custom_call.1} parent=1 // pred_region
      _
    $region5: #{tpu_custom_call.1} parent=1 // pred_fallthru
      _
    // Predicated region
    $region6: #{tpu_custom_call.1} parent=1 // pred_check
      _
    $region7: #{tpu_custom_call.1} parent=1 // pred_check_branch
      %25 = sbr.rel (0) target = $region9
    $region8: #{tpu_custom_call.1} parent=1 // pred_region
      _
    $region9: #{tpu_custom_call.1} parent=1 // pred_fallthru
      _
    // Predicated region
    $region10: #{tpu_custom_call.1} parent=1 // pred_check
      _
    $region11: #{tpu_custom_call.1} parent=1 // pred_check_branch
      %27 = sbr.rel (0) target = $region13
    $region12: #{tpu_custom_call.1} parent=1 // pred_region
      %s29 = ssub.s32 2048, 2048
      %30 = vsyncadd [#allocation4], %s29
      %s31 = sshll.u32 [#allocation3], 4
      %s32 = int_to_ptr.vmem [resolvable:$true] %s31
      %37 = dma.hbm_to_vmem [thread:$0]  %s2, 2048, %s32, [#allocation4], 256, 256, 16
    $region13: #{tpu_custom_call.1} parent=1 // pred_fallthru
      _
    // Predicated region
    $region14: #{tpu_custom_call.1} parent=1 // pred_check
      _
    $region15: #{tpu_custom_call.1} parent=1 // pred_check_branch
      %39 = sbr.rel (0) target = $region17
    $region16: #{tpu_custom_call.1} parent=1 // pred_region
      _
    $region17: #{tpu_custom_call.1} parent=1 // pred_fallthru
      _
    // Predicated region
    $region18: #{tpu_custom_call.1} parent=1 // pred_check
      _
    $region19: #{tpu_custom_call.1} parent=1 // pred_check_branch
      %41 = sbr.rel (0) target = $region21
    $region20: #{tpu_custom_call.1} parent=1 // pred_region
      _
    $region21: #{tpu_custom_call.1} parent=1 // pred_fallthru
      _
    // Predicated region
    $region22: #{tpu_custom_call.1} parent=1 // pred_check
      _
    $region23: #{tpu_custom_call.1} parent=1 // pred_check_branch
      %43 = sbr.rel (0) target = $region25
    $region24: #{tpu_custom_call.1} parent=1 // pred_region
      %s45 = ssub.s32 2048, 2048
      %46 = vsyncadd [#allocation7], %s45
      %s47 = sshll.u32 [#allocation6], 4
      %s48 = int_to_ptr.vmem [resolvable:$true] %s47
      %53 = dma.hbm_to_vmem [thread:$0]  %s5, 2048, %s48, [#allocation7], 256, 256, 16
    $region25: #{tpu_custom_call.1} parent=1 // pred_fallthru
      _
    // Predicated region
    $region26: #{tpu_custom_call.1} parent=1 // pred_check
      _
    $region27: #{tpu_custom_call.1} parent=1 // pred_check_branch
      %55 = sbr.rel (0) target = $region29
    $region28: #{tpu_custom_call.1} parent=1 // pred_region
      %s57 = ssub.s32 2048, 2048
      %58 = vsyncadd [#allocation7], %s57
      %s59 = sshll.u32 [#allocation8], 4
      %s60 = int_to_ptr.vmem [resolvable:$true] %s59
      %65 = dma.hbm_to_vmem [thread:$0]  %s6, 2048, %s60, [#allocation7], 256, 256, 16
    $region29: #{tpu_custom_call.1} parent=1 // pred_fallthru
      _
    // Predicated region
    $region30: #{tpu_custom_call.1} parent=1 // pred_check
      _
    $region31: #{tpu_custom_call.1} parent=1 // pred_check_branch
      %67 = sbr.rel (0) target = $region33
    $region32: #{tpu_custom_call.1} parent=1 // pred_region
      _
    $region33: #{tpu_custom_call.1} parent=1 // pred_fallthru
      _
    // Predicated region
    $region34: #{tpu_custom_call.1} parent=1 // pred_check
      _
    $region35: #{tpu_custom_call.1} parent=1 // pred_check_branch
      %69 = sbr.rel (0) target = $region37
    $region36: #{tpu_custom_call.1} parent=1 // pred_region
      _
    $region37: #{tpu_custom_call.1} parent=1 // pred_fallthru
      _
    // Predicated region
    $region38: #{tpu_custom_call.1} parent=1 // pred_check
      _
    $region39: #{tpu_custom_call.1} parent=1 // pred_check_branch
      %71 = sbr.rel (0) target = $region41
    $region40: #{tpu_custom_call.1} parent=1 // pred_region
      _
    $region41: #{tpu_custom_call.1} parent=1 // pred_fallthru
      _
    // Predicated region
    $region42: #{tpu_custom_call.1} parent=1 // pred_check
      _
    $region43: #{tpu_custom_call.1} parent=1 // pred_check_branch
      %73 = sbr.rel (0) target = $region45
    $region44: #{tpu_custom_call.1} parent=1 // pred_region
      _
    $region45: #{tpu_custom_call.1} parent=1 // pred_fallthru
      _
    // Predicated region
    $region46: #{tpu_custom_call.1} parent=1 // pred_check
      _
    $region47: #{tpu_custom_call.1} parent=1 // pred_check_branch
      %75 = sbr.rel (0) target = $region49
    $region48: #{tpu_custom_call.1} parent=1 // pred_region
      %76 = dma.done [#allocation4], 2048
    $region49: #{tpu_custom_call.1} parent=1 // pred_fallthru
      _
    // Predicated region
    $region50: #{tpu_custom_call.1} parent=1 // pred_check
      _
    $region51: #{tpu_custom_call.1} parent=1 // pred_check_branch
      %78 = sbr.rel (0) target = $region53
    $region52: #{tpu_custom_call.1} parent=1 // pred_region
      %79 = dma.done [#allocation7], 2048
    $region53: #{tpu_custom_call.1} parent=1 // pred_fallthru
      _
    // Predicated region
    $region54: #{tpu_custom_call.1} parent=1 // pred_check
      _
    $region55: #{tpu_custom_call.1} parent=1 // pred_check_branch
      %81 = sbr.rel (0) target = $region57
    $region56: #{tpu_custom_call.1} parent=1 // pred_region
      %82 = dma.done [#allocation7], 2048
    $region57: #{tpu_custom_call.1} parent=1 // pred_fallthru
      _
    %v83 = vld [vmem:[%s1] sm:$0xff]
    %v84 = vld [vmem:[%s1 + $0x8] sm:$0xff]
    %v85 = vld [vmem:[%s1 + $0x10] sm:$0xff]
    %v86 = vld [vmem:[%s1 + $0x18] sm:$0xff]
    %v87 = vld [vmem:[%s1 + $0x20] sm:$0xff]
    %v88 = vld [vmem:[%s1 + $0x28] sm:$0xff]
    %v89 = vld [vmem:[%s1 + $0x30] sm:$0xff]
    %v90 = vld [vmem:[%s1 + $0x38] sm:$0xff]
    %v91 = vld [vmem:[#allocation3] sm:$0xff]
    %v92 = vld [vmem:[#allocation3 + $0x8] sm:$0xff]
    %v93 = vld [vmem:[#allocation3 + $0x10] sm:$0xff]
    %v94 = vld [vmem:[#allocation3 + $0x18] sm:$0xff]
    %v95 = vld [vmem:[#allocation3 + $0x20] sm:$0xff]
    %v96 = vld [vmem:[#allocation3 + $0x28] sm:$0xff]
    %v97 = vld [vmem:[#allocation3 + $0x30] sm:$0xff]
    %v98 = vld [vmem:[#allocation3 + $0x38] sm:$0xff]
    %v99 = vld [vmem:[#allocation3 + $0x40] sm:$0xff]
    %v100 = vld [vmem:[#allocation3 + $0x48] sm:$0xff]
    %v101 = vld [vmem:[#allocation3 + $0x50] sm:$0xff]
    %v102 = vld [vmem:[#allocation3 + $0x58] sm:$0xff]
    %v103 = vld [vmem:[#allocation3 + $0x60] sm:$0xff]
    %v104 = vld [vmem:[#allocation3 + $0x68] sm:$0xff]
    %v105 = vld [vmem:[#allocation3 + $0x70] sm:$0xff]
    %v106 = vld [vmem:[#allocation3 + $0x78] sm:$0xff]
    %v107 = vld [vmem:[%s3] sm:$0x3]
    %v108 = vld [vmem:[%s4] sm:$0x3]
    %v109 = vld [vmem:[%s0] sm:$0xff]
    %v110 = vld [vmem:[%s0 + $0x8] sm:$0xff]
    %v112 = vlaneseq
    %v113 = vshrl.u32 %v112, 7
    %v114 = vsub.s32 0, %v113
    %v115 = vrot.slane %v107, %v114
    %v116 = vlaneseq
    %v117 = vshrl.u32 %v116, 7
    %v118 = vsub.s32 1, %v117
    %v119 = vrot.slane %v107, %v118
    %vm122 = vcmask 261120
    %v124 = vsel %vm122, %v109, 0
    %v127 = vsel %vm122, %v110, 0
    %129 = vmatprep.subr.mxu0 %v84
    %130 = vmatpush1.msra.mxu0 %v83
    %131 = vmatprep.subr.mxu0 %v86
    %132 = vmatpush1.msra.mxu0 %v85
    %133 = vmatprep.subr.mxu0 %v88
    %134 = vmatpush1.msra.mxu0 %v87
    %135 = vmatprep.subr.mxu0 %v90
    %136 = vmatpush1.msra.mxu0 %v89
    %137 = vmatprep.subr.mxu0 0.0
    %138 = vmatpush1.msra.mxu0 0.0
    %139 = vmatprep.subr.mxu0 0.0
    %140 = vmatpush1.msra.mxu0 0.0
    %141 = vmatprep.subr.mxu0 0.0
    %142 = vmatpush1.msra.mxu0 0.0
    %143 = vmatprep.subr.mxu0 0.0
    %144 = vmatpush1.msra.mxu0 0.0
    %145 = vmatprep.subr.mxu0 0.0
    %146 = vmatpush1.msra.mxu0 0.0
    %147 = vmatprep.subr.mxu0 0.0
    %148 = vmatpush1.msra.mxu0 0.0
    %149 = vmatprep.subr.mxu0 0.0
    %150 = vmatpush1.msra.mxu0 0.0
    %151 = vmatprep.subr.mxu0 0.0
    %152 = vmatpush1.msra.mxu0 0.0
    %153 = vmatprep.subr.mxu0 0.0
    %154 = vmatpush1.msra.mxu0 0.0
    %155 = vmatprep.subr.mxu0 0.0
    %156 = vmatpush1.msra.mxu0 0.0
    %157 = vmatprep.subr.mxu0 0.0
    %158 = vmatpush1.msra.mxu0 0.0
    %159 = vmatprep.subr.mxu0 0.0
    %160 = vmatpush1.msra.mxu0 0.0
    %161 = vmatprep.subr.mxu0 0.0
    %162 = vmatpush1.msra.mxu0 0.0
    %163 = vmatprep.subr.mxu0 0.0
    %164 = vmatpush1.msra.mxu0 0.0
    %165 = vmatprep.subr.mxu0 0.0
    %166 = vmatpush1.msra.mxu0 0.0
    %167 = vmatprep.subr.mxu0 0.0
    %168 = vmatpush1.msra.mxu0 0.0
    %169 = vmatprep.subr.mxu0 0.0
    %170 = vmatpush1.msra.mxu0 0.0
    %171 = vmatprep.subr.mxu0 0.0
    %172 = vmatpush1.msra.mxu0 0.0
    %173 = vmatprep.subr.mxu0 0.0
    %174 = vmatpush1.msra.mxu0 0.0
    %175 = vmatprep.subr.mxu0 0.0
    %176 = vmatpush1.msra.mxu0 0.0
    %177 = vmatprep.subr.mxu0 0.0
    %178 = vmatpush1.msra.mxu0 0.0
    %179 = vmatprep.subr.mxu0 0.0
    %180 = vmatpush1.msra.mxu0 0.0
    %181 = vmatprep.subr.mxu0 0.0
    %182 = vmatpush1.msra.mxu0 0.0
    %183 = vmatprep.subr.mxu0 0.0
    %184 = vmatpush1.msra.mxu0 0.0
    %185 = vmatprep.subr.mxu0 0.0
    %186 = vmatpush1.msra.mxu0 0.0
    %187 = vmatprep.subr.mxu0 0.0
    %188 = vmatpush1.msra.mxu0 0.0
    %189 = vmatprep.subr.mxu0 0.0
    %190 = vmatpush1.msra.mxu0 0.0
    %191 = vmatprep.subr.mxu0 0.0
    %192 = vmatpush1.msra.mxu0 0.0
    %193 = vmatprep.mubr.f32.mxu0 0.0
    %194 = vmatmul.mubr.f32.gmra.mrb[0].mxu0 %v124
    %v195 = vpop.f32.mrb[0].mxu0
    %v196 = vadd.f32 %v115, %v195
    %v197 = vpop.f32.mrb[0].mxu0
    %v198 = vadd.f32 %v119, %v197
    %199 = vmatprep.mubr.f32.mxu0 0.0
    %200 = vmatmul.mubr.f32.gmra.mrb[0].mxu0 %v127
    %v201 = vpop.f32.mrb[0].mxu0
    %v202 = vadd.f32 %v115, %v201
    %v203 = vpop.f32.mrb[0].mxu0
    %v204 = vadd.f32 %v119, %v203
    %205 = vdwg.mxu0
    %v207 = vlaneseq
    %v208 = vshrl.u32 %v207, 7
    %v209 = vsub.s32 0, %v208
    %v210 = vrot.slane %v108, %v209
    %v211 = vlaneseq
    %v212 = vshrl.u32 %v211, 7
    %v213 = vsub.s32 1, %v212
    %v214 = vrot.slane %v108, %v213
    %vm217 = vcmask 523264
    %v219 = vsel %vm217, 0.0, 0
    %221 = vmatprep.subr.mxu0 %v92
    %222 = vmatpush1.msra.mxu0 %v91
    %223 = vmatprep.subr.mxu0 %v94
    %224 = vmatpush1.msra.mxu0 %v93
    %225 = vmatprep.subr.mxu0 %v96
    %226 = vmatpush1.msra.mxu0 %v95
    %227 = vmatprep.subr.mxu0 %v98
    %228 = vmatpush1.msra.mxu0 %v97
    %229 = vmatprep.subr.mxu0 %v100
    %230 = vmatpush1.msra.mxu0 %v99
    %231 = vmatprep.subr.mxu0 %v102
    %232 = vmatpush1.msra.mxu0 %v101
    %233 = vmatprep.subr.mxu0 %v104
    %234 = vmatpush1.msra.mxu0 %v103
    %235 = vmatprep.subr.mxu0 %v106
    %236 = vmatpush1.msra.mxu0 %v105
    %237 = vmatprep.subr.mxu0 0.0
    %238 = vmatpush1.msra.mxu0 0.0
    %239 = vmatprep.subr.mxu0 0.0
    %240 = vmatpush1.msra.mxu0 0.0
    %241 = vmatprep.subr.mxu0 0.0
    %242 = vmatpush1.msra.mxu0 0.0
    %243 = vmatprep.subr.mxu0 0.0
    %244 = vmatpush1.msra.mxu0 0.0
    %245 = vmatprep.subr.mxu0 0.0
    %246 = vmatpush1.msra.mxu0 0.0
    %247 = vmatprep.subr.mxu0 0.0
    %248 = vmatpush1.msra.mxu0 0.0
    %249 = vmatprep.subr.mxu0 0.0
    %250 = vmatpush1.msra.mxu0 0.0
    %251 = vmatprep.subr.mxu0 0.0
    %252 = vmatpush1.msra.mxu0 0.0
    %253 = vmatprep.subr.mxu0 0.0
    %254 = vmatpush1.msra.mxu0 0.0
    %255 = vmatprep.subr.mxu0 0.0
    %256 = vmatpush1.msra.mxu0 0.0
    %257 = vmatprep.subr.mxu0 0.0
    %258 = vmatpush1.msra.mxu0 0.0
    %259 = vmatprep.subr.mxu0 0.0
    %260 = vmatpush1.msra.mxu0 0.0
    %261 = vmatprep.subr.mxu0 0.0
    %262 = vmatpush1.msra.mxu0 0.0
    %263 = vmatprep.subr.mxu0 0.0
    %264 = vmatpush1.msra.mxu0 0.0
    %265 = vmatprep.subr.mxu0 0.0
    %266 = vmatpush1.msra.mxu0 0.0
    %267 = vmatprep.subr.mxu0 0.0
    %268 = vmatpush1.msra.mxu0 0.0
    %269 = vmatprep.subr.mxu0 0.0
    %270 = vmatpush1.msra.mxu0 0.0
    %271 = vmatprep.subr.mxu0 0.0
    %272 = vmatpush1.msra.mxu0 0.0
    %273 = vmatprep.subr.mxu0 0.0
    %274 = vmatpush1.msra.mxu0 0.0
    %275 = vmatprep.subr.mxu0 0.0
    %276 = vmatpush1.msra.mxu0 0.0
    %277 = vmatprep.subr.mxu0 0.0
    %278 = vmatpush1.msra.mxu0 0.0
    %279 = vmatprep.subr.mxu0 0.0
    %280 = vmatpush1.msra.mxu0 0.0
    %281 = vmatprep.subr.mxu0 0.0
    %282 = vmatpush1.msra.mxu0 0.0
    %283 = vmatprep.subr.mxu0 0.0
    %284 = vmatpush1.msra.mxu0 0.0
    %285 = vmatprep.mubr.f32.mxu0 0.0
    %286 = vmatmul.mubr.f32.gmra.mrb[0].mxu0 %v219
    %v287 = vpop.f32.mrb[0].mxu0
    %v288 = vadd.f32 %v210, %v287
    %v289 = vpop.f32.mrb[0].mxu0
    %v290 = vadd.f32 %v214, %v289
    %291 = vdwg.mxu0
    %v292 = vadd.f32 %v196, %v288
    %v293 = vxor.u32 %v292, 2147483648
    %v294 = vmul.f32 %v293, 1.442695
    %v295 = vpow.pop %v294
    %v296 = vadd.f32 %v295, 1.0
    %v297 = vrcp.pop %v296
    %v298 = vmul.f32 1.0, %v297
    %300 = vrot.lane.b32.xlu0 %v288, 64
    %v301 = vpop.permute.xlu0 %300
    %v303 = vmul.f32 %v298, %v301
    %305 = vrot.lane.b32.xlu0 %v303, 64
    %v306 = vpop.permute.xlu0 %305
    %v308 = vadd.f32 %v196, %v306
    %v309 = vtanh.pop %v308
    %v310 = vsub.f32 1.0, %v298
    %312 = vrot.lane.b32.xlu0 %v309, 96
    %v313 = vpop.permute.xlu0 %312
    %v315 = vmul.f32 %v310, %v313
    %v316 = vmul.f32 %v298, 0.0
    %v317 = vadd.f32 %v315, %v316
    %v318 = vrot.slane %v288, 2
    %v320 = vadd.f32 %v202, %v318
    %v321 = vxor.u32 %v320, 2147483648
    %v322 = vmul.f32 %v321, 1.442695
    %v323 = vpow.pop %v322
    %v324 = vadd.f32 %v323, 1.0
    %v325 = vrcp.pop %v324
    %v326 = vmul.f32 1.0, %v325
    %v328 = vrot.slane %v290, 2
    %v330 = vadd.f32 %v204, %v328
    %v331 = vxor.u32 %v330, 2147483648
    %v332 = vmul.f32 %v331, 1.442695
    %v333 = vpow.pop %v332
    %v334 = vadd.f32 %v333, 1.0
    %v335 = vrcp.pop %v334
    %v336 = vmul.f32 1.0, %v335
    %337 = vrot.lane.b32.xlu0 %v328, 64
    %v338 = vpop.permute.xlu0 %337
    %v340 = vmul.f32 %v326, %v338
    %342 = vrot.lane.b32.xlu0 %v340, 64
    %v343 = vpop.permute.xlu0 %342
    %v345 = vadd.f32 %v204, %v343
    %v346 = vtanh.pop %v345
    %v347 = vsub.f32 1.0, %v336
    %349 = vrot.lane.b32.xlu0 %v346, 96
    %v350 = vpop.permute.xlu0 %349
    %v352 = vmul.f32 %v347, %v350
    %v353 = vmul.f32 %v336, 0.0
    %v354 = vadd.f32 %v352, %v353
    %356 = vrot.lane.b32.xlu0 %v317, 96
    %v357 = vpop.permute.xlu0 %356
    %vm359 = vcmask 254976
    %360 = vst.msk [vmem:[#allocation2] sm:$0x3] %vm359, %v357
    %362 = vrot.lane.b32.xlu0 %v354, 32
    %v363 = vpop.permute.xlu0 %362
    %vm365 = vcmask 523526
    %366 = vst.msk [vmem:[#allocation2 + $0x8] sm:$0xc0] %vm365, %v363
    %v367 = vrot.slane %v354, 6
    %368 = vrot.lane.b32.xlu0 %v367, 32
    %v369 = vpop.permute.xlu0 %368
    %v371 = vsel %vm122, %v357, %v369
    %v373 = vsel %vm217, %v371, 0
    %375 = vmatprep.subr.mxu0 %v92
    %376 = vmatpush1.msra.mxu0 %v91
    %377 = vmatprep.subr.mxu0 %v94
    %378 = vmatpush1.msra.mxu0 %v93
    %379 = vmatprep.subr.mxu0 %v96
    %380 = vmatpush1.msra.mxu0 %v95
    %381 = vmatprep.subr.mxu0 %v98
    %382 = vmatpush1.msra.mxu0 %v97
    %383 = vmatprep.subr.mxu0 %v100
    %384 = vmatpush1.msra.mxu0 %v99
    %385 = vmatprep.subr.mxu0 %v102
    %386 = vmatpush1.msra.mxu0 %v101
    %387 = vmatprep.subr.mxu0 %v104
    %388 = vmatpush1.msra.mxu0 %v103
    %389 = vmatprep.subr.mxu0 %v106
    %390 = vmatpush1.msra.mxu0 %v105
    %391 = vmatprep.subr.mxu0 0.0
    %392 = vmatpush1.msra.mxu0 0.0
    %393 = vmatprep.subr.mxu0 0.0
    %394 = vmatpush1.msra.mxu0 0.0
    %395 = vmatprep.subr.mxu0 0.0
    %396 = vmatpush1.msra.mxu0 0.0
    %397 = vmatprep.subr.mxu0 0.0
    %398 = vmatpush1.msra.mxu0 0.0
    %399 = vmatprep.subr.mxu0 0.0
    %400 = vmatpush1.msra.mxu0 0.0
    %401 = vmatprep.subr.mxu0 0.0
    %402 = vmatpush1.msra.mxu0 0.0
    %403 = vmatprep.subr.mxu0 0.0
    %404 = vmatpush1.msra.mxu0 0.0
    %405 = vmatprep.subr.mxu0 0.0
    %406 = vmatpush1.msra.mxu0 0.0
    %407 = vmatprep.subr.mxu0 0.0
    %408 = vmatpush1.msra.mxu0 0.0
    %409 = vmatprep.subr.mxu0 0.0
    %410 = vmatpush1.msra.mxu0 0.0
    %411 = vmatprep.subr.mxu0 0.0
    %412 = vmatpush1.msra.mxu0 0.0
    %413 = vmatprep.subr.mxu0 0.0
    %414 = vmatpush1.msra.mxu0 0.0
    %415 = vmatprep.subr.mxu0 0.0
    %416 = vmatpush1.msra.mxu0 0.0
    %417 = vmatprep.subr.mxu0 0.0
    %418 = vmatpush1.msra.mxu0 0.0
    %419 = vmatprep.subr.mxu0 0.0
    %420 = vmatpush1.msra.mxu0 0.0
    %421 = vmatprep.subr.mxu0 0.0
    %422 = vmatpush1.msra.mxu0 0.0
    %423 = vmatprep.subr.mxu0 0.0
    %424 = vmatpush1.msra.mxu0 0.0
    %425 = vmatprep.subr.mxu0 0.0
    %426 = vmatpush1.msra.mxu0 0.0
    %427 = vmatprep.subr.mxu0 0.0
    %428 = vmatpush1.msra.mxu0 0.0
    %429 = vmatprep.subr.mxu0 0.0
    %430 = vmatpush1.msra.mxu0 0.0
    %431 = vmatprep.subr.mxu0 0.0
    %432 = vmatpush1.msra.mxu0 0.0
    %433 = vmatprep.subr.mxu0 0.0
    %434 = vmatpush1.msra.mxu0 0.0
    %435 = vmatprep.subr.mxu0 0.0
    %436 = vmatpush1.msra.mxu0 0.0
    %437 = vmatprep.subr.mxu0 0.0
    %438 = vmatpush1.msra.mxu0 0.0
    %439 = vmatprep.mubr.f32.mxu0 0.0
    %440 = vmatmul.mubr.f32.gmra.mrb[0].mxu0 %v373
    %v441 = vpop.f32.mrb[0].mxu0
    %v442 = vadd.f32 %v210, %v441
    %v443 = vpop.f32.mrb[0].mxu0
    %v444 = vadd.f32 %v214, %v443
    %445 = vdwg.mxu0
    %v447 = vrot.slane %v442, 6
    %v449 = vadd.f32 %v196, %v447
    %v450 = vxor.u32 %v449, 2147483648
    %v451 = vmul.f32 %v450, 1.442695
    %v452 = vpow.pop %v451
    %v453 = vadd.f32 %v452, 1.0
    %v454 = vrcp.pop %v453
    %v455 = vmul.f32 1.0, %v454
    %456 = vrot.lane.b32.xlu0 %v447, 64
    %v457 = vpop.permute.xlu0 %456
    %v459 = vmul.f32 %v455, %v457
    %461 = vrot.lane.b32.xlu0 %v459, 64
    %v462 = vpop.permute.xlu0 %461
    %v464 = vadd.f32 %v196, %v462
    %v465 = vtanh.pop %v464
    %v466 = vsub.f32 1.0, %v455
    %468 = vrot.lane.b32.xlu0 %v465, 96
    %v469 = vpop.permute.xlu0 %468
    %v471 = vmul.f32 %v466, %v469
    %v472 = vrot.slane %v371, 6
    %473 = vrot.lane.b32.xlu0 %v472, 32
    %v474 = vpop.permute.xlu0 %473
    %v476 = vmul.f32 %v455, %v474
    %v477 = vadd.f32 %v471, %v476
    %v478 = vrot.slane %v442, 4
    %v480 = vadd.f32 %v202, %v478
    %v481 = vxor.u32 %v480, 2147483648
    %v482 = vmul.f32 %v481, 1.442695
    %v483 = vpow.pop %v482
    %v484 = vadd.f32 %v483, 1.0
    %v485 = vrcp.pop %v484
    %v486 = vmul.f32 1.0, %v485
    %v488 = vrot.slane %v444, 4
    %v490 = vadd.f32 %v204, %v488
    %v491 = vxor.u32 %v490, 2147483648
    %v492 = vmul.f32 %v491, 1.442695
    %v493 = vpow.pop %v492
    %v494 = vadd.f32 %v493, 1.0
    %v495 = vrcp.pop %v494
    %v496 = vmul.f32 1.0, %v495
    %497 = vrot.lane.b32.xlu0 %v488, 64
    %v498 = vpop.permute.xlu0 %497
    %v500 = vmul.f32 %v486, %v498
    %502 = vrot.lane.b32.xlu0 %v500, 64
    %v503 = vpop.permute.xlu0 %502
    %v505 = vadd.f32 %v204, %v503
    %v506 = vtanh.pop %v505
    %v507 = vsub.f32 1.0, %v496
    %509 = vrot.lane.b32.xlu0 %v506, 96
    %v510 = vpop.permute.xlu0 %509
    %v512 = vmul.f32 %v507, %v510
    %v513 = vrot.slane %v371, 4
    %514 = vrot.lane.b32.xlu0 %v513, 96
    %v515 = vpop.permute.xlu0 %514
    %v517 = vmul.f32 %v496, %v515
    %v518 = vadd.f32 %v512, %v517
    %520 = vrot.lane.b32.xlu0 %v477, 96
    %v521 = vpop.permute.xlu0 %520
    %vm523 = vcmask 257026
    %524 = vst.msk [vmem:[#allocation2] sm:$0xc] %vm523, %v521
    %526 = vrot.lane.b32.xlu0 %v518, 32
    %v527 = vpop.permute.xlu0 %526
    %vm529 = vcmask 521476
    %530 = vst.msk [vmem:[#allocation2 + $0x8] sm:$0x30] %vm529, %v527
    %v531 = vrot.slane %v518, 2
    %532 = vrot.lane.b32.xlu0 %v531, 32
    %v533 = vpop.permute.xlu0 %532
    %v535 = vsel %vm122, %v521, %v533
    %v537 = vrot.slane %v535, 2
    %v538 = vsel %vm217, %v537, 0
    %540 = vmatprep.subr.mxu0 %v92
    %541 = vmatpush1.msra.mxu0 %v91
    %542 = vmatprep.subr.mxu0 %v94
    %543 = vmatpush1.msra.mxu0 %v93
    %544 = vmatprep.subr.mxu0 %v96
    %545 = vmatpush1.msra.mxu0 %v95
    %546 = vmatprep.subr.mxu0 %v98
    %547 = vmatpush1.msra.mxu0 %v97
    %548 = vmatprep.subr.mxu0 %v100
    %549 = vmatpush1.msra.mxu0 %v99
    %550 = vmatprep.subr.mxu0 %v102
    %551 = vmatpush1.msra.mxu0 %v101
    %552 = vmatprep.subr.mxu0 %v104
    %553 = vmatpush1.msra.mxu0 %v103
    %554 = vmatprep.subr.mxu0 %v106
    %555 = vmatpush1.msra.mxu0 %v105
    %556 = vmatprep.subr.mxu0 0.0
    %557 = vmatpush1.msra.mxu0 0.0
    %558 = vmatprep.subr.mxu0 0.0
    %559 = vmatpush1.msra.mxu0 0.0
    %560 = vmatprep.subr.mxu0 0.0
    %561 = vmatpush1.msra.mxu0 0.0
    %562 = vmatprep.subr.mxu0 0.0
    %563 = vmatpush1.msra.mxu0 0.0
    %564 = vmatprep.subr.mxu0 0.0
    %565 = vmatpush1.msra.mxu0 0.0
    %566 = vmatprep.subr.mxu0 0.0
    %567 = vmatpush1.msra.mxu0 0.0
    %568 = vmatprep.subr.mxu0 0.0
    %569 = vmatpush1.msra.mxu0 0.0
    %570 = vmatprep.subr.mxu0 0.0
    %571 = vmatpush1.msra.mxu0 0.0
    %572 = vmatprep.subr.mxu0 0.0
    %573 = vmatpush1.msra.mxu0 0.0
    %574 = vmatprep.subr.mxu0 0.0
    %575 = vmatpush1.msra.mxu0 0.0
    %576 = vmatprep.subr.mxu0 0.0
    %577 = vmatpush1.msra.mxu0 0.0
    %578 = vmatprep.subr.mxu0 0.0
    %579 = vmatpush1.msra.mxu0 0.0
    %580 = vmatprep.subr.mxu0 0.0
    %581 = vmatpush1.msra.mxu0 0.0
    %582 = vmatprep.subr.mxu0 0.0
    %583 = vmatpush1.msra.mxu0 0.0
    %584 = vmatprep.subr.mxu0 0.0
    %585 = vmatpush1.msra.mxu0 0.0
    %586 = vmatprep.subr.mxu0 0.0
    %587 = vmatpush1.msra.mxu0 0.0
    %588 = vmatprep.subr.mxu0 0.0
    %589 = vmatpush1.msra.mxu0 0.0
    %590 = vmatprep.subr.mxu0 0.0
    %591 = vmatpush1.msra.mxu0 0.0
    %592 = vmatprep.subr.mxu0 0.0
    %593 = vmatpush1.msra.mxu0 0.0
    %594 = vmatprep.subr.mxu0 0.0
    %595 = vmatpush1.msra.mxu0 0.0
    %596 = vmatprep.subr.mxu0 0.0
    %597 = vmatpush1.msra.mxu0 0.0
    %598 = vmatprep.subr.mxu0 0.0
    %599 = vmatpush1.msra.mxu0 0.0
    %600 = vmatprep.subr.mxu0 0.0
    %601 = vmatpush1.msra.mxu0 0.0
    %602 = vmatprep.subr.mxu0 0.0
    %603 = vmatpush1.msra.mxu0 0.0
    %604 = vmatprep.mubr.f32.mxu0 0.0
    %605 = vmatmul.mubr.f32.gmra.mrb[0].mxu0 %v538
    %v606 = vpop.f32.mrb[0].mxu0
    %v607 = vadd.f32 %v210, %v606
    %v608 = vpop.f32.mrb[0].mxu0
    %v609 = vadd.f32 %v214, %v608
    %610 = vdwg.mxu0
    %v612 = vrot.slane %v607, 4
    %v614 = vadd.f32 %v196, %v612
    %v615 = vxor.u32 %v614, 2147483648
    %v616 = vmul.f32 %v615, 1.442695
    %v617 = vpow.pop %v616
    %v618 = vadd.f32 %v617, 1.0
    %v619 = vrcp.pop %v618
    %v620 = vmul.f32 1.0, %v619
    %621 = vrot.lane.b32.xlu0 %v612, 64
    %v622 = vpop.permute.xlu0 %621
    %v624 = vmul.f32 %v620, %v622
    %626 = vrot.lane.b32.xlu0 %v624, 64
    %v627 = vpop.permute.xlu0 %626
    %v629 = vadd.f32 %v196, %v627
    %v630 = vtanh.pop %v629
    %v631 = vsub.f32 1.0, %v620
    %633 = vrot.lane.b32.xlu0 %v630, 96
    %v634 = vpop.permute.xlu0 %633
    %v636 = vmul.f32 %v631, %v634
    %v637 = vrot.slane %v535, 6
    %638 = vrot.lane.b32.xlu0 %v637, 32
    %v639 = vpop.permute.xlu0 %638
    %v641 = vmul.f32 %v620, %v639
    %v642 = vadd.f32 %v636, %v641
    %v643 = vrot.slane %v607, 6
    %v645 = vadd.f32 %v202, %v643
    %v646 = vxor.u32 %v645, 2147483648
    %v647 = vmul.f32 %v646, 1.442695
    %v648 = vpow.pop %v647
    %v649 = vadd.f32 %v648, 1.0
    %v650 = vrcp.pop %v649
    %v651 = vmul.f32 1.0, %v650
    %v653 = vrot.slane %v609, 6
    %v655 = vadd.f32 %v204, %v653
    %v656 = vxor.u32 %v655, 2147483648
    %v657 = vmul.f32 %v656, 1.442695
    %v658 = vpow.pop %v657
    %v659 = vadd.f32 %v658, 1.0
    %v660 = vrcp.pop %v659
    %v661 = vmul.f32 1.0, %v660
    %662 = vrot.lane.b32.xlu0 %v653, 64
    %v663 = vpop.permute.xlu0 %662
    %v665 = vmul.f32 %v651, %v663
    %667 = vrot.lane.b32.xlu0 %v665, 64
    %v668 = vpop.permute.xlu0 %667
    %v670 = vadd.f32 %v204, %v668
    %v671 = vtanh.pop %v670
    %v672 = vsub.f32 1.0, %v661
    %674 = vrot.lane.b32.xlu0 %v671, 96
    %v675 = vpop.permute.xlu0 %674
    %v677 = vmul.f32 %v672, %v675
    %678 = vrot.lane.b32.xlu0 %v535, 96
    %v679 = vpop.permute.xlu0 %678
    %v681 = vmul.f32 %v661, %v679
    %v682 = vadd.f32 %v677, %v681
    %684 = vrot.lane.b32.xlu0 %v642, 96
    %v685 = vpop.permute.xlu0 %684
    %vm687 = vcmask 259076
    %688 = vst.msk [vmem:[#allocation2] sm:$0x30] %vm687, %v685
    %690 = vrot.lane.b32.xlu0 %v682, 32
    %v691 = vpop.permute.xlu0 %690
    %vm693 = vcmask 519426
    %694 = vst.msk [vmem:[#allocation2 + $0x8] sm:$0xc] %vm693, %v691
    %v695 = vrot.slane %v682, 6
    %696 = vrot.lane.b32.xlu0 %v695, 32
    %v697 = vpop.permute.xlu0 %696
    %v699 = vsel %vm122, %v685, %v697
    %v701 = vrot.slane %v699, 4
    %v702 = vsel %vm217, %v701, 0
    %704 = vmatprep.subr.mxu0 %v92
    %705 = vmatpush1.msra.mxu0 %v91
    %706 = vmatprep.subr.mxu0 %v94
    %707 = vmatpush1.msra.mxu0 %v93
    %708 = vmatprep.subr.mxu0 %v96
    %709 = vmatpush1.msra.mxu0 %v95
    %710 = vmatprep.subr.mxu0 %v98
    %711 = vmatpush1.msra.mxu0 %v97
    %712 = vmatprep.subr.mxu0 %v100
    %713 = vmatpush1.msra.mxu0 %v99
    %714 = vmatprep.subr.mxu0 %v102
    %715 = vmatpush1.msra.mxu0 %v101
    %716 = vmatprep.subr.mxu0 %v104
    %717 = vmatpush1.msra.mxu0 %v103
    %718 = vmatprep.subr.mxu0 %v106
    %719 = vmatpush1.msra.mxu0 %v105
    %720 = vmatprep.subr.mxu0 0.0
    %721 = vmatpush1.msra.mxu0 0.0
    %722 = vmatprep.subr.mxu0 0.0
    %723 = vmatpush1.msra.mxu0 0.0
    %724 = vmatprep.subr.mxu0 0.0
    %725 = vmatpush1.msra.mxu0 0.0
    %726 = vmatprep.subr.mxu0 0.0
    %727 = vmatpush1.msra.mxu0 0.0
    %728 = vmatprep.subr.mxu0 0.0
    %729 = vmatpush1.msra.mxu0 0.0
    %730 = vmatprep.subr.mxu0 0.0
    %731 = vmatpush1.msra.mxu0 0.0
    %732 = vmatprep.subr.mxu0 0.0
    %733 = vmatpush1.msra.mxu0 0.0
    %734 = vmatprep.subr.mxu0 0.0
    %735 = vmatpush1.msra.mxu0 0.0
    %736 = vmatprep.subr.mxu0 0.0
    %737 = vmatpush1.msra.mxu0 0.0
    %738 = vmatprep.subr.mxu0 0.0
    %739 = vmatpush1.msra.mxu0 0.0
    %740 = vmatprep.subr.mxu0 0.0
    %741 = vmatpush1.msra.mxu0 0.0
    %742 = vmatprep.subr.mxu0 0.0
    %743 = vmatpush1.msra.mxu0 0.0
    %744 = vmatprep.subr.mxu0 0.0
    %745 = vmatpush1.msra.mxu0 0.0
    %746 = vmatprep.subr.mxu0 0.0
    %747 = vmatpush1.msra.mxu0 0.0
    %748 = vmatprep.subr.mxu0 0.0
    %749 = vmatpush1.msra.mxu0 0.0
    %750 = vmatprep.subr.mxu0 0.0
    %751 = vmatpush1.msra.mxu0 0.0
    %752 = vmatprep.subr.mxu0 0.0
    %753 = vmatpush1.msra.mxu0 0.0
    %754 = vmatprep.subr.mxu0 0.0
    %755 = vmatpush1.msra.mxu0 0.0
    %756 = vmatprep.subr.mxu0 0.0
    %757 = vmatpush1.msra.mxu0 0.0
    %758 = vmatprep.subr.mxu0 0.0
    %759 = vmatpush1.msra.mxu0 0.0
    %760 = vmatprep.subr.mxu0 0.0
    %761 = vmatpush1.msra.mxu0 0.0
    %762 = vmatprep.subr.mxu0 0.0
    %763 = vmatpush1.msra.mxu0 0.0
    %764 = vmatprep.subr.mxu0 0.0
    %765 = vmatpush1.msra.mxu0 0.0
    %766 = vmatprep.subr.mxu0 0.0
    %767 = vmatpush1.msra.mxu0 0.0
    %768 = vmatprep.mubr.f32.mxu0 0.0
    %769 = vmatmul.mubr.f32.gmra.mrb[0].mxu0 %v702
    %v770 = vpop.f32.mrb[0].mxu0
    %v771 = vadd.f32 %v210, %v770
    %v772 = vpop.f32.mrb[0].mxu0
    %v773 = vadd.f32 %v214, %v772
    %774 = vdwg.mxu0
    %v776 = vrot.slane %v771, 2
    %v778 = vadd.f32 %v196, %v776
    %v779 = vxor.u32 %v778, 2147483648
    %v780 = vmul.f32 %v779, 1.442695
    %v781 = vpow.pop %v780
    %v782 = vadd.f32 %v781, 1.0
    %v783 = vrcp.pop %v782
    %v784 = vmul.f32 1.0, %v783
    %785 = vrot.lane.b32.xlu0 %v776, 64
    %v786 = vpop.permute.xlu0 %785
    %v788 = vmul.f32 %v784, %v786
    %790 = vrot.lane.b32.xlu0 %v788, 64
    %v791 = vpop.permute.xlu0 %790
    %v793 = vadd.f32 %v196, %v791
    %v794 = vtanh.pop %v793
    %v795 = vsub.f32 1.0, %v784
    %797 = vrot.lane.b32.xlu0 %v794, 96
    %v798 = vpop.permute.xlu0 %797
    %v800 = vmul.f32 %v795, %v798
    %v801 = vrot.slane %v699, 6
    %802 = vrot.lane.b32.xlu0 %v801, 32
    %v803 = vpop.permute.xlu0 %802
    %v805 = vmul.f32 %v784, %v803
    %v806 = vadd.f32 %v800, %v805
    %v807 = vadd.f32 %v202, %v771
    %v808 = vxor.u32 %v807, 2147483648
    %v809 = vmul.f32 %v808, 1.442695
    %v810 = vpow.pop %v809
    %v811 = vadd.f32 %v810, 1.0
    %v812 = vrcp.pop %v811
    %v813 = vmul.f32 1.0, %v812
    %v814 = vadd.f32 %v204, %v773
    %v815 = vxor.u32 %v814, 2147483648
    %v816 = vmul.f32 %v815, 1.442695
    %v817 = vpow.pop %v816
    %v818 = vadd.f32 %v817, 1.0
    %v819 = vrcp.pop %v818
    %v820 = vmul.f32 1.0, %v819
    %822 = vrot.lane.b32.xlu0 %v773, 64
    %v823 = vpop.permute.xlu0 %822
    %v825 = vmul.f32 %v813, %v823
    %827 = vrot.lane.b32.xlu0 %v825, 64
    %v828 = vpop.permute.xlu0 %827
    %v830 = vadd.f32 %v204, %v828
    %v831 = vtanh.pop %v830
    %v832 = vsub.f32 1.0, %v820
    %834 = vrot.lane.b32.xlu0 %v831, 96
    %v835 = vpop.permute.xlu0 %834
    %v837 = vmul.f32 %v832, %v835
    %838 = vrot.lane.b32.xlu0 %v701, 96
    %v839 = vpop.permute.xlu0 %838
    %v841 = vmul.f32 %v820, %v839
    %v842 = vadd.f32 %v837, %v841
    %844 = vrot.lane.b32.xlu0 %v806, 96
    %v845 = vpop.permute.xlu0 %844
    %vm847 = vcmask 261126
    %848 = vst.msk [vmem:[#allocation2] sm:$0xc0] %vm847, %v845
    %850 = vrot.lane.b32.xlu0 %v842, 32
    %v851 = vpop.permute.xlu0 %850
    %vm853 = vcmask 517376
    %854 = vst.msk [vmem:[#allocation2 + $0x8] sm:$0x3] %vm853, %v851
    %v855 = vrot.slane %v842, 2
    %856 = vrot.lane.b32.xlu0 %v855, 32
    %v857 = vpop.permute.xlu0 %856
    %v859 = vsel %vm122, %v845, %v857
    %v861 = vrot.slane %v859, 6
    %v862 = vsel %vm217, %v861, 0
    %864 = vmatprep.subr.mxu0 %v92
    %865 = vmatpush1.msra.mxu0 %v91
    %866 = vmatprep.subr.mxu0 %v94
    %867 = vmatpush1.msra.mxu0 %v93
    %868 = vmatprep.subr.mxu0 %v96
    %869 = vmatpush1.msra.mxu0 %v95
    %870 = vmatprep.subr.mxu0 %v98
    %871 = vmatpush1.msra.mxu0 %v97
    %872 = vmatprep.subr.mxu0 %v100
    %873 = vmatpush1.msra.mxu0 %v99
    %874 = vmatprep.subr.mxu0 %v102
    %875 = vmatpush1.msra.mxu0 %v101
    %876 = vmatprep.subr.mxu0 %v104
    %877 = vmatpush1.msra.mxu0 %v103
    %878 = vmatprep.subr.mxu0 %v106
    %879 = vmatpush1.msra.mxu0 %v105
    %880 = vmatprep.subr.mxu0 0.0
    %881 = vmatpush1.msra.mxu0 0.0
    %882 = vmatprep.subr.mxu0 0.0
    %883 = vmatpush1.msra.mxu0 0.0
    %884 = vmatprep.subr.mxu0 0.0
    %885 = vmatpush1.msra.mxu0 0.0
    %886 = vmatprep.subr.mxu0 0.0
    %887 = vmatpush1.msra.mxu0 0.0
    %888 = vmatprep.subr.mxu0 0.0
    %889 = vmatpush1.msra.mxu0 0.0
    %890 = vmatprep.subr.mxu0 0.0
    %891 = vmatpush1.msra.mxu0 0.0
    %892 = vmatprep.subr.mxu0 0.0
    %893 = vmatpush1.msra.mxu0 0.0
    %894 = vmatprep.subr.mxu0 0.0
    %895 = vmatpush1.msra.mxu0 0.0
    %896 = vmatprep.subr.mxu0 0.0
    %897 = vmatpush1.msra.mxu0 0.0
    %898 = vmatprep.subr.mxu0 0.0
    %899 = vmatpush1.msra.mxu0 0.0
    %900 = vmatprep.subr.mxu0 0.0
    %901 = vmatpush1.msra.mxu0 0.0
    %902 = vmatprep.subr.mxu0 0.0
    %903 = vmatpush1.msra.mxu0 0.0
    %904 = vmatprep.subr.mxu0 0.0
    %905 = vmatpush1.msra.mxu0 0.0
    %906 = vmatprep.subr.mxu0 0.0
    %907 = vmatpush1.msra.mxu0 0.0
    %908 = vmatprep.subr.mxu0 0.0
    %909 = vmatpush1.msra.mxu0 0.0
    %910 = vmatprep.subr.mxu0 0.0
    %911 = vmatpush1.msra.mxu0 0.0
    %912 = vmatprep.subr.mxu0 0.0
    %913 = vmatpush1.msra.mxu0 0.0
    %914 = vmatprep.subr.mxu0 0.0
    %915 = vmatpush1.msra.mxu0 0.0
    %916 = vmatprep.subr.mxu0 0.0
    %917 = vmatpush1.msra.mxu0 0.0
    %918 = vmatprep.subr.mxu0 0.0
    %919 = vmatpush1.msra.mxu0 0.0
    %920 = vmatprep.subr.mxu0 0.0
    %921 = vmatpush1.msra.mxu0 0.0
    %922 = vmatprep.subr.mxu0 0.0
    %923 = vmatpush1.msra.mxu0 0.0
    %924 = vmatprep.subr.mxu0 0.0
    %925 = vmatpush1.msra.mxu0 0.0
    %926 = vmatprep.subr.mxu0 0.0
    %927 = vmatpush1.msra.mxu0 0.0
    %928 = vmatprep.mubr.f32.mxu0 0.0
    %929 = vmatmul.mubr.f32.gmra.mrb[0].mxu0 %v862
    %v930 = vpop.f32.mrb[0].mxu0
    %v931 = vadd.f32 %v210, %v930
    %v932 = vpop.f32.mrb[0].mxu0
    %v933 = vadd.f32 %v214, %v932
    %934 = vdwg.mxu0
    %v935 = vadd.f32 %v202, %v931
    %v936 = vxor.u32 %v935, 2147483648
    %v937 = vmul.f32 %v936, 1.442695
    %v938 = vpow.pop %v937
    %v939 = vadd.f32 %v938, 1.0
    %v940 = vrcp.pop %v939
    %v941 = vmul.f32 1.0, %v940
    %943 = vrot.lane.b32.xlu0 %v931, 64
    %v944 = vpop.permute.xlu0 %943
    %v946 = vmul.f32 %v941, %v944
    %948 = vrot.lane.b32.xlu0 %v946, 64
    %v949 = vpop.permute.xlu0 %948
    %v951 = vadd.f32 %v202, %v949
    %v952 = vtanh.pop %v951
    %v953 = vsub.f32 1.0, %v941
    %955 = vrot.lane.b32.xlu0 %v952, 96
    %v956 = vpop.permute.xlu0 %955
    %v958 = vmul.f32 %v953, %v956
    %959 = vrot.lane.b32.xlu0 %v861, 32
    %v960 = vpop.permute.xlu0 %959
    %v962 = vmul.f32 %v941, %v960
    %v963 = vadd.f32 %v958, %v962
    %v964 = vrot.slane %v931, 2
    %v966 = vadd.f32 %v196, %v964
    %v967 = vxor.u32 %v966, 2147483648
    %v968 = vmul.f32 %v967, 1.442695
    %v969 = vpow.pop %v968
    %v970 = vadd.f32 %v969, 1.0
    %v971 = vrcp.pop %v970
    %v972 = vmul.f32 1.0, %v971
    %v974 = vrot.slane %v933, 2
    %v976 = vadd.f32 %v198, %v974
    %v977 = vxor.u32 %v976, 2147483648
    %v978 = vmul.f32 %v977, 1.442695
    %v979 = vpow.pop %v978
    %v980 = vadd.f32 %v979, 1.0
    %v981 = vrcp.pop %v980
    %v982 = vmul.f32 1.0, %v981
    %983 = vrot.lane.b32.xlu0 %v974, 64
    %v984 = vpop.permute.xlu0 %983
    %v986 = vmul.f32 %v972, %v984
    %988 = vrot.lane.b32.xlu0 %v986, 64
    %v989 = vpop.permute.xlu0 %988
    %v991 = vadd.f32 %v198, %v989
    %v992 = vtanh.pop %v991
    %v993 = vsub.f32 1.0, %v982
    %995 = vrot.lane.b32.xlu0 %v992, 96
    %v996 = vpop.permute.xlu0 %995
    %v998 = vmul.f32 %v993, %v996
    %999 = vrot.lane.b32.xlu0 %v859, 96
    %v1000 = vpop.permute.xlu0 %999
    %v1002 = vmul.f32 %v982, %v1000
    %v1003 = vadd.f32 %v998, %v1002
    %1005 = vrot.lane.b32.xlu0 %v963, 96
    %v1006 = vpop.permute.xlu0 %1005
    %1008 = vst.msk [vmem:[#allocation2 + $0x8] sm:$0x3] %vm359, %v1006
    %1010 = vrot.lane.b32.xlu0 %v1003, 32
    %v1011 = vpop.permute.xlu0 %1010
    %1013 = vst.msk [vmem:[#allocation2] sm:$0xc0] %vm365, %v1011
    %v1014 = vrot.slane %v1003, 6
    %1015 = vrot.lane.b32.xlu0 %v1014, 32
    %v1016 = vpop.permute.xlu0 %1015
    %v1018 = vsel %vm122, %v1006, %v1016
    %v1020 = vsel %vm217, %v1018, 0
    %1022 = vmatprep.subr.mxu0 %v92
    %1023 = vmatpush1.msra.mxu0 %v91
    %1024 = vmatprep.subr.mxu0 %v94
    %1025 = vmatpush1.msra.mxu0 %v93
    %1026 = vmatprep.subr.mxu0 %v96
    %1027 = vmatpush1.msra.mxu0 %v95
    %1028 = vmatprep.subr.mxu0 %v98
    %1029 = vmatpush1.msra.mxu0 %v97
    %1030 = vmatprep.subr.mxu0 %v100
    %1031 = vmatpush1.msra.mxu0 %v99
    %1032 = vmatprep.subr.mxu0 %v102
    %1033 = vmatpush1.msra.mxu0 %v101
    %1034 = vmatprep.subr.mxu0 %v104
    %1035 = vmatpush1.msra.mxu0 %v103
    %1036 = vmatprep.subr.mxu0 %v106
    %1037 = vmatpush1.msra.mxu0 %v105
    %1038 = vmatprep.subr.mxu0 0.0
    %1039 = vmatpush1.msra.mxu0 0.0
    %1040 = vmatprep.subr.mxu0 0.0
    %1041 = vmatpush1.msra.mxu0 0.0
    %1042 = vmatprep.subr.mxu0 0.0
    %1043 = vmatpush1.msra.mxu0 0.0
    %1044 = vmatprep.subr.mxu0 0.0
    %1045 = vmatpush1.msra.mxu0 0.0
    %1046 = vmatprep.subr.mxu0 0.0
    %1047 = vmatpush1.msra.mxu0 0.0
    %1048 = vmatprep.subr.mxu0 0.0
    %1049 = vmatpush1.msra.mxu0 0.0
    %1050 = vmatprep.subr.mxu0 0.0
    %1051 = vmatpush1.msra.mxu0 0.0
    %1052 = vmatprep.subr.mxu0 0.0
    %1053 = vmatpush1.msra.mxu0 0.0
    %1054 = vmatprep.subr.mxu0 0.0
    %1055 = vmatpush1.msra.mxu0 0.0
    %1056 = vmatprep.subr.mxu0 0.0
    %1057 = vmatpush1.msra.mxu0 0.0
    %1058 = vmatprep.subr.mxu0 0.0
    %1059 = vmatpush1.msra.mxu0 0.0
    %1060 = vmatprep.subr.mxu0 0.0
    %1061 = vmatpush1.msra.mxu0 0.0
    %1062 = vmatprep.subr.mxu0 0.0
    %1063 = vmatpush1.msra.mxu0 0.0
    %1064 = vmatprep.subr.mxu0 0.0
    %1065 = vmatpush1.msra.mxu0 0.0
    %1066 = vmatprep.subr.mxu0 0.0
    %1067 = vmatpush1.msra.mxu0 0.0
    %1068 = vmatprep.subr.mxu0 0.0
    %1069 = vmatpush1.msra.mxu0 0.0
    %1070 = vmatprep.subr.mxu0 0.0
    %1071 = vmatpush1.msra.mxu0 0.0
    %1072 = vmatprep.subr.mxu0 0.0
    %1073 = vmatpush1.msra.mxu0 0.0
    %1074 = vmatprep.subr.mxu0 0.0
    %1075 = vmatpush1.msra.mxu0 0.0
    %1076 = vmatprep.subr.mxu0 0.0
    %1077 = vmatpush1.msra.mxu0 0.0
    %1078 = vmatprep.subr.mxu0 0.0
    %1079 = vmatpush1.msra.mxu0 0.0
    %1080 = vmatprep.subr.mxu0 0.0
    %1081 = vmatpush1.msra.mxu0 0.0
    %1082 = vmatprep.subr.mxu0 0.0
    %1083 = vmatpush1.msra.mxu0 0.0
    %1084 = vmatprep.subr.mxu0 0.0
    %1085 = vmatpush1.msra.mxu0 0.0
    %1086 = vmatprep.mubr.f32.mxu0 0.0
    %1087 = vmatmul.mubr.f32.gmra.mrb[0].mxu0 %v1020
    %v1088 = vpop.f32.mrb[0].mxu0
    %v1089 = vadd.f32 %v210, %v1088
    %v1090 = vpop.f32.mrb[0].mxu0
    %v1091 = vadd.f32 %v214, %v1090
    %1092 = vdwg.mxu0
    %v1094 = vrot.slane %v1089, 6
    %v1096 = vadd.f32 %v202, %v1094
    %v1097 = vxor.u32 %v1096, 2147483648
    %v1098 = vmul.f32 %v1097, 1.442695
    %v1099 = vpow.pop %v1098
    %v1100 = vadd.f32 %v1099, 1.0
    %v1101 = vrcp.pop %v1100
    %v1102 = vmul.f32 1.0, %v1101
    %1103 = vrot.lane.b32.xlu0 %v1094, 64
    %v1104 = vpop.permute.xlu0 %1103
    %v1106 = vmul.f32 %v1102, %v1104
    %1108 = vrot.lane.b32.xlu0 %v1106, 64
    %v1109 = vpop.permute.xlu0 %1108
    %v1111 = vadd.f32 %v202, %v1109
    %v1112 = vtanh.pop %v1111
    %v1113 = vsub.f32 1.0, %v1102
    %1115 = vrot.lane.b32.xlu0 %v1112, 96
    %v1116 = vpop.permute.xlu0 %1115
    %v1118 = vmul.f32 %v1113, %v1116
    %v1119 = vrot.slane %v1018, 6
    %1120 = vrot.lane.b32.xlu0 %v1119, 32
    %v1121 = vpop.permute.xlu0 %1120
    %v1123 = vmul.f32 %v1102, %v1121
    %v1124 = vadd.f32 %v1118, %v1123
    %v1125 = vrot.slane %v1089, 4
    %v1127 = vadd.f32 %v196, %v1125
    %v1128 = vxor.u32 %v1127, 2147483648
    %v1129 = vmul.f32 %v1128, 1.442695
    %v1130 = vpow.pop %v1129
    %v1131 = vadd.f32 %v1130, 1.0
    %v1132 = vrcp.pop %v1131
    %v1133 = vmul.f32 1.0, %v1132
    %v1135 = vrot.slane %v1091, 4
    %v1137 = vadd.f32 %v198, %v1135
    %v1138 = vxor.u32 %v1137, 2147483648
    %v1139 = vmul.f32 %v1138, 1.442695
    %v1140 = vpow.pop %v1139
    %v1141 = vadd.f32 %v1140, 1.0
    %v1142 = vrcp.pop %v1141
    %v1143 = vmul.f32 1.0, %v1142
    %1144 = vrot.lane.b32.xlu0 %v1135, 64
    %v1145 = vpop.permute.xlu0 %1144
    %v1147 = vmul.f32 %v1133, %v1145
    %1149 = vrot.lane.b32.xlu0 %v1147, 64
    %v1150 = vpop.permute.xlu0 %1149
    %v1152 = vadd.f32 %v198, %v1150
    %v1153 = vtanh.pop %v1152
    %v1154 = vsub.f32 1.0, %v1143
    %1156 = vrot.lane.b32.xlu0 %v1153, 96
    %v1157 = vpop.permute.xlu0 %1156
    %v1159 = vmul.f32 %v1154, %v1157
    %v1160 = vrot.slane %v1018, 4
    %1161 = vrot.lane.b32.xlu0 %v1160, 96
    %v1162 = vpop.permute.xlu0 %1161
    %v1164 = vmul.f32 %v1143, %v1162
    %v1165 = vadd.f32 %v1159, %v1164
    %1167 = vrot.lane.b32.xlu0 %v1124, 96
    %v1168 = vpop.permute.xlu0 %1167
    %1170 = vst.msk [vmem:[#allocation2 + $0x8] sm:$0xc] %vm523, %v1168
    %1172 = vrot.lane.b32.xlu0 %v1165, 32
    %v1173 = vpop.permute.xlu0 %1172
    %1175 = vst.msk [vmem:[#allocation2] sm:$0x30] %vm529, %v1173
    %v1176 = vrot.slane %v1165, 2
    %1177 = vrot.lane.b32.xlu0 %v1176, 32
    %v1178 = vpop.permute.xlu0 %1177
    %v1180 = vsel %vm122, %v1168, %v1178
    %v1182 = vrot.slane %v1180, 2
    %v1183 = vsel %vm217, %v1182, 0
    %1185 = vmatprep.subr.mxu0 %v92
    %1186 = vmatpush1.msra.mxu0 %v91
    %1187 = vmatprep.subr.mxu0 %v94
    %1188 = vmatpush1.msra.mxu0 %v93
    %1189 = vmatprep.subr.mxu0 %v96
    %1190 = vmatpush1.msra.mxu0 %v95
    %1191 = vmatprep.subr.mxu0 %v98
    %1192 = vmatpush1.msra.mxu0 %v97
    %1193 = vmatprep.subr.mxu0 %v100
    %1194 = vmatpush1.msra.mxu0 %v99
    %1195 = vmatprep.subr.mxu0 %v102
    %1196 = vmatpush1.msra.mxu0 %v101
    %1197 = vmatprep.subr.mxu0 %v104
    %1198 = vmatpush1.msra.mxu0 %v103
    %1199 = vmatprep.subr.mxu0 %v106
    %1200 = vmatpush1.msra.mxu0 %v105
    %1201 = vmatprep.subr.mxu0 0.0
    %1202 = vmatpush1.msra.mxu0 0.0
    %1203 = vmatprep.subr.mxu0 0.0
    %1204 = vmatpush1.msra.mxu0 0.0
    %1205 = vmatprep.subr.mxu0 0.0
    %1206 = vmatpush1.msra.mxu0 0.0
    %1207 = vmatprep.subr.mxu0 0.0
    %1208 = vmatpush1.msra.mxu0 0.0
    %1209 = vmatprep.subr.mxu0 0.0
    %1210 = vmatpush1.msra.mxu0 0.0
    %1211 = vmatprep.subr.mxu0 0.0
    %1212 = vmatpush1.msra.mxu0 0.0
    %1213 = vmatprep.subr.mxu0 0.0
    %1214 = vmatpush1.msra.mxu0 0.0
    %1215 = vmatprep.subr.mxu0 0.0
    %1216 = vmatpush1.msra.mxu0 0.0
    %1217 = vmatprep.subr.mxu0 0.0
    %1218 = vmatpush1.msra.mxu0 0.0
    %1219 = vmatprep.subr.mxu0 0.0
    %1220 = vmatpush1.msra.mxu0 0.0
    %1221 = vmatprep.subr.mxu0 0.0
    %1222 = vmatpush1.msra.mxu0 0.0
    %1223 = vmatprep.subr.mxu0 0.0
    %1224 = vmatpush1.msra.mxu0 0.0
    %1225 = vmatprep.subr.mxu0 0.0
    %1226 = vmatpush1.msra.mxu0 0.0
    %1227 = vmatprep.subr.mxu0 0.0
    %1228 = vmatpush1.msra.mxu0 0.0
    %1229 = vmatprep.subr.mxu0 0.0
    %1230 = vmatpush1.msra.mxu0 0.0
    %1231 = vmatprep.subr.mxu0 0.0
    %1232 = vmatpush1.msra.mxu0 0.0
    %1233 = vmatprep.subr.mxu0 0.0
    %1234 = vmatpush1.msra.mxu0 0.0
    %1235 = vmatprep.subr.mxu0 0.0
    %1236 = vmatpush1.msra.mxu0 0.0
    %1237 = vmatprep.subr.mxu0 0.0
    %1238 = vmatpush1.msra.mxu0 0.0
    %1239 = vmatprep.subr.mxu0 0.0
    %1240 = vmatpush1.msra.mxu0 0.0
    %1241 = vmatprep.subr.mxu0 0.0
    %1242 = vmatpush1.msra.mxu0 0.0
    %1243 = vmatprep.subr.mxu0 0.0
    %1244 = vmatpush1.msra.mxu0 0.0
    %1245 = vmatprep.subr.mxu0 0.0
    %1246 = vmatpush1.msra.mxu0 0.0
    %1247 = vmatprep.subr.mxu0 0.0
    %1248 = vmatpush1.msra.mxu0 0.0
    %1249 = vmatprep.mubr.f32.mxu0 0.0
    %1250 = vmatmul.mubr.f32.gmra.mrb[0].mxu0 %v1183
    %v1251 = vpop.f32.mrb[0].mxu0
    %v1252 = vadd.f32 %v210, %v1251
    %v1253 = vpop.f32.mrb[0].mxu0
    %v1254 = vadd.f32 %v214, %v1253
    %1255 = vdwg.mxu0
    %v1257 = vrot.slane %v1252, 4
    %v1259 = vadd.f32 %v202, %v1257
    %v1260 = vxor.u32 %v1259, 2147483648
    %v1261 = vmul.f32 %v1260, 1.442695
    %v1262 = vpow.pop %v1261
    %v1263 = vadd.f32 %v1262, 1.0
    %v1264 = vrcp.pop %v1263
    %v1265 = vmul.f32 1.0, %v1264
    %1266 = vrot.lane.b32.xlu0 %v1257, 64
    %v1267 = vpop.permute.xlu0 %1266
    %v1269 = vmul.f32 %v1265, %v1267
    %1271 = vrot.lane.b32.xlu0 %v1269, 64
    %v1272 = vpop.permute.xlu0 %1271
    %v1274 = vadd.f32 %v202, %v1272
    %v1275 = vtanh.pop %v1274
    %v1276 = vsub.f32 1.0, %v1265
    %1278 = vrot.lane.b32.xlu0 %v1275, 96
    %v1279 = vpop.permute.xlu0 %1278
    %v1281 = vmul.f32 %v1276, %v1279
    %v1282 = vrot.slane %v1180, 6
    %1283 = vrot.lane.b32.xlu0 %v1282, 32
    %v1284 = vpop.permute.xlu0 %1283
    %v1286 = vmul.f32 %v1265, %v1284
    %v1287 = vadd.f32 %v1281, %v1286
    %v1288 = vrot.slane %v1252, 6
    %v1290 = vadd.f32 %v196, %v1288
    %v1291 = vxor.u32 %v1290, 2147483648
    %v1292 = vmul.f32 %v1291, 1.442695
    %v1293 = vpow.pop %v1292
    %v1294 = vadd.f32 %v1293, 1.0
    %v1295 = vrcp.pop %v1294
    %v1296 = vmul.f32 1.0, %v1295
    %v1298 = vrot.slane %v1254, 6
    %v1300 = vadd.f32 %v198, %v1298
    %v1301 = vxor.u32 %v1300, 2147483648
    %v1302 = vmul.f32 %v1301, 1.442695
    %v1303 = vpow.pop %v1302
    %v1304 = vadd.f32 %v1303, 1.0
    %v1305 = vrcp.pop %v1304
    %v1306 = vmul.f32 1.0, %v1305
    %1307 = vrot.lane.b32.xlu0 %v1298, 64
    %v1308 = vpop.permute.xlu0 %1307
    %v1310 = vmul.f32 %v1296, %v1308
    %1312 = vrot.lane.b32.xlu0 %v1310, 64
    %v1313 = vpop.permute.xlu0 %1312
    %v1315 = vadd.f32 %v198, %v1313
    %v1316 = vtanh.pop %v1315
    %v1317 = vsub.f32 1.0, %v1306
    %1319 = vrot.lane.b32.xlu0 %v1316, 96
    %v1320 = vpop.permute.xlu0 %1319
    %v1322 = vmul.f32 %v1317, %v1320
    %1323 = vrot.lane.b32.xlu0 %v1180, 96
    %v1324 = vpop.permute.xlu0 %1323
    %v1326 = vmul.f32 %v1306, %v1324
    %v1327 = vadd.f32 %v1322, %v1326
    %1329 = vrot.lane.b32.xlu0 %v1287, 96
    %v1330 = vpop.permute.xlu0 %1329
    %1332 = vst.msk [vmem:[#allocation2 + $0x8] sm:$0x30] %vm687, %v1330
    %1334 = vrot.lane.b32.xlu0 %v1327, 32
    %v1335 = vpop.permute.xlu0 %1334
    %1337 = vst.msk [vmem:[#allocation2] sm:$0xc] %vm693, %v1335
    %v1338 = vrot.slane %v1327, 6
    %1339 = vrot.lane.b32.xlu0 %v1338, 32
    %v1340 = vpop.permute.xlu0 %1339
    %v1342 = vsel %vm122, %v1330, %v1340
    %v1344 = vrot.slane %v1342, 4
    %v1345 = vsel %vm217, %v1344, 0
    %1347 = vmatprep.subr.mxu0 %v92
    %1348 = vmatpush1.msra.mxu0 %v91
    %1349 = vmatprep.subr.mxu0 %v94
    %1350 = vmatpush1.msra.mxu0 %v93
    %1351 = vmatprep.subr.mxu0 %v96
    %1352 = vmatpush1.msra.mxu0 %v95
    %1353 = vmatprep.subr.mxu0 %v98
    %1354 = vmatpush1.msra.mxu0 %v97
    %1355 = vmatprep.subr.mxu0 %v100
    %1356 = vmatpush1.msra.mxu0 %v99
    %1357 = vmatprep.subr.mxu0 %v102
    %1358 = vmatpush1.msra.mxu0 %v101
    %1359 = vmatprep.subr.mxu0 %v104
    %1360 = vmatpush1.msra.mxu0 %v103
    %1361 = vmatprep.subr.mxu0 %v106
    %1362 = vmatpush1.msra.mxu0 %v105
    %1363 = vmatprep.subr.mxu0 0.0
    %1364 = vmatpush1.msra.mxu0 0.0
    %1365 = vmatprep.subr.mxu0 0.0
    %1366 = vmatpush1.msra.mxu0 0.0
    %1367 = vmatprep.subr.mxu0 0.0
    %1368 = vmatpush1.msra.mxu0 0.0
    %1369 = vmatprep.subr.mxu0 0.0
    %1370 = vmatpush1.msra.mxu0 0.0
    %1371 = vmatprep.subr.mxu0 0.0
    %1372 = vmatpush1.msra.mxu0 0.0
    %1373 = vmatprep.subr.mxu0 0.0
    %1374 = vmatpush1.msra.mxu0 0.0
    %1375 = vmatprep.subr.mxu0 0.0
    %1376 = vmatpush1.msra.mxu0 0.0
    %1377 = vmatprep.subr.mxu0 0.0
    %1378 = vmatpush1.msra.mxu0 0.0
    %1379 = vmatprep.subr.mxu0 0.0
    %1380 = vmatpush1.msra.mxu0 0.0
    %1381 = vmatprep.subr.mxu0 0.0
    %1382 = vmatpush1.msra.mxu0 0.0
    %1383 = vmatprep.subr.mxu0 0.0
    %1384 = vmatpush1.msra.mxu0 0.0
    %1385 = vmatprep.subr.mxu0 0.0
    %1386 = vmatpush1.msra.mxu0 0.0
    %1387 = vmatprep.subr.mxu0 0.0
    %1388 = vmatpush1.msra.mxu0 0.0
    %1389 = vmatprep.subr.mxu0 0.0
    %1390 = vmatpush1.msra.mxu0 0.0
    %1391 = vmatprep.subr.mxu0 0.0
    %1392 = vmatpush1.msra.mxu0 0.0
    %1393 = vmatprep.subr.mxu0 0.0
    %1394 = vmatpush1.msra.mxu0 0.0
    %1395 = vmatprep.subr.mxu0 0.0
    %1396 = vmatpush1.msra.mxu0 0.0
    %1397 = vmatprep.subr.mxu0 0.0
    %1398 = vmatpush1.msra.mxu0 0.0
    %1399 = vmatprep.subr.mxu0 0.0
    %1400 = vmatpush1.msra.mxu0 0.0
    %1401 = vmatprep.subr.mxu0 0.0
    %1402 = vmatpush1.msra.mxu0 0.0
    %1403 = vmatprep.subr.mxu0 0.0
    %1404 = vmatpush1.msra.mxu0 0.0
    %1405 = vmatprep.subr.mxu0 0.0
    %1406 = vmatpush1.msra.mxu0 0.0
    %1407 = vmatprep.subr.mxu0 0.0
    %1408 = vmatpush1.msra.mxu0 0.0
    %1409 = vmatprep.subr.mxu0 0.0
    %1410 = vmatpush1.msra.mxu0 0.0
    %1411 = vmatprep.mubr.f32.mxu0 0.0
    %1412 = vmatmul.mubr.f32.gmra.mrb[0].mxu0 %v1345
    %v1413 = vpop.f32.mrb[0].mxu0
    %v1414 = vadd.f32 %v210, %v1413
    %v1415 = vpop.f32.mrb[0].mxu0
    %v1416 = vadd.f32 %v214, %v1415
    %1417 = vdwg.mxu0
    %v1419 = vrot.slane %v1414, 2
    %v1421 = vadd.f32 %v202, %v1419
    %v1422 = vxor.u32 %v1421, 2147483648
    %v1423 = vmul.f32 %v1422, 1.442695
    %v1424 = vpow.pop %v1423
    %v1425 = vadd.f32 %v1424, 1.0
    %v1426 = vrcp.pop %v1425
    %v1427 = vmul.f32 1.0, %v1426
    %1428 = vrot.lane.b32.xlu0 %v1419, 64
    %v1429 = vpop.permute.xlu0 %1428
    %v1431 = vmul.f32 %v1427, %v1429
    %1433 = vrot.lane.b32.xlu0 %v1431, 64
    %v1434 = vpop.permute.xlu0 %1433
    %v1436 = vadd.f32 %v202, %v1434
    %v1437 = vtanh.pop %v1436
    %v1438 = vsub.f32 1.0, %v1427
    %1440 = vrot.lane.b32.xlu0 %v1437, 96
    %v1441 = vpop.permute.xlu0 %1440
    %v1443 = vmul.f32 %v1438, %v1441
    %v1444 = vrot.slane %v1342, 6
    %1445 = vrot.lane.b32.xlu0 %v1444, 32
    %v1446 = vpop.permute.xlu0 %1445
    %v1448 = vmul.f32 %v1427, %v1446
    %v1449 = vadd.f32 %v1443, %v1448
    %v1450 = vadd.f32 %v196, %v1414
    %v1451 = vxor.u32 %v1450, 2147483648
    %v1452 = vmul.f32 %v1451, 1.442695
    %v1453 = vpow.pop %v1452
    %v1454 = vadd.f32 %v1453, 1.0
    %v1455 = vrcp.pop %v1454
    %v1456 = vmul.f32 1.0, %v1455
    %v1457 = vadd.f32 %v198, %v1416
    %v1458 = vxor.u32 %v1457, 2147483648
    %v1459 = vmul.f32 %v1458, 1.442695
    %v1460 = vpow.pop %v1459
    %v1461 = vadd.f32 %v1460, 1.0
    %v1462 = vrcp.pop %v1461
    %v1463 = vmul.f32 1.0, %v1462
    %1465 = vrot.lane.b32.xlu0 %v1416, 64
    %v1466 = vpop.permute.xlu0 %1465
    %v1468 = vmul.f32 %v1456, %v1466
    %1470 = vrot.lane.b32.xlu0 %v1468, 64
    %v1471 = vpop.permute.xlu0 %1470
    %v1473 = vadd.f32 %v198, %v1471
    %v1474 = vtanh.pop %v1473
    %v1475 = vsub.f32 1.0, %v1463
    %1477 = vrot.lane.b32.xlu0 %v1474, 96
    %v1478 = vpop.permute.xlu0 %1477
    %v1480 = vmul.f32 %v1475, %v1478
    %1481 = vrot.lane.b32.xlu0 %v1344, 96
    %v1482 = vpop.permute.xlu0 %1481
    %v1484 = vmul.f32 %v1463, %v1482
    %v1485 = vadd.f32 %v1480, %v1484
    %1487 = vrot.lane.b32.xlu0 %v1449, 96
    %v1488 = vpop.permute.xlu0 %1487
    %1490 = vst.msk [vmem:[#allocation2 + $0x8] sm:$0xc0] %vm847, %v1488
    %1492 = vrot.lane.b32.xlu0 %v1485, 32
    %v1493 = vpop.permute.xlu0 %1492
    %1495 = vst.msk [vmem:[#allocation2] sm:$0x3] %vm853, %v1493
    %v1496 = vld [vmem:[#allocation6] sm:$0xff]
    %v1497 = vld [vmem:[#allocation6 + $0x8] sm:$0xff]
    %v1498 = vld [vmem:[#allocation6 + $0x10] sm:$0xff]
    %v1499 = vld [vmem:[#allocation6 + $0x18] sm:$0xff]
    %v1500 = vld [vmem:[#allocation6 + $0x20] sm:$0xff]
    %v1501 = vld [vmem:[#allocation6 + $0x28] sm:$0xff]
    %v1502 = vld [vmem:[#allocation6 + $0x30] sm:$0xff]
    %v1503 = vld [vmem:[#allocation6 + $0x38] sm:$0xff]
    %v1504 = vld [vmem:[#allocation6 + $0x40] sm:$0xff]
    %v1505 = vld [vmem:[#allocation6 + $0x48] sm:$0xff]
    %v1506 = vld [vmem:[#allocation6 + $0x50] sm:$0xff]
    %v1507 = vld [vmem:[#allocation6 + $0x58] sm:$0xff]
    %v1508 = vld [vmem:[#allocation6 + $0x60] sm:$0xff]
    %v1509 = vld [vmem:[#allocation6 + $0x68] sm:$0xff]
    %v1510 = vld [vmem:[#allocation6 + $0x70] sm:$0xff]
    %v1511 = vld [vmem:[#allocation6 + $0x78] sm:$0xff]
    %v1512 = vld [vmem:[#allocation8] sm:$0xff]
    %v1513 = vld [vmem:[#allocation8 + $0x8] sm:$0xff]
    %v1514 = vld [vmem:[#allocation8 + $0x10] sm:$0xff]
    %v1515 = vld [vmem:[#allocation8 + $0x18] sm:$0xff]
    %v1516 = vld [vmem:[#allocation8 + $0x20] sm:$0xff]
    %v1517 = vld [vmem:[#allocation8 + $0x28] sm:$0xff]
    %v1518 = vld [vmem:[#allocation8 + $0x30] sm:$0xff]
    %v1519 = vld [vmem:[#allocation8 + $0x38] sm:$0xff]
    %v1520 = vld [vmem:[#allocation8 + $0x40] sm:$0xff]
    %v1521 = vld [vmem:[#allocation8 + $0x48] sm:$0xff]
    %v1522 = vld [vmem:[#allocation8 + $0x50] sm:$0xff]
    %v1523 = vld [vmem:[#allocation8 + $0x58] sm:$0xff]
    %v1524 = vld [vmem:[#allocation8 + $0x60] sm:$0xff]
    %v1525 = vld [vmem:[#allocation8 + $0x68] sm:$0xff]
    %v1526 = vld [vmem:[#allocation8 + $0x70] sm:$0xff]
    %v1527 = vld [vmem:[#allocation8 + $0x78] sm:$0xff]
    %v1528 = vld [vmem:[%s7] sm:$0x3]
    %v1529 = vld [vmem:[%s8] sm:$0x3]
    %v1530 = vld [vmem:[#allocation2] sm:$0xff]
    %v1531 = vld [vmem:[#allocation2 + $0x8] sm:$0xff]
    %v1533 = vlaneseq
    %v1534 = vshrl.u32 %v1533, 7
    %v1535 = vsub.s32 0, %v1534
    %v1536 = vrot.slane %v1528, %v1535
    %v1537 = vlaneseq
    %v1538 = vshrl.u32 %v1537, 7
    %v1539 = vsub.s32 1, %v1538
    %v1540 = vrot.slane %v1528, %v1539
    %v1544 = vsel %vm217, %v1530, 0
    %v1547 = vsel %vm217, %v1531, 0
    %1549 = vmatprep.subr.mxu0 %v1497
    %1550 = vmatpush1.msra.mxu0 %v1496
    %1551 = vmatprep.subr.mxu0 %v1499
    %1552 = vmatpush1.msra.mxu0 %v1498
    %1553 = vmatprep.subr.mxu0 %v1501
    %1554 = vmatpush1.msra.mxu0 %v1500
    %1555 = vmatprep.subr.mxu0 %v1503
    %1556 = vmatpush1.msra.mxu0 %v1502
    %1557 = vmatprep.subr.mxu0 %v1505
    %1558 = vmatpush1.msra.mxu0 %v1504
    %1559 = vmatprep.subr.mxu0 %v1507
    %1560 = vmatpush1.msra.mxu0 %v1506
    %1561 = vmatprep.subr.mxu0 %v1509
    %1562 = vmatpush1.msra.mxu0 %v1508
    %1563 = vmatprep.subr.mxu0 %v1511
    %1564 = vmatpush1.msra.mxu0 %v1510
    %1565 = vmatprep.subr.mxu0 0.0
    %1566 = vmatpush1.msra.mxu0 0.0
    %1567 = vmatprep.subr.mxu0 0.0
    %1568 = vmatpush1.msra.mxu0 0.0
    %1569 = vmatprep.subr.mxu0 0.0
    %1570 = vmatpush1.msra.mxu0 0.0
    %1571 = vmatprep.subr.mxu0 0.0
    %1572 = vmatpush1.msra.mxu0 0.0
    %1573 = vmatprep.subr.mxu0 0.0
    %1574 = vmatpush1.msra.mxu0 0.0
    %1575 = vmatprep.subr.mxu0 0.0
    %1576 = vmatpush1.msra.mxu0 0.0
    %1577 = vmatprep.subr.mxu0 0.0
    %1578 = vmatpush1.msra.mxu0 0.0
    %1579 = vmatprep.subr.mxu0 0.0
    %1580 = vmatpush1.msra.mxu0 0.0
    %1581 = vmatprep.subr.mxu0 0.0
    %1582 = vmatpush1.msra.mxu0 0.0
    %1583 = vmatprep.subr.mxu0 0.0
    %1584 = vmatpush1.msra.mxu0 0.0
    %1585 = vmatprep.subr.mxu0 0.0
    %1586 = vmatpush1.msra.mxu0 0.0
    %1587 = vmatprep.subr.mxu0 0.0
    %1588 = vmatpush1.msra.mxu0 0.0
    %1589 = vmatprep.subr.mxu0 0.0
    %1590 = vmatpush1.msra.mxu0 0.0
    %1591 = vmatprep.subr.mxu0 0.0
    %1592 = vmatpush1.msra.mxu0 0.0
    %1593 = vmatprep.subr.mxu0 0.0
    %1594 = vmatpush1.msra.mxu0 0.0
    %1595 = vmatprep.subr.mxu0 0.0
    %1596 = vmatpush1.msra.mxu0 0.0
    %1597 = vmatprep.subr.mxu0 0.0
    %1598 = vmatpush1.msra.mxu0 0.0
    %1599 = vmatprep.subr.mxu0 0.0
    %1600 = vmatpush1.msra.mxu0 0.0
    %1601 = vmatprep.subr.mxu0 0.0
    %1602 = vmatpush1.msra.mxu0 0.0
    %1603 = vmatprep.subr.mxu0 0.0
    %1604 = vmatpush1.msra.mxu0 0.0
    %1605 = vmatprep.subr.mxu0 0.0
    %1606 = vmatpush1.msra.mxu0 0.0
    %1607 = vmatprep.subr.mxu0 0.0
    %1608 = vmatpush1.msra.mxu0 0.0
    %1609 = vmatprep.subr.mxu0 0.0
    %1610 = vmatpush1.msra.mxu0 0.0
    %1611 = vmatprep.subr.mxu0 0.0
    %1612 = vmatpush1.msra.mxu0 0.0
    %1613 = vmatprep.mubr.f32.mxu0 0.0
    %1614 = vmatmul.mubr.f32.gmra.mrb[0].mxu0 %v1544
    %v1615 = vpop.f32.mrb[0].mxu0
    %v1616 = vadd.f32 %v1536, %v1615
    %v1617 = vpop.f32.mrb[0].mxu0
    %v1618 = vadd.f32 %v1540, %v1617
    %1619 = vmatprep.mubr.f32.mxu0 0.0
    %1620 = vmatmul.mubr.f32.gmra.mrb[0].mxu0 %v1547
    %v1621 = vpop.f32.mrb[0].mxu0
    %v1622 = vadd.f32 %v1536, %v1621
    %v1623 = vpop.f32.mrb[0].mxu0
    %v1624 = vadd.f32 %v1540, %v1623
    %1625 = vdwg.mxu0
    %v1627 = vlaneseq
    %v1628 = vshrl.u32 %v1627, 7
    %v1629 = vsub.s32 0, %v1628
    %v1630 = vrot.slane %v1529, %v1629
    %v1631 = vlaneseq
    %v1632 = vshrl.u32 %v1631, 7
    %v1633 = vsub.s32 1, %v1632
    %v1634 = vrot.slane %v1529, %v1633
    %1637 = vmatprep.subr.mxu0 %v1513
    %1638 = vmatpush1.msra.mxu0 %v1512
    %1639 = vmatprep.subr.mxu0 %v1515
    %1640 = vmatpush1.msra.mxu0 %v1514
    %1641 = vmatprep.subr.mxu0 %v1517
    %1642 = vmatpush1.msra.mxu0 %v1516
    %1643 = vmatprep.subr.mxu0 %v1519
    %1644 = vmatpush1.msra.mxu0 %v1518
    %1645 = vmatprep.subr.mxu0 %v1521
    %1646 = vmatpush1.msra.mxu0 %v1520
    %1647 = vmatprep.subr.mxu0 %v1523
    %1648 = vmatpush1.msra.mxu0 %v1522
    %1649 = vmatprep.subr.mxu0 %v1525
    %1650 = vmatpush1.msra.mxu0 %v1524
    %1651 = vmatprep.subr.mxu0 %v1527
    %1652 = vmatpush1.msra.mxu0 %v1526
    %1653 = vmatprep.subr.mxu0 0.0
    %1654 = vmatpush1.msra.mxu0 0.0
    %1655 = vmatprep.subr.mxu0 0.0
    %1656 = vmatpush1.msra.mxu0 0.0
    %1657 = vmatprep.subr.mxu0 0.0
    %1658 = vmatpush1.msra.mxu0 0.0
    %1659 = vmatprep.subr.mxu0 0.0
    %1660 = vmatpush1.msra.mxu0 0.0
    %1661 = vmatprep.subr.mxu0 0.0
    %1662 = vmatpush1.msra.mxu0 0.0
    %1663 = vmatprep.subr.mxu0 0.0
    %1664 = vmatpush1.msra.mxu0 0.0
    %1665 = vmatprep.subr.mxu0 0.0
    %1666 = vmatpush1.msra.mxu0 0.0
    %1667 = vmatprep.subr.mxu0 0.0
    %1668 = vmatpush1.msra.mxu0 0.0
    %1669 = vmatprep.subr.mxu0 0.0
    %1670 = vmatpush1.msra.mxu0 0.0
    %1671 = vmatprep.subr.mxu0 0.0
    %1672 = vmatpush1.msra.mxu0 0.0
    %1673 = vmatprep.subr.mxu0 0.0
    %1674 = vmatpush1.msra.mxu0 0.0
    %1675 = vmatprep.subr.mxu0 0.0
    %1676 = vmatpush1.msra.mxu0 0.0
    %1677 = vmatprep.subr.mxu0 0.0
    %1678 = vmatpush1.msra.mxu0 0.0
    %1679 = vmatprep.subr.mxu0 0.0
    %1680 = vmatpush1.msra.mxu0 0.0
    %1681 = vmatprep.subr.mxu0 0.0
    %1682 = vmatpush1.msra.mxu0 0.0
    %1683 = vmatprep.subr.mxu0 0.0
    %1684 = vmatpush1.msra.mxu0 0.0
    %1685 = vmatprep.subr.mxu0 0.0
    %1686 = vmatpush1.msra.mxu0 0.0
    %1687 = vmatprep.subr.mxu0 0.0
    %1688 = vmatpush1.msra.mxu0 0.0
    %1689 = vmatprep.subr.mxu0 0.0
    %1690 = vmatpush1.msra.mxu0 0.0
    %1691 = vmatprep.subr.mxu0 0.0
    %1692 = vmatpush1.msra.mxu0 0.0
    %1693 = vmatprep.subr.mxu0 0.0
    %1694 = vmatpush1.msra.mxu0 0.0
    %1695 = vmatprep.subr.mxu0 0.0
    %1696 = vmatpush1.msra.mxu0 0.0
    %1697 = vmatprep.subr.mxu0 0.0
    %1698 = vmatpush1.msra.mxu0 0.0
    %1699 = vmatprep.subr.mxu0 0.0
    %1700 = vmatpush1.msra.mxu0 0.0
    %1701 = vmatprep.mubr.f32.mxu0 0.0
    %1702 = vmatmul.mubr.f32.gmra.mrb[0].mxu0 %v219
    %v1703 = vpop.f32.mrb[0].mxu0
    %v1704 = vadd.f32 %v1630, %v1703
    %v1705 = vpop.f32.mrb[0].mxu0
    %v1706 = vadd.f32 %v1634, %v1705
    %1707 = vdwg.mxu0
    %v1708 = vadd.f32 %v1616, %v1704
    %v1709 = vxor.u32 %v1708, 2147483648
    %v1710 = vmul.f32 %v1709, 1.442695
    %v1711 = vpow.pop %v1710
    %v1712 = vadd.f32 %v1711, 1.0
    %v1713 = vrcp.pop %v1712
    %v1714 = vmul.f32 1.0, %v1713
    %1716 = vrot.lane.b32.xlu0 %v1704, 64
    %v1717 = vpop.permute.xlu0 %1716
    %v1719 = vmul.f32 %v1714, %v1717
    %1721 = vrot.lane.b32.xlu0 %v1719, 64
    %v1722 = vpop.permute.xlu0 %1721
    %v1724 = vadd.f32 %v1616, %v1722
    %v1725 = vtanh.pop %v1724
    %v1726 = vsub.f32 1.0, %v1714
    %1728 = vrot.lane.b32.xlu0 %v1725, 96
    %v1729 = vpop.permute.xlu0 %1728
    %v1731 = vmul.f32 %v1726, %v1729
    %v1732 = vmul.f32 %v1714, 0.0
    %v1733 = vadd.f32 %v1731, %v1732
    %v1734 = vrot.slane %v1704, 2
    %v1736 = vadd.f32 %v1622, %v1734
    %v1737 = vxor.u32 %v1736, 2147483648
    %v1738 = vmul.f32 %v1737, 1.442695
    %v1739 = vpow.pop %v1738
    %v1740 = vadd.f32 %v1739, 1.0
    %v1741 = vrcp.pop %v1740
    %v1742 = vmul.f32 1.0, %v1741
    %v1744 = vrot.slane %v1706, 2
    %v1746 = vadd.f32 %v1624, %v1744
    %v1747 = vxor.u32 %v1746, 2147483648
    %v1748 = vmul.f32 %v1747, 1.442695
    %v1749 = vpow.pop %v1748
    %v1750 = vadd.f32 %v1749, 1.0
    %v1751 = vrcp.pop %v1750
    %v1752 = vmul.f32 1.0, %v1751
    %1753 = vrot.lane.b32.xlu0 %v1744, 64
    %v1754 = vpop.permute.xlu0 %1753
    %v1756 = vmul.f32 %v1742, %v1754
    %1758 = vrot.lane.b32.xlu0 %v1756, 64
    %v1759 = vpop.permute.xlu0 %1758
    %v1761 = vadd.f32 %v1624, %v1759
    %v1762 = vtanh.pop %v1761
    %v1763 = vsub.f32 1.0, %v1752
    %1765 = vrot.lane.b32.xlu0 %v1762, 96
    %v1766 = vpop.permute.xlu0 %1765
    %v1768 = vmul.f32 %v1763, %v1766
    %v1769 = vmul.f32 %v1752, 0.0
    %v1770 = vadd.f32 %v1768, %v1769
    %1772 = vrot.lane.b32.xlu0 %v1733, 96
    %v1773 = vpop.permute.xlu0 %1772
    %1775 = vst.msk [vmem:[#allocation9] sm:$0x3] %vm359, %v1773
    %1777 = vrot.lane.b32.xlu0 %v1770, 32
    %v1778 = vpop.permute.xlu0 %1777
    %1780 = vst.msk [vmem:[#allocation9 + $0x8] sm:$0xc0] %vm365, %v1778
    %v1781 = vrot.slane %v1770, 6
    %1782 = vrot.lane.b32.xlu0 %v1781, 32
    %v1783 = vpop.permute.xlu0 %1782
    %v1785 = vsel %vm122, %v1773, %v1783
    %v1787 = vsel %vm217, %v1785, 0
    %1789 = vmatprep.subr.mxu0 %v1513
    %1790 = vmatpush1.msra.mxu0 %v1512
    %1791 = vmatprep.subr.mxu0 %v1515
    %1792 = vmatpush1.msra.mxu0 %v1514
    %1793 = vmatprep.subr.mxu0 %v1517
    %1794 = vmatpush1.msra.mxu0 %v1516
    %1795 = vmatprep.subr.mxu0 %v1519
    %1796 = vmatpush1.msra.mxu0 %v1518
    %1797 = vmatprep.subr.mxu0 %v1521
    %1798 = vmatpush1.msra.mxu0 %v1520
    %1799 = vmatprep.subr.mxu0 %v1523
    %1800 = vmatpush1.msra.mxu0 %v1522
    %1801 = vmatprep.subr.mxu0 %v1525
    %1802 = vmatpush1.msra.mxu0 %v1524
    %1803 = vmatprep.subr.mxu0 %v1527
    %1804 = vmatpush1.msra.mxu0 %v1526
    %1805 = vmatprep.subr.mxu0 0.0
    %1806 = vmatpush1.msra.mxu0 0.0
    %1807 = vmatprep.subr.mxu0 0.0
    %1808 = vmatpush1.msra.mxu0 0.0
    %1809 = vmatprep.subr.mxu0 0.0
    %1810 = vmatpush1.msra.mxu0 0.0
    %1811 = vmatprep.subr.mxu0 0.0
    %1812 = vmatpush1.msra.mxu0 0.0
    %1813 = vmatprep.subr.mxu0 0.0
    %1814 = vmatpush1.msra.mxu0 0.0
    %1815 = vmatprep.subr.mxu0 0.0
    %1816 = vmatpush1.msra.mxu0 0.0
    %1817 = vmatprep.subr.mxu0 0.0
    %1818 = vmatpush1.msra.mxu0 0.0
    %1819 = vmatprep.subr.mxu0 0.0
    %1820 = vmatpush1.msra.mxu0 0.0
    %1821 = vmatprep.subr.mxu0 0.0
    %1822 = vmatpush1.msra.mxu0 0.0
    %1823 = vmatprep.subr.mxu0 0.0
    %1824 = vmatpush1.msra.mxu0 0.0
    %1825 = vmatprep.subr.mxu0 0.0
    %1826 = vmatpush1.msra.mxu0 0.0
    %1827 = vmatprep.subr.mxu0 0.0
    %1828 = vmatpush1.msra.mxu0 0.0
    %1829 = vmatprep.subr.mxu0 0.0
    %1830 = vmatpush1.msra.mxu0 0.0
    %1831 = vmatprep.subr.mxu0 0.0
    %1832 = vmatpush1.msra.mxu0 0.0
    %1833 = vmatprep.subr.mxu0 0.0
    %1834 = vmatpush1.msra.mxu0 0.0
    %1835 = vmatprep.subr.mxu0 0.0
    %1836 = vmatpush1.msra.mxu0 0.0
    %1837 = vmatprep.subr.mxu0 0.0
    %1838 = vmatpush1.msra.mxu0 0.0
    %1839 = vmatprep.subr.mxu0 0.0
    %1840 = vmatpush1.msra.mxu0 0.0
    %1841 = vmatprep.subr.mxu0 0.0
    %1842 = vmatpush1.msra.mxu0 0.0
    %1843 = vmatprep.subr.mxu0 0.0
    %1844 = vmatpush1.msra.mxu0 0.0
    %1845 = vmatprep.subr.mxu0 0.0
    %1846 = vmatpush1.msra.mxu0 0.0
    %1847 = vmatprep.subr.mxu0 0.0
    %1848 = vmatpush1.msra.mxu0 0.0
    %1849 = vmatprep.subr.mxu0 0.0
    %1850 = vmatpush1.msra.mxu0 0.0
    %1851 = vmatprep.subr.mxu0 0.0
    %1852 = vmatpush1.msra.mxu0 0.0
    %1853 = vmatprep.mubr.f32.mxu0 0.0
    %1854 = vmatmul.mubr.f32.gmra.mrb[0].mxu0 %v1787
    %v1855 = vpop.f32.mrb[0].mxu0
    %v1856 = vadd.f32 %v1630, %v1855
    %v1857 = vpop.f32.mrb[0].mxu0
    %v1858 = vadd.f32 %v1634, %v1857
    %1859 = vdwg.mxu0
    %v1861 = vrot.slane %v1856, 6
    %v1863 = vadd.f32 %v1616, %v1861
    %v1864 = vxor.u32 %v1863, 2147483648
    %v1865 = vmul.f32 %v1864, 1.442695
    %v1866 = vpow.pop %v1865
    %v1867 = vadd.f32 %v1866, 1.0
    %v1868 = vrcp.pop %v1867
    %v1869 = vmul.f32 1.0, %v1868
    %1870 = vrot.lane.b32.xlu0 %v1861, 64
    %v1871 = vpop.permute.xlu0 %1870
    %v1873 = vmul.f32 %v1869, %v1871
    %1875 = vrot.lane.b32.xlu0 %v1873, 64
    %v1876 = vpop.permute.xlu0 %1875
    %v1878 = vadd.f32 %v1616, %v1876
    %v1879 = vtanh.pop %v1878
    %v1880 = vsub.f32 1.0, %v1869
    %1882 = vrot.lane.b32.xlu0 %v1879, 96
    %v1883 = vpop.permute.xlu0 %1882
    %v1885 = vmul.f32 %v1880, %v1883
    %v1886 = vrot.slane %v1785, 6
    %1887 = vrot.lane.b32.xlu0 %v1886, 32
    %v1888 = vpop.permute.xlu0 %1887
    %v1890 = vmul.f32 %v1869, %v1888
    %v1891 = vadd.f32 %v1885, %v1890
    %v1892 = vrot.slane %v1856, 4
    %v1894 = vadd.f32 %v1622, %v1892
    %v1895 = vxor.u32 %v1894, 2147483648
    %v1896 = vmul.f32 %v1895, 1.442695
    %v1897 = vpow.pop %v1896
    %v1898 = vadd.f32 %v1897, 1.0
    %v1899 = vrcp.pop %v1898
    %v1900 = vmul.f32 1.0, %v1899
    %v1902 = vrot.slane %v1858, 4
    %v1904 = vadd.f32 %v1624, %v1902
    %v1905 = vxor.u32 %v1904, 2147483648
    %v1906 = vmul.f32 %v1905, 1.442695
    %v1907 = vpow.pop %v1906
    %v1908 = vadd.f32 %v1907, 1.0
    %v1909 = vrcp.pop %v1908
    %v1910 = vmul.f32 1.0, %v1909
    %1911 = vrot.lane.b32.xlu0 %v1902, 64
    %v1912 = vpop.permute.xlu0 %1911
    %v1914 = vmul.f32 %v1900, %v1912
    %1916 = vrot.lane.b32.xlu0 %v1914, 64
    %v1917 = vpop.permute.xlu0 %1916
    %v1919 = vadd.f32 %v1624, %v1917
    %v1920 = vtanh.pop %v1919
    %v1921 = vsub.f32 1.0, %v1910
    %1923 = vrot.lane.b32.xlu0 %v1920, 96
    %v1924 = vpop.permute.xlu0 %1923
    %v1926 = vmul.f32 %v1921, %v1924
    %v1927 = vrot.slane %v1785, 4
    %1928 = vrot.lane.b32.xlu0 %v1927, 96
    %v1929 = vpop.permute.xlu0 %1928
    %v1931 = vmul.f32 %v1910, %v1929
    %v1932 = vadd.f32 %v1926, %v1931
    %1934 = vrot.lane.b32.xlu0 %v1891, 96
    %v1935 = vpop.permute.xlu0 %1934
    %1937 = vst.msk [vmem:[#allocation9] sm:$0xc] %vm523, %v1935
    %1939 = vrot.lane.b32.xlu0 %v1932, 32
    %v1940 = vpop.permute.xlu0 %1939
    %1942 = vst.msk [vmem:[#allocation9 + $0x8] sm:$0x30] %vm529, %v1940
    %v1943 = vrot.slane %v1932, 2
    %1944 = vrot.lane.b32.xlu0 %v1943, 32
    %v1945 = vpop.permute.xlu0 %1944
    %v1947 = vsel %vm122, %v1935, %v1945
    %v1949 = vrot.slane %v1947, 2
    %v1950 = vsel %vm217, %v1949, 0
    %1952 = vmatprep.subr.mxu0 %v1513
    %1953 = vmatpush1.msra.mxu0 %v1512
    %1954 = vmatprep.subr.mxu0 %v1515
    %1955 = vmatpush1.msra.mxu0 %v1514
    %1956 = vmatprep.subr.mxu0 %v1517
    %1957 = vmatpush1.msra.mxu0 %v1516
    %1958 = vmatprep.subr.mxu0 %v1519
    %1959 = vmatpush1.msra.mxu0 %v1518
    %1960 = vmatprep.subr.mxu0 %v1521
    %1961 = vmatpush1.msra.mxu0 %v1520
    %1962 = vmatprep.subr.mxu0 %v1523
    %1963 = vmatpush1.msra.mxu0 %v1522
    %1964 = vmatprep.subr.mxu0 %v1525
    %1965 = vmatpush1.msra.mxu0 %v1524
    %1966 = vmatprep.subr.mxu0 %v1527
    %1967 = vmatpush1.msra.mxu0 %v1526
    %1968 = vmatprep.subr.mxu0 0.0
    %1969 = vmatpush1.msra.mxu0 0.0
    %1970 = vmatprep.subr.mxu0 0.0
    %1971 = vmatpush1.msra.mxu0 0.0
    %1972 = vmatprep.subr.mxu0 0.0
    %1973 = vmatpush1.msra.mxu0 0.0
    %1974 = vmatprep.subr.mxu0 0.0
    %1975 = vmatpush1.msra.mxu0 0.0
    %1976 = vmatprep.subr.mxu0 0.0
    %1977 = vmatpush1.msra.mxu0 0.0
    %1978 = vmatprep.subr.mxu0 0.0
    %1979 = vmatpush1.msra.mxu0 0.0
    %1980 = vmatprep.subr.mxu0 0.0
    %1981 = vmatpush1.msra.mxu0 0.0
    %1982 = vmatprep.subr.mxu0 0.0
    %1983 = vmatpush1.msra.mxu0 0.0
    %1984 = vmatprep.subr.mxu0 0.0
    %1985 = vmatpush1.msra.mxu0 0.0
    %1986 = vmatprep.subr.mxu0 0.0
    %1987 = vmatpush1.msra.mxu0 0.0
    %1988 = vmatprep.subr.mxu0 0.0
    %1989 = vmatpush1.msra.mxu0 0.0
    %1990 = vmatprep.subr.mxu0 0.0
    %1991 = vmatpush1.msra.mxu0 0.0
    %1992 = vmatprep.subr.mxu0 0.0
    %1993 = vmatpush1.msra.mxu0 0.0
    %1994 = vmatprep.subr.mxu0 0.0
    %1995 = vmatpush1.msra.mxu0 0.0
    %1996 = vmatprep.subr.mxu0 0.0
    %1997 = vmatpush1.msra.mxu0 0.0
    %1998 = vmatprep.subr.mxu0 0.0
    %1999 = vmatpush1.msra.mxu0 0.0
    %2000 = vmatprep.subr.mxu0 0.0
    %2001 = vmatpush1.msra.mxu0 0.0
    %2002 = vmatprep.subr.mxu0 0.0
    %2003 = vmatpush1.msra.mxu0 0.0
    %2004 = vmatprep.subr.mxu0 0.0
    %2005 = vmatpush1.msra.mxu0 0.0
    %2006 = vmatprep.subr.mxu0 0.0
    %2007 = vmatpush1.msra.mxu0 0.0
    %2008 = vmatprep.subr.mxu0 0.0
    %2009 = vmatpush1.msra.mxu0 0.0
    %2010 = vmatprep.subr.mxu0 0.0
    %2011 = vmatpush1.msra.mxu0 0.0
    %2012 = vmatprep.subr.mxu0 0.0
    %2013 = vmatpush1.msra.mxu0 0.0
    %2014 = vmatprep.subr.mxu0 0.0
    %2015 = vmatpush1.msra.mxu0 0.0
    %2016 = vmatprep.mubr.f32.mxu0 0.0
    %2017 = vmatmul.mubr.f32.gmra.mrb[0].mxu0 %v1950
    %v2018 = vpop.f32.mrb[0].mxu0
    %v2019 = vadd.f32 %v1630, %v2018
    %v2020 = vpop.f32.mrb[0].mxu0
    %v2021 = vadd.f32 %v1634, %v2020
    %2022 = vdwg.mxu0
    %v2024 = vrot.slane %v2019, 4
    %v2026 = vadd.f32 %v1616, %v2024
    %v2027 = vxor.u32 %v2026, 2147483648
    %v2028 = vmul.f32 %v2027, 1.442695
    %v2029 = vpow.pop %v2028
    %v2030 = vadd.f32 %v2029, 1.0
    %v2031 = vrcp.pop %v2030
    %v2032 = vmul.f32 1.0, %v2031
    %2033 = vrot.lane.b32.xlu0 %v2024, 64
    %v2034 = vpop.permute.xlu0 %2033
    %v2036 = vmul.f32 %v2032, %v2034
    %2038 = vrot.lane.b32.xlu0 %v2036, 64
    %v2039 = vpop.permute.xlu0 %2038
    %v2041 = vadd.f32 %v1616, %v2039
    %v2042 = vtanh.pop %v2041
    %v2043 = vsub.f32 1.0, %v2032
    %2045 = vrot.lane.b32.xlu0 %v2042, 96
    %v2046 = vpop.permute.xlu0 %2045
    %v2048 = vmul.f32 %v2043, %v2046
    %v2049 = vrot.slane %v1947, 6
    %2050 = vrot.lane.b32.xlu0 %v2049, 32
    %v2051 = vpop.permute.xlu0 %2050
    %v2053 = vmul.f32 %v2032, %v2051
    %v2054 = vadd.f32 %v2048, %v2053
    %v2055 = vrot.slane %v2019, 6
    %v2057 = vadd.f32 %v1622, %v2055
    %v2058 = vxor.u32 %v2057, 2147483648
    %v2059 = vmul.f32 %v2058, 1.442695
    %v2060 = vpow.pop %v2059
    %v2061 = vadd.f32 %v2060, 1.0
    %v2062 = vrcp.pop %v2061
    %v2063 = vmul.f32 1.0, %v2062
    %v2065 = vrot.slane %v2021, 6
    %v2067 = vadd.f32 %v1624, %v2065
    %v2068 = vxor.u32 %v2067, 2147483648
    %v2069 = vmul.f32 %v2068, 1.442695
    %v2070 = vpow.pop %v2069
    %v2071 = vadd.f32 %v2070, 1.0
    %v2072 = vrcp.pop %v2071
    %v2073 = vmul.f32 1.0, %v2072
    %2074 = vrot.lane.b32.xlu0 %v2065, 64
    %v2075 = vpop.permute.xlu0 %2074
    %v2077 = vmul.f32 %v2063, %v2075
    %2079 = vrot.lane.b32.xlu0 %v2077, 64
    %v2080 = vpop.permute.xlu0 %2079
    %v2082 = vadd.f32 %v1624, %v2080
    %v2083 = vtanh.pop %v2082
    %v2084 = vsub.f32 1.0, %v2073
    %2086 = vrot.lane.b32.xlu0 %v2083, 96
    %v2087 = vpop.permute.xlu0 %2086
    %v2089 = vmul.f32 %v2084, %v2087
    %2090 = vrot.lane.b32.xlu0 %v1947, 96
    %v2091 = vpop.permute.xlu0 %2090
    %v2093 = vmul.f32 %v2073, %v2091
    %v2094 = vadd.f32 %v2089, %v2093
    %2096 = vrot.lane.b32.xlu0 %v2054, 96
    %v2097 = vpop.permute.xlu0 %2096
    %2099 = vst.msk [vmem:[#allocation9] sm:$0x30] %vm687, %v2097
    %2101 = vrot.lane.b32.xlu0 %v2094, 32
    %v2102 = vpop.permute.xlu0 %2101
    %2104 = vst.msk [vmem:[#allocation9 + $0x8] sm:$0xc] %vm693, %v2102
    %v2105 = vrot.slane %v2094, 6
    %2106 = vrot.lane.b32.xlu0 %v2105, 32
    %v2107 = vpop.permute.xlu0 %2106
    %v2109 = vsel %vm122, %v2097, %v2107
    %v2111 = vrot.slane %v2109, 4
    %v2112 = vsel %vm217, %v2111, 0
    %2114 = vmatprep.subr.mxu0 %v1513
    %2115 = vmatpush1.msra.mxu0 %v1512
    %2116 = vmatprep.subr.mxu0 %v1515
    %2117 = vmatpush1.msra.mxu0 %v1514
    %2118 = vmatprep.subr.mxu0 %v1517
    %2119 = vmatpush1.msra.mxu0 %v1516
    %2120 = vmatprep.subr.mxu0 %v1519
    %2121 = vmatpush1.msra.mxu0 %v1518
    %2122 = vmatprep.subr.mxu0 %v1521
    %2123 = vmatpush1.msra.mxu0 %v1520
    %2124 = vmatprep.subr.mxu0 %v1523
    %2125 = vmatpush1.msra.mxu0 %v1522
    %2126 = vmatprep.subr.mxu0 %v1525
    %2127 = vmatpush1.msra.mxu0 %v1524
    %2128 = vmatprep.subr.mxu0 %v1527
    %2129 = vmatpush1.msra.mxu0 %v1526
    %2130 = vmatprep.subr.mxu0 0.0
    %2131 = vmatpush1.msra.mxu0 0.0
    %2132 = vmatprep.subr.mxu0 0.0
    %2133 = vmatpush1.msra.mxu0 0.0
    %2134 = vmatprep.subr.mxu0 0.0
    %2135 = vmatpush1.msra.mxu0 0.0
    %2136 = vmatprep.subr.mxu0 0.0
    %2137 = vmatpush1.msra.mxu0 0.0
    %2138 = vmatprep.subr.mxu0 0.0
    %2139 = vmatpush1.msra.mxu0 0.0
    %2140 = vmatprep.subr.mxu0 0.0
    %2141 = vmatpush1.msra.mxu0 0.0
    %2142 = vmatprep.subr.mxu0 0.0
    %2143 = vmatpush1.msra.mxu0 0.0
    %2144 = vmatprep.subr.mxu0 0.0
    %2145 = vmatpush1.msra.mxu0 0.0
    %2146 = vmatprep.subr.mxu0 0.0
    %2147 = vmatpush1.msra.mxu0 0.0
    %2148 = vmatprep.subr.mxu0 0.0
    %2149 = vmatpush1.msra.mxu0 0.0
    %2150 = vmatprep.subr.mxu0 0.0
    %2151 = vmatpush1.msra.mxu0 0.0
    %2152 = vmatprep.subr.mxu0 0.0
    %2153 = vmatpush1.msra.mxu0 0.0
    %2154 = vmatprep.subr.mxu0 0.0
    %2155 = vmatpush1.msra.mxu0 0.0
    %2156 = vmatprep.subr.mxu0 0.0
    %2157 = vmatpush1.msra.mxu0 0.0
    %2158 = vmatprep.subr.mxu0 0.0
    %2159 = vmatpush1.msra.mxu0 0.0
    %2160 = vmatprep.subr.mxu0 0.0
    %2161 = vmatpush1.msra.mxu0 0.0
    %2162 = vmatprep.subr.mxu0 0.0
    %2163 = vmatpush1.msra.mxu0 0.0
    %2164 = vmatprep.subr.mxu0 0.0
    %2165 = vmatpush1.msra.mxu0 0.0
    %2166 = vmatprep.subr.mxu0 0.0
    %2167 = vmatpush1.msra.mxu0 0.0
    %2168 = vmatprep.subr.mxu0 0.0
    %2169 = vmatpush1.msra.mxu0 0.0
    %2170 = vmatprep.subr.mxu0 0.0
    %2171 = vmatpush1.msra.mxu0 0.0
    %2172 = vmatprep.subr.mxu0 0.0
    %2173 = vmatpush1.msra.mxu0 0.0
    %2174 = vmatprep.subr.mxu0 0.0
    %2175 = vmatpush1.msra.mxu0 0.0
    %2176 = vmatprep.subr.mxu0 0.0
    %2177 = vmatpush1.msra.mxu0 0.0
    %2178 = vmatprep.mubr.f32.mxu0 0.0
    %2179 = vmatmul.mubr.f32.gmra.mrb[0].mxu0 %v2112
    %v2180 = vpop.f32.mrb[0].mxu0
    %v2181 = vadd.f32 %v1630, %v2180
    %v2182 = vpop.f32.mrb[0].mxu0
    %v2183 = vadd.f32 %v1634, %v2182
    %2184 = vdwg.mxu0
    %v2186 = vrot.slane %v2181, 2
    %v2188 = vadd.f32 %v1616, %v2186
    %v2189 = vxor.u32 %v2188, 2147483648
    %v2190 = vmul.f32 %v2189, 1.442695
    %v2191 = vpow.pop %v2190
    %v2192 = vadd.f32 %v2191, 1.0
    %v2193 = vrcp.pop %v2192
    %v2194 = vmul.f32 1.0, %v2193
    %2195 = vrot.lane.b32.xlu0 %v2186, 64
    %v2196 = vpop.permute.xlu0 %2195
    %v2198 = vmul.f32 %v2194, %v2196
    %2200 = vrot.lane.b32.xlu0 %v2198, 64
    %v2201 = vpop.permute.xlu0 %2200
    %v2203 = vadd.f32 %v1616, %v2201
    %v2204 = vtanh.pop %v2203
    %v2205 = vsub.f32 1.0, %v2194
    %2207 = vrot.lane.b32.xlu0 %v2204, 96
    %v2208 = vpop.permute.xlu0 %2207
    %v2210 = vmul.f32 %v2205, %v2208
    %v2211 = vrot.slane %v2109, 6
    %2212 = vrot.lane.b32.xlu0 %v2211, 32
    %v2213 = vpop.permute.xlu0 %2212
    %v2215 = vmul.f32 %v2194, %v2213
    %v2216 = vadd.f32 %v2210, %v2215
    %v2217 = vadd.f32 %v1622, %v2181
    %v2218 = vxor.u32 %v2217, 2147483648
    %v2219 = vmul.f32 %v2218, 1.442695
    %v2220 = vpow.pop %v2219
    %v2221 = vadd.f32 %v2220, 1.0
    %v2222 = vrcp.pop %v2221
    %v2223 = vmul.f32 1.0, %v2222
    %v2224 = vadd.f32 %v1624, %v2183
    %v2225 = vxor.u32 %v2224, 2147483648
    %v2226 = vmul.f32 %v2225, 1.442695
    %v2227 = vpow.pop %v2226
    %v2228 = vadd.f32 %v2227, 1.0
    %v2229 = vrcp.pop %v2228
    %v2230 = vmul.f32 1.0, %v2229
    %2232 = vrot.lane.b32.xlu0 %v2183, 64
    %v2233 = vpop.permute.xlu0 %2232
    %v2235 = vmul.f32 %v2223, %v2233
    %2237 = vrot.lane.b32.xlu0 %v2235, 64
    %v2238 = vpop.permute.xlu0 %2237
    %v2240 = vadd.f32 %v1624, %v2238
    %v2241 = vtanh.pop %v2240
    %v2242 = vsub.f32 1.0, %v2230
    %2244 = vrot.lane.b32.xlu0 %v2241, 96
    %v2245 = vpop.permute.xlu0 %2244
    %v2247 = vmul.f32 %v2242, %v2245
    %2248 = vrot.lane.b32.xlu0 %v2111, 96
    %v2249 = vpop.permute.xlu0 %2248
    %v2251 = vmul.f32 %v2230, %v2249
    %v2252 = vadd.f32 %v2247, %v2251
    %2254 = vrot.lane.b32.xlu0 %v2216, 96
    %v2255 = vpop.permute.xlu0 %2254
    %2257 = vst.msk [vmem:[#allocation9] sm:$0xc0] %vm847, %v2255
    %2259 = vrot.lane.b32.xlu0 %v2252, 32
    %v2260 = vpop.permute.xlu0 %2259
    %2262 = vst.msk [vmem:[#allocation9 + $0x8] sm:$0x3] %vm853, %v2260
    %v2263 = vrot.slane %v2252, 2
    %2264 = vrot.lane.b32.xlu0 %v2263, 32
    %v2265 = vpop.permute.xlu0 %2264
    %v2267 = vsel %vm122, %v2255, %v2265
    %v2269 = vrot.slane %v2267, 6
    %v2270 = vsel %vm217, %v2269, 0
    %2272 = vmatprep.subr.mxu0 %v1513
    %2273 = vmatpush1.msra.mxu0 %v1512
    %2274 = vmatprep.subr.mxu0 %v1515
    %2275 = vmatpush1.msra.mxu0 %v1514
    %2276 = vmatprep.subr.mxu0 %v1517
    %2277 = vmatpush1.msra.mxu0 %v1516
    %2278 = vmatprep.subr.mxu0 %v1519
    %2279 = vmatpush1.msra.mxu0 %v1518
    %2280 = vmatprep.subr.mxu0 %v1521
    %2281 = vmatpush1.msra.mxu0 %v1520
    %2282 = vmatprep.subr.mxu0 %v1523
    %2283 = vmatpush1.msra.mxu0 %v1522
    %2284 = vmatprep.subr.mxu0 %v1525
    %2285 = vmatpush1.msra.mxu0 %v1524
    %2286 = vmatprep.subr.mxu0 %v1527
    %2287 = vmatpush1.msra.mxu0 %v1526
    %2288 = vmatprep.subr.mxu0 0.0
    %2289 = vmatpush1.msra.mxu0 0.0
    %2290 = vmatprep.subr.mxu0 0.0
    %2291 = vmatpush1.msra.mxu0 0.0
    %2292 = vmatprep.subr.mxu0 0.0
    %2293 = vmatpush1.msra.mxu0 0.0
    %2294 = vmatprep.subr.mxu0 0.0
    %2295 = vmatpush1.msra.mxu0 0.0
    %2296 = vmatprep.subr.mxu0 0.0
    %2297 = vmatpush1.msra.mxu0 0.0
    %2298 = vmatprep.subr.mxu0 0.0
    %2299 = vmatpush1.msra.mxu0 0.0
    %2300 = vmatprep.subr.mxu0 0.0
    %2301 = vmatpush1.msra.mxu0 0.0
    %2302 = vmatprep.subr.mxu0 0.0
    %2303 = vmatpush1.msra.mxu0 0.0
    %2304 = vmatprep.subr.mxu0 0.0
    %2305 = vmatpush1.msra.mxu0 0.0
    %2306 = vmatprep.subr.mxu0 0.0
    %2307 = vmatpush1.msra.mxu0 0.0
    %2308 = vmatprep.subr.mxu0 0.0
    %2309 = vmatpush1.msra.mxu0 0.0
    %2310 = vmatprep.subr.mxu0 0.0
    %2311 = vmatpush1.msra.mxu0 0.0
    %2312 = vmatprep.subr.mxu0 0.0
    %2313 = vmatpush1.msra.mxu0 0.0
    %2314 = vmatprep.subr.mxu0 0.0
    %2315 = vmatpush1.msra.mxu0 0.0
    %2316 = vmatprep.subr.mxu0 0.0
    %2317 = vmatpush1.msra.mxu0 0.0
    %2318 = vmatprep.subr.mxu0 0.0
    %2319 = vmatpush1.msra.mxu0 0.0
    %2320 = vmatprep.subr.mxu0 0.0
    %2321 = vmatpush1.msra.mxu0 0.0
    %2322 = vmatprep.subr.mxu0 0.0
    %2323 = vmatpush1.msra.mxu0 0.0
    %2324 = vmatprep.subr.mxu0 0.0
    %2325 = vmatpush1.msra.mxu0 0.0
    %2326 = vmatprep.subr.mxu0 0.0
    %2327 = vmatpush1.msra.mxu0 0.0
    %2328 = vmatprep.subr.mxu0 0.0
    %2329 = vmatpush1.msra.mxu0 0.0
    %2330 = vmatprep.subr.mxu0 0.0
    %2331 = vmatpush1.msra.mxu0 0.0
    %2332 = vmatprep.subr.mxu0 0.0
    %2333 = vmatpush1.msra.mxu0 0.0
    %2334 = vmatprep.subr.mxu0 0.0
    %2335 = vmatpush1.msra.mxu0 0.0
    %2336 = vmatprep.mubr.f32.mxu0 0.0
    %2337 = vmatmul.mubr.f32.gmra.mrb[0].mxu0 %v2270
    %v2338 = vpop.f32.mrb[0].mxu0
    %v2339 = vadd.f32 %v1630, %v2338
    %v2340 = vpop.f32.mrb[0].mxu0
    %v2341 = vadd.f32 %v1634, %v2340
    %2342 = vdwg.mxu0
    %v2343 = vadd.f32 %v1622, %v2339
    %v2344 = vxor.u32 %v2343, 2147483648
    %v2345 = vmul.f32 %v2344, 1.442695
    %v2346 = vpow.pop %v2345
    %v2347 = vadd.f32 %v2346, 1.0
    %v2348 = vrcp.pop %v2347
    %v2349 = vmul.f32 1.0, %v2348
    %2351 = vrot.lane.b32.xlu0 %v2339, 64
    %v2352 = vpop.permute.xlu0 %2351
    %v2354 = vmul.f32 %v2349, %v2352
    %2356 = vrot.lane.b32.xlu0 %v2354, 64
    %v2357 = vpop.permute.xlu0 %2356
    %v2359 = vadd.f32 %v1622, %v2357
    %v2360 = vtanh.pop %v2359
    %v2361 = vsub.f32 1.0, %v2349
    %2363 = vrot.lane.b32.xlu0 %v2360, 96
    %v2364 = vpop.permute.xlu0 %2363
    %v2366 = vmul.f32 %v2361, %v2364
    %2367 = vrot.lane.b32.xlu0 %v2269, 32
    %v2368 = vpop.permute.xlu0 %2367
    %v2370 = vmul.f32 %v2349, %v2368
    %v2371 = vadd.f32 %v2366, %v2370
    %v2372 = vrot.slane %v2339, 2
    %v2374 = vadd.f32 %v1616, %v2372
    %v2375 = vxor.u32 %v2374, 2147483648
    %v2376 = vmul.f32 %v2375, 1.442695
    %v2377 = vpow.pop %v2376
    %v2378 = vadd.f32 %v2377, 1.0
    %v2379 = vrcp.pop %v2378
    %v2380 = vmul.f32 1.0, %v2379
    %v2382 = vrot.slane %v2341, 2
    %v2384 = vadd.f32 %v1618, %v2382
    %v2385 = vxor.u32 %v2384, 2147483648
    %v2386 = vmul.f32 %v2385, 1.442695
    %v2387 = vpow.pop %v2386
    %v2388 = vadd.f32 %v2387, 1.0
    %v2389 = vrcp.pop %v2388
    %v2390 = vmul.f32 1.0, %v2389
    %2391 = vrot.lane.b32.xlu0 %v2382, 64
    %v2392 = vpop.permute.xlu0 %2391
    %v2394 = vmul.f32 %v2380, %v2392
    %2396 = vrot.lane.b32.xlu0 %v2394, 64
    %v2397 = vpop.permute.xlu0 %2396
    %v2399 = vadd.f32 %v1618, %v2397
    %v2400 = vtanh.pop %v2399
    %v2401 = vsub.f32 1.0, %v2390
    %2403 = vrot.lane.b32.xlu0 %v2400, 96
    %v2404 = vpop.permute.xlu0 %2403
    %v2406 = vmul.f32 %v2401, %v2404
    %2407 = vrot.lane.b32.xlu0 %v2267, 96
    %v2408 = vpop.permute.xlu0 %2407
    %v2410 = vmul.f32 %v2390, %v2408
    %v2411 = vadd.f32 %v2406, %v2410
    %2413 = vrot.lane.b32.xlu0 %v2371, 96
    %v2414 = vpop.permute.xlu0 %2413
    %2416 = vst.msk [vmem:[#allocation9 + $0x8] sm:$0x3] %vm359, %v2414
    %2418 = vrot.lane.b32.xlu0 %v2411, 32
    %v2419 = vpop.permute.xlu0 %2418
    %2421 = vst.msk [vmem:[#allocation9] sm:$0xc0] %vm365, %v2419
    %v2422 = vrot.slane %v2411, 6
    %2423 = vrot.lane.b32.xlu0 %v2422, 32
    %v2424 = vpop.permute.xlu0 %2423
    %v2426 = vsel %vm122, %v2414, %v2424
    %v2428 = vsel %vm217, %v2426, 0
    %2430 = vmatprep.subr.mxu0 %v1513
    %2431 = vmatpush1.msra.mxu0 %v1512
    %2432 = vmatprep.subr.mxu0 %v1515
    %2433 = vmatpush1.msra.mxu0 %v1514
    %2434 = vmatprep.subr.mxu0 %v1517
    %2435 = vmatpush1.msra.mxu0 %v1516
    %2436 = vmatprep.subr.mxu0 %v1519
    %2437 = vmatpush1.msra.mxu0 %v1518
    %2438 = vmatprep.subr.mxu0 %v1521
    %2439 = vmatpush1.msra.mxu0 %v1520
    %2440 = vmatprep.subr.mxu0 %v1523
    %2441 = vmatpush1.msra.mxu0 %v1522
    %2442 = vmatprep.subr.mxu0 %v1525
    %2443 = vmatpush1.msra.mxu0 %v1524
    %2444 = vmatprep.subr.mxu0 %v1527
    %2445 = vmatpush1.msra.mxu0 %v1526
    %2446 = vmatprep.subr.mxu0 0.0
    %2447 = vmatpush1.msra.mxu0 0.0
    %2448 = vmatprep.subr.mxu0 0.0
    %2449 = vmatpush1.msra.mxu0 0.0
    %2450 = vmatprep.subr.mxu0 0.0
    %2451 = vmatpush1.msra.mxu0 0.0
    %2452 = vmatprep.subr.mxu0 0.0
    %2453 = vmatpush1.msra.mxu0 0.0
    %2454 = vmatprep.subr.mxu0 0.0
    %2455 = vmatpush1.msra.mxu0 0.0
    %2456 = vmatprep.subr.mxu0 0.0
    %2457 = vmatpush1.msra.mxu0 0.0
    %2458 = vmatprep.subr.mxu0 0.0
    %2459 = vmatpush1.msra.mxu0 0.0
    %2460 = vmatprep.subr.mxu0 0.0
    %2461 = vmatpush1.msra.mxu0 0.0
    %2462 = vmatprep.subr.mxu0 0.0
    %2463 = vmatpush1.msra.mxu0 0.0
    %2464 = vmatprep.subr.mxu0 0.0
    %2465 = vmatpush1.msra.mxu0 0.0
    %2466 = vmatprep.subr.mxu0 0.0
    %2467 = vmatpush1.msra.mxu0 0.0
    %2468 = vmatprep.subr.mxu0 0.0
    %2469 = vmatpush1.msra.mxu0 0.0
    %2470 = vmatprep.subr.mxu0 0.0
    %2471 = vmatpush1.msra.mxu0 0.0
    %2472 = vmatprep.subr.mxu0 0.0
    %2473 = vmatpush1.msra.mxu0 0.0
    %2474 = vmatprep.subr.mxu0 0.0
    %2475 = vmatpush1.msra.mxu0 0.0
    %2476 = vmatprep.subr.mxu0 0.0
    %2477 = vmatpush1.msra.mxu0 0.0
    %2478 = vmatprep.subr.mxu0 0.0
    %2479 = vmatpush1.msra.mxu0 0.0
    %2480 = vmatprep.subr.mxu0 0.0
    %2481 = vmatpush1.msra.mxu0 0.0
    %2482 = vmatprep.subr.mxu0 0.0
    %2483 = vmatpush1.msra.mxu0 0.0
    %2484 = vmatprep.subr.mxu0 0.0
    %2485 = vmatpush1.msra.mxu0 0.0
    %2486 = vmatprep.subr.mxu0 0.0
    %2487 = vmatpush1.msra.mxu0 0.0
    %2488 = vmatprep.subr.mxu0 0.0
    %2489 = vmatpush1.msra.mxu0 0.0
    %2490 = vmatprep.subr.mxu0 0.0
    %2491 = vmatpush1.msra.mxu0 0.0
    %2492 = vmatprep.subr.mxu0 0.0
    %2493 = vmatpush1.msra.mxu0 0.0
    %2494 = vmatprep.mubr.f32.mxu0 0.0
    %2495 = vmatmul.mubr.f32.gmra.mrb[0].mxu0 %v2428
    %v2496 = vpop.f32.mrb[0].mxu0
    %v2497 = vadd.f32 %v1630, %v2496
    %v2498 = vpop.f32.mrb[0].mxu0
    %v2499 = vadd.f32 %v1634, %v2498
    %2500 = vdwg.mxu0
    %v2502 = vrot.slane %v2497, 6
    %v2504 = vadd.f32 %v1622, %v2502
    %v2505 = vxor.u32 %v2504, 2147483648
    %v2506 = vmul.f32 %v2505, 1.442695
    %v2507 = vpow.pop %v2506
    %v2508 = vadd.f32 %v2507, 1.0
    %v2509 = vrcp.pop %v2508
    %v2510 = vmul.f32 1.0, %v2509
    %2511 = vrot.lane.b32.xlu0 %v2502, 64
    %v2512 = vpop.permute.xlu0 %2511
    %v2514 = vmul.f32 %v2510, %v2512
    %2516 = vrot.lane.b32.xlu0 %v2514, 64
    %v2517 = vpop.permute.xlu0 %2516
    %v2519 = vadd.f32 %v1622, %v2517
    %v2520 = vtanh.pop %v2519
    %v2521 = vsub.f32 1.0, %v2510
    %2523 = vrot.lane.b32.xlu0 %v2520, 96
    %v2524 = vpop.permute.xlu0 %2523
    %v2526 = vmul.f32 %v2521, %v2524
    %v2527 = vrot.slane %v2426, 6
    %2528 = vrot.lane.b32.xlu0 %v2527, 32
    %v2529 = vpop.permute.xlu0 %2528
    %v2531 = vmul.f32 %v2510, %v2529
    %v2532 = vadd.f32 %v2526, %v2531
    %v2533 = vrot.slane %v2497, 4
    %v2535 = vadd.f32 %v1616, %v2533
    %v2536 = vxor.u32 %v2535, 2147483648
    %v2537 = vmul.f32 %v2536, 1.442695
    %v2538 = vpow.pop %v2537
    %v2539 = vadd.f32 %v2538, 1.0
    %v2540 = vrcp.pop %v2539
    %v2541 = vmul.f32 1.0, %v2540
    %v2543 = vrot.slane %v2499, 4
    %v2545 = vadd.f32 %v1618, %v2543
    %v2546 = vxor.u32 %v2545, 2147483648
    %v2547 = vmul.f32 %v2546, 1.442695
    %v2548 = vpow.pop %v2547
    %v2549 = vadd.f32 %v2548, 1.0
    %v2550 = vrcp.pop %v2549
    %v2551 = vmul.f32 1.0, %v2550
    %2552 = vrot.lane.b32.xlu0 %v2543, 64
    %v2553 = vpop.permute.xlu0 %2552
    %v2555 = vmul.f32 %v2541, %v2553
    %2557 = vrot.lane.b32.xlu0 %v2555, 64
    %v2558 = vpop.permute.xlu0 %2557
    %v2560 = vadd.f32 %v1618, %v2558
    %v2561 = vtanh.pop %v2560
    %v2562 = vsub.f32 1.0, %v2551
    %2564 = vrot.lane.b32.xlu0 %v2561, 96
    %v2565 = vpop.permute.xlu0 %2564
    %v2567 = vmul.f32 %v2562, %v2565
    %v2568 = vrot.slane %v2426, 4
    %2569 = vrot.lane.b32.xlu0 %v2568, 96
    %v2570 = vpop.permute.xlu0 %2569
    %v2572 = vmul.f32 %v2551, %v2570
    %v2573 = vadd.f32 %v2567, %v2572
    %2575 = vrot.lane.b32.xlu0 %v2532, 96
    %v2576 = vpop.permute.xlu0 %2575
    %2578 = vst.msk [vmem:[#allocation9 + $0x8] sm:$0xc] %vm523, %v2576
    %2580 = vrot.lane.b32.xlu0 %v2573, 32
    %v2581 = vpop.permute.xlu0 %2580
    %2583 = vst.msk [vmem:[#allocation9] sm:$0x30] %vm529, %v2581
    %v2584 = vrot.slane %v2573, 2
    %2585 = vrot.lane.b32.xlu0 %v2584, 32
    %v2586 = vpop.permute.xlu0 %2585
    %v2588 = vsel %vm122, %v2576, %v2586
    %v2590 = vrot.slane %v2588, 2
    %v2591 = vsel %vm217, %v2590, 0
    %2593 = vmatprep.subr.mxu0 %v1513
    %2594 = vmatpush1.msra.mxu0 %v1512
    %2595 = vmatprep.subr.mxu0 %v1515
    %2596 = vmatpush1.msra.mxu0 %v1514
    %2597 = vmatprep.subr.mxu0 %v1517
    %2598 = vmatpush1.msra.mxu0 %v1516
    %2599 = vmatprep.subr.mxu0 %v1519
    %2600 = vmatpush1.msra.mxu0 %v1518
    %2601 = vmatprep.subr.mxu0 %v1521
    %2602 = vmatpush1.msra.mxu0 %v1520
    %2603 = vmatprep.subr.mxu0 %v1523
    %2604 = vmatpush1.msra.mxu0 %v1522
    %2605 = vmatprep.subr.mxu0 %v1525
    %2606 = vmatpush1.msra.mxu0 %v1524
    %2607 = vmatprep.subr.mxu0 %v1527
    %2608 = vmatpush1.msra.mxu0 %v1526
    %2609 = vmatprep.subr.mxu0 0.0
    %2610 = vmatpush1.msra.mxu0 0.0
    %2611 = vmatprep.subr.mxu0 0.0
    %2612 = vmatpush1.msra.mxu0 0.0
    %2613 = vmatprep.subr.mxu0 0.0
    %2614 = vmatpush1.msra.mxu0 0.0
    %2615 = vmatprep.subr.mxu0 0.0
    %2616 = vmatpush1.msra.mxu0 0.0
    %2617 = vmatprep.subr.mxu0 0.0
    %2618 = vmatpush1.msra.mxu0 0.0
    %2619 = vmatprep.subr.mxu0 0.0
    %2620 = vmatpush1.msra.mxu0 0.0
    %2621 = vmatprep.subr.mxu0 0.0
    %2622 = vmatpush1.msra.mxu0 0.0
    %2623 = vmatprep.subr.mxu0 0.0
    %2624 = vmatpush1.msra.mxu0 0.0
    %2625 = vmatprep.subr.mxu0 0.0
    %2626 = vmatpush1.msra.mxu0 0.0
    %2627 = vmatprep.subr.mxu0 0.0
    %2628 = vmatpush1.msra.mxu0 0.0
    %2629 = vmatprep.subr.mxu0 0.0
    %2630 = vmatpush1.msra.mxu0 0.0
    %2631 = vmatprep.subr.mxu0 0.0
    %2632 = vmatpush1.msra.mxu0 0.0
    %2633 = vmatprep.subr.mxu0 0.0
    %2634 = vmatpush1.msra.mxu0 0.0
    %2635 = vmatprep.subr.mxu0 0.0
    %2636 = vmatpush1.msra.mxu0 0.0
    %2637 = vmatprep.subr.mxu0 0.0
    %2638 = vmatpush1.msra.mxu0 0.0
    %2639 = vmatprep.subr.mxu0 0.0
    %2640 = vmatpush1.msra.mxu0 0.0
    %2641 = vmatprep.subr.mxu0 0.0
    %2642 = vmatpush1.msra.mxu0 0.0
    %2643 = vmatprep.subr.mxu0 0.0
    %2644 = vmatpush1.msra.mxu0 0.0
    %2645 = vmatprep.subr.mxu0 0.0
    %2646 = vmatpush1.msra.mxu0 0.0
    %2647 = vmatprep.subr.mxu0 0.0
    %2648 = vmatpush1.msra.mxu0 0.0
    %2649 = vmatprep.subr.mxu0 0.0
    %2650 = vmatpush1.msra.mxu0 0.0
    %2651 = vmatprep.subr.mxu0 0.0
    %2652 = vmatpush1.msra.mxu0 0.0
    %2653 = vmatprep.subr.mxu0 0.0
    %2654 = vmatpush1.msra.mxu0 0.0
    %2655 = vmatprep.subr.mxu0 0.0
    %2656 = vmatpush1.msra.mxu0 0.0
    %2657 = vmatprep.mubr.f32.mxu0 0.0
    %2658 = vmatmul.mubr.f32.gmra.mrb[0].mxu0 %v2591
    %v2659 = vpop.f32.mrb[0].mxu0
    %v2660 = vadd.f32 %v1630, %v2659
    %v2661 = vpop.f32.mrb[0].mxu0
    %v2662 = vadd.f32 %v1634, %v2661
    %2663 = vdwg.mxu0
    %v2665 = vrot.slane %v2660, 4
    %v2667 = vadd.f32 %v1622, %v2665
    %v2668 = vxor.u32 %v2667, 2147483648
    %v2669 = vmul.f32 %v2668, 1.442695
    %v2670 = vpow.pop %v2669
    %v2671 = vadd.f32 %v2670, 1.0
    %v2672 = vrcp.pop %v2671
    %v2673 = vmul.f32 1.0, %v2672
    %2674 = vrot.lane.b32.xlu0 %v2665, 64
    %v2675 = vpop.permute.xlu0 %2674
    %v2677 = vmul.f32 %v2673, %v2675
    %2679 = vrot.lane.b32.xlu0 %v2677, 64
    %v2680 = vpop.permute.xlu0 %2679
    %v2682 = vadd.f32 %v1622, %v2680
    %v2683 = vtanh.pop %v2682
    %v2684 = vsub.f32 1.0, %v2673
    %2686 = vrot.lane.b32.xlu0 %v2683, 96
    %v2687 = vpop.permute.xlu0 %2686
    %v2689 = vmul.f32 %v2684, %v2687
    %v2690 = vrot.slane %v2588, 6
    %2691 = vrot.lane.b32.xlu0 %v2690, 32
    %v2692 = vpop.permute.xlu0 %2691
    %v2694 = vmul.f32 %v2673, %v2692
    %v2695 = vadd.f32 %v2689, %v2694
    %v2696 = vrot.slane %v2660, 6
    %v2698 = vadd.f32 %v1616, %v2696
    %v2699 = vxor.u32 %v2698, 2147483648
    %v2700 = vmul.f32 %v2699, 1.442695
    %v2701 = vpow.pop %v2700
    %v2702 = vadd.f32 %v2701, 1.0
    %v2703 = vrcp.pop %v2702
    %v2704 = vmul.f32 1.0, %v2703
    %v2706 = vrot.slane %v2662, 6
    %v2708 = vadd.f32 %v1618, %v2706
    %v2709 = vxor.u32 %v2708, 2147483648
    %v2710 = vmul.f32 %v2709, 1.442695
    %v2711 = vpow.pop %v2710
    %v2712 = vadd.f32 %v2711, 1.0
    %v2713 = vrcp.pop %v2712
    %v2714 = vmul.f32 1.0, %v2713
    %2715 = vrot.lane.b32.xlu0 %v2706, 64
    %v2716 = vpop.permute.xlu0 %2715
    %v2718 = vmul.f32 %v2704, %v2716
    %2720 = vrot.lane.b32.xlu0 %v2718, 64
    %v2721 = vpop.permute.xlu0 %2720
    %v2723 = vadd.f32 %v1618, %v2721
    %v2724 = vtanh.pop %v2723
    %v2725 = vsub.f32 1.0, %v2714
    %2727 = vrot.lane.b32.xlu0 %v2724, 96
    %v2728 = vpop.permute.xlu0 %2727
    %v2730 = vmul.f32 %v2725, %v2728
    %2731 = vrot.lane.b32.xlu0 %v2588, 96
    %v2732 = vpop.permute.xlu0 %2731
    %v2734 = vmul.f32 %v2714, %v2732
    %v2735 = vadd.f32 %v2730, %v2734
    %2737 = vrot.lane.b32.xlu0 %v2695, 96
    %v2738 = vpop.permute.xlu0 %2737
    %2740 = vst.msk [vmem:[#allocation9 + $0x8] sm:$0x30] %vm687, %v2738
    %2742 = vrot.lane.b32.xlu0 %v2735, 32
    %v2743 = vpop.permute.xlu0 %2742
    %2745 = vst.msk [vmem:[#allocation9] sm:$0xc] %vm693, %v2743
    %v2746 = vrot.slane %v2735, 6
    %2747 = vrot.lane.b32.xlu0 %v2746, 32
    %v2748 = vpop.permute.xlu0 %2747
    %v2750 = vsel %vm122, %v2738, %v2748
    %v2752 = vrot.slane %v2750, 4
    %v2753 = vsel %vm217, %v2752, 0
    %2755 = vmatprep.subr.mxu0 %v1513
    %2756 = vmatpush1.msra.mxu0 %v1512
    %2757 = vmatprep.subr.mxu0 %v1515
    %2758 = vmatpush1.msra.mxu0 %v1514
    %2759 = vmatprep.subr.mxu0 %v1517
    %2760 = vmatpush1.msra.mxu0 %v1516
    %2761 = vmatprep.subr.mxu0 %v1519
    %2762 = vmatpush1.msra.mxu0 %v1518
    %2763 = vmatprep.subr.mxu0 %v1521
    %2764 = vmatpush1.msra.mxu0 %v1520
    %2765 = vmatprep.subr.mxu0 %v1523
    %2766 = vmatpush1.msra.mxu0 %v1522
    %2767 = vmatprep.subr.mxu0 %v1525
    %2768 = vmatpush1.msra.mxu0 %v1524
    %2769 = vmatprep.subr.mxu0 %v1527
    %2770 = vmatpush1.msra.mxu0 %v1526
    %2771 = vmatprep.subr.mxu0 0.0
    %2772 = vmatpush1.msra.mxu0 0.0
    %2773 = vmatprep.subr.mxu0 0.0
    %2774 = vmatpush1.msra.mxu0 0.0
    %2775 = vmatprep.subr.mxu0 0.0
    %2776 = vmatpush1.msra.mxu0 0.0
    %2777 = vmatprep.subr.mxu0 0.0
    %2778 = vmatpush1.msra.mxu0 0.0
    %2779 = vmatprep.subr.mxu0 0.0
    %2780 = vmatpush1.msra.mxu0 0.0
    %2781 = vmatprep.subr.mxu0 0.0
    %2782 = vmatpush1.msra.mxu0 0.0
    %2783 = vmatprep.subr.mxu0 0.0
    %2784 = vmatpush1.msra.mxu0 0.0
    %2785 = vmatprep.subr.mxu0 0.0
    %2786 = vmatpush1.msra.mxu0 0.0
    %2787 = vmatprep.subr.mxu0 0.0
    %2788 = vmatpush1.msra.mxu0 0.0
    %2789 = vmatprep.subr.mxu0 0.0
    %2790 = vmatpush1.msra.mxu0 0.0
    %2791 = vmatprep.subr.mxu0 0.0
    %2792 = vmatpush1.msra.mxu0 0.0
    %2793 = vmatprep.subr.mxu0 0.0
    %2794 = vmatpush1.msra.mxu0 0.0
    %2795 = vmatprep.subr.mxu0 0.0
    %2796 = vmatpush1.msra.mxu0 0.0
    %2797 = vmatprep.subr.mxu0 0.0
    %2798 = vmatpush1.msra.mxu0 0.0
    %2799 = vmatprep.subr.mxu0 0.0
    %2800 = vmatpush1.msra.mxu0 0.0
    %2801 = vmatprep.subr.mxu0 0.0
    %2802 = vmatpush1.msra.mxu0 0.0
    %2803 = vmatprep.subr.mxu0 0.0
    %2804 = vmatpush1.msra.mxu0 0.0
    %2805 = vmatprep.subr.mxu0 0.0
    %2806 = vmatpush1.msra.mxu0 0.0
    %2807 = vmatprep.subr.mxu0 0.0
    %2808 = vmatpush1.msra.mxu0 0.0
    %2809 = vmatprep.subr.mxu0 0.0
    %2810 = vmatpush1.msra.mxu0 0.0
    %2811 = vmatprep.subr.mxu0 0.0
    %2812 = vmatpush1.msra.mxu0 0.0
    %2813 = vmatprep.subr.mxu0 0.0
    %2814 = vmatpush1.msra.mxu0 0.0
    %2815 = vmatprep.subr.mxu0 0.0
    %2816 = vmatpush1.msra.mxu0 0.0
    %2817 = vmatprep.subr.mxu0 0.0
    %2818 = vmatpush1.msra.mxu0 0.0
    %2819 = vmatprep.mubr.f32.mxu0 0.0
    %2820 = vmatmul.mubr.f32.gmra.mrb[0].mxu0 %v2753
    %v2821 = vpop.f32.mrb[0].mxu0
    %v2822 = vadd.f32 %v1630, %v2821
    %v2823 = vpop.f32.mrb[0].mxu0
    %v2824 = vadd.f32 %v1634, %v2823
    %2825 = vdwg.mxu0
    %v2827 = vrot.slane %v2822, 2
    %v2829 = vadd.f32 %v1622, %v2827
    %v2830 = vxor.u32 %v2829, 2147483648
    %v2831 = vmul.f32 %v2830, 1.442695
    %v2832 = vpow.pop %v2831
    %v2833 = vadd.f32 %v2832, 1.0
    %v2834 = vrcp.pop %v2833
    %v2835 = vmul.f32 1.0, %v2834
    %2836 = vrot.lane.b32.xlu0 %v2827, 64
    %v2837 = vpop.permute.xlu0 %2836
    %v2839 = vmul.f32 %v2835, %v2837
    %2841 = vrot.lane.b32.xlu0 %v2839, 64
    %v2842 = vpop.permute.xlu0 %2841
    %v2844 = vadd.f32 %v1622, %v2842
    %v2845 = vtanh.pop %v2844
    %v2846 = vsub.f32 1.0, %v2835
    %2848 = vrot.lane.b32.xlu0 %v2845, 96
    %v2849 = vpop.permute.xlu0 %2848
    %v2851 = vmul.f32 %v2846, %v2849
    %v2852 = vrot.slane %v2750, 6
    %2853 = vrot.lane.b32.xlu0 %v2852, 32
    %v2854 = vpop.permute.xlu0 %2853
    %v2856 = vmul.f32 %v2835, %v2854
    %v2857 = vadd.f32 %v2851, %v2856
    %v2858 = vadd.f32 %v1616, %v2822
    %v2859 = vxor.u32 %v2858, 2147483648
    %v2860 = vmul.f32 %v2859, 1.442695
    %v2861 = vpow.pop %v2860
    %v2862 = vadd.f32 %v2861, 1.0
    %v2863 = vrcp.pop %v2862
    %v2864 = vmul.f32 1.0, %v2863
    %v2865 = vadd.f32 %v1618, %v2824
    %v2866 = vxor.u32 %v2865, 2147483648
    %v2867 = vmul.f32 %v2866, 1.442695
    %v2868 = vpow.pop %v2867
    %v2869 = vadd.f32 %v2868, 1.0
    %v2870 = vrcp.pop %v2869
    %v2871 = vmul.f32 1.0, %v2870
    %2873 = vrot.lane.b32.xlu0 %v2824, 64
    %v2874 = vpop.permute.xlu0 %2873
    %v2876 = vmul.f32 %v2864, %v2874
    %2878 = vrot.lane.b32.xlu0 %v2876, 64
    %v2879 = vpop.permute.xlu0 %2878
    %v2881 = vadd.f32 %v1618, %v2879
    %v2882 = vtanh.pop %v2881
    %v2883 = vsub.f32 1.0, %v2871
    %2885 = vrot.lane.b32.xlu0 %v2882, 96
    %v2886 = vpop.permute.xlu0 %2885
    %v2888 = vmul.f32 %v2883, %v2886
    %2889 = vrot.lane.b32.xlu0 %v2752, 96
    %v2890 = vpop.permute.xlu0 %2889
    %v2892 = vmul.f32 %v2871, %v2890
    %v2893 = vadd.f32 %v2888, %v2892
    %2895 = vrot.lane.b32.xlu0 %v2857, 96
    %v2896 = vpop.permute.xlu0 %2895
    %2898 = vst.msk [vmem:[#allocation9 + $0x8] sm:$0xc0] %vm847, %v2896
    %2900 = vrot.lane.b32.xlu0 %v2893, 32
    %v2901 = vpop.permute.xlu0 %2900
    %2903 = vst.msk [vmem:[#allocation9] sm:$0x3] %vm853, %v2901
    %v2904 = vrot.slane %v2893, 2
    %2905 = vrot.lane.b32.xlu0 %v2904, 32
    %v2906 = vpop.permute.xlu0 %2905
    %v2908 = vsel %vm122, %v2896, %v2906
    %v2909 = vld [vmem:[%s9] sm:$0xff]
    %v2910 = vld [vmem:[%s9 + $0x8] sm:$0xff]
    %v2911 = vld [vmem:[%s9 + $0x10] sm:$0xff]
    %v2912 = vld [vmem:[%s9 + $0x18] sm:$0xff]
    %v2913 = vld [vmem:[%s9 + $0x20] sm:$0xff]
    %v2914 = vld [vmem:[%s9 + $0x28] sm:$0xff]
    %v2915 = vld [vmem:[%s9 + $0x30] sm:$0xff]
    %v2916 = vld [vmem:[%s9 + $0x38] sm:$0xff]
    %v2917 = vld [vmem:[%s10] sm:$0x1]
    %v2919 = vlaneseq
    %v2920 = vshrl.u32 %v2919, 7
    %v2921 = vsub.s32 0, %v2920
    %v2922 = vrot.slane %v2917, %v2921
    %v2925 = vrot.slane %v2908, 6
    %v2926 = vsel %vm217, %v2925, 0
    %2928 = vmatprep.subr.mxu0 0.0
    %2929 = vmatpush1.msra.mxu0 %v2909
    %2930 = vmatprep.subr.mxu0 0.0
    %2931 = vmatpush1.msra.mxu0 %v2910
    %2932 = vmatprep.subr.mxu0 0.0
    %2933 = vmatpush1.msra.mxu0 %v2911
    %2934 = vmatprep.subr.mxu0 0.0
    %2935 = vmatpush1.msra.mxu0 %v2912
    %2936 = vmatprep.subr.mxu0 0.0
    %2937 = vmatpush1.msra.mxu0 %v2913
    %2938 = vmatprep.subr.mxu0 0.0
    %2939 = vmatpush1.msra.mxu0 %v2914
    %2940 = vmatprep.subr.mxu0 0.0
    %2941 = vmatpush1.msra.mxu0 %v2915
    %2942 = vmatprep.subr.mxu0 0.0
    %2943 = vmatpush1.msra.mxu0 %v2916
    %2944 = vmatprep.subr.mxu0 0.0
    %2945 = vmatpush1.msra.mxu0 0.0
    %2946 = vmatprep.subr.mxu0 0.0
    %2947 = vmatpush1.msra.mxu0 0.0
    %2948 = vmatprep.subr.mxu0 0.0
    %2949 = vmatpush1.msra.mxu0 0.0
    %2950 = vmatprep.subr.mxu0 0.0
    %2951 = vmatpush1.msra.mxu0 0.0
    %2952 = vmatprep.subr.mxu0 0.0
    %2953 = vmatpush1.msra.mxu0 0.0
    %2954 = vmatprep.subr.mxu0 0.0
    %2955 = vmatpush1.msra.mxu0 0.0
    %2956 = vmatprep.subr.mxu0 0.0
    %2957 = vmatpush1.msra.mxu0 0.0
    %2958 = vmatprep.subr.mxu0 0.0
    %2959 = vmatpush1.msra.mxu0 0.0
    %2960 = vmatprep.subr.mxu0 0.0
    %2961 = vmatpush1.msra.mxu0 0.0
    %2962 = vmatprep.subr.mxu0 0.0
    %2963 = vmatpush1.msra.mxu0 0.0
    %2964 = vmatprep.subr.mxu0 0.0
    %2965 = vmatpush1.msra.mxu0 0.0
    %2966 = vmatprep.subr.mxu0 0.0
    %2967 = vmatpush1.msra.mxu0 0.0
    %2968 = vmatprep.subr.mxu0 0.0
    %2969 = vmatpush1.msra.mxu0 0.0
    %2970 = vmatprep.subr.mxu0 0.0
    %2971 = vmatpush1.msra.mxu0 0.0
    %2972 = vmatprep.subr.mxu0 0.0
    %2973 = vmatpush1.msra.mxu0 0.0
    %2974 = vmatprep.subr.mxu0 0.0
    %2975 = vmatpush1.msra.mxu0 0.0
    %2976 = vmatprep.subr.mxu0 0.0
    %2977 = vmatpush1.msra.mxu0 0.0
    %2978 = vmatprep.subr.mxu0 0.0
    %2979 = vmatpush1.msra.mxu0 0.0
    %2980 = vmatprep.subr.mxu0 0.0
    %2981 = vmatpush1.msra.mxu0 0.0
    %2982 = vmatprep.subr.mxu0 0.0
    %2983 = vmatpush1.msra.mxu0 0.0
    %2984 = vmatprep.subr.mxu0 0.0
    %2985 = vmatpush1.msra.mxu0 0.0
    %2986 = vmatprep.subr.mxu0 0.0
    %2987 = vmatpush1.msra.mxu0 0.0
    %2988 = vmatprep.subr.mxu0 0.0
    %2989 = vmatpush1.msra.mxu0 0.0
    %2990 = vmatprep.subr.mxu0 0.0
    %2991 = vmatpush1.msra.mxu0 0.0
    %2992 = vmatprep.mubr.f32.mxu0 0.0
    %2993 = vmatmul.mubr.f32.gmra.mrb[0].mxu0 %v2926
    %v2994 = vpop.f32.mrb[0].mxu0
    %v2995 = vadd.f32 %v2922, %v2994
    %v2996 = vpop.f32.mrb[0].mxu0
    %2997 = vdwg.mxu0
    %v2998 = vtanh.pop %v2995
    %2999 = vst.msk [vmem:[#allocation10] sm:$0x3] %vm359, %v2998
    // Predicated region
    $region58: #{tpu_custom_call.1} parent=1 // pred_check
      _
    $region59: #{tpu_custom_call.1} parent=1 // pred_check_branch
      %3001 = sbr.rel (0) target = $region61
    $region60: #{tpu_custom_call.1} parent=1 // pred_region
      %s3003 = ssub.s32 256, 256
      %3004 = vsyncadd [#allocation5], %s3003
      %s3005 = sshll.u32 [#allocation9], 4
      %s3006 = int_to_ptr.vmem [resolvable:$true] %s3005
      %3011 = dma.vmem_to_hbm [thread:$0]  %s3006, 256, %s11, [#allocation5], 128, 128, 8
    $region61: #{tpu_custom_call.1} parent=1 // pred_fallthru
      _
    // Predicated region
    $region62: #{tpu_custom_call.1} parent=1 // pred_check
      _
    $region63: #{tpu_custom_call.1} parent=1 // pred_check_branch
      %3013 = sbr.rel (0) target = $region65
    $region64: #{tpu_custom_call.1} parent=1 // pred_region
      %s3015 = ssub.s32 32, 32
      %3016 = vsyncadd [#allocation11], %s3015
      %s3018 = sshll.u32 [#allocation10], 4
      %s3019 = int_to_ptr.vmem [resolvable:$true] %s3018
      %3021 = dma.vmem_to_hbm [thread:$0]  %s3019, 32, %s12, [#allocation11]
    $region65: #{tpu_custom_call.1} parent=1 // pred_fallthru
      _
    // Predicated region
    $region66: #{tpu_custom_call.1} parent=1 // pred_check
      _
    $region67: #{tpu_custom_call.1} parent=1 // pred_check_branch
      %3023 = sbr.rel (0) target = $region69
    $region68: #{tpu_custom_call.1} parent=1 // pred_region
      %3024 = dma.done [#allocation5], 256
    $region69: #{tpu_custom_call.1} parent=1 // pred_fallthru
      _
    // Predicated region
    $region70: #{tpu_custom_call.1} parent=1 // pred_check
      _
    $region71: #{tpu_custom_call.1} parent=1 // pred_check_branch
      %3026 = sbr.rel (0) target = $region73
    $region72: #{tpu_custom_call.1} parent=1 // pred_region
      %3027 = dma.done [#allocation11], 32
    $region73: #{tpu_custom_call.1} parent=1 // pred_fallthru
      _
    %3028 = vsyncpa [#allocation4], 1
    %3029 = vsyncpa [#allocation7], 1
    %3030 = vsyncpa [#allocation5], 1
    %3031 = vsyncpa [#allocation11], 1

</llo_original>
